<compile_context>
chip_gen: v5e
topology: v5e:2x2
jax: 0.10.0
libtpu: 0.0.40
codegen_flags: <defaults>
</compile_context>

<pallas_src>
import jax
import jax.numpy as jnp
from jax.experimental import pallas as pl
from jax.experimental.pallas import tpu as pltpu


FEAT = 102              # per-backbone feature width
FEAT_PAD = 128          # lane-aligned per-backbone width
NSEG = 4                # number of backbones
FEAT_IN = FEAT * NSEG   # 408 (logical)
K1 = FEAT_PAD * NSEG    # 512 (padded, lane-aligned K for layer 1)
H1 = 1024
H2 = 512
OUT = 102
OUT_PAD = 128           # lane-dense padded output width

# Forcing >=2 batch tiles lets the "parallel" grid axis shard across v7x's two
# TensorCores; below this row count the extra grid step isn't worth it.
MIN_ROWS_FOR_TWO_TILES = 64


def _round_up(x, m):
    return ((x + m - 1) // m) * m


def _mlp_kernel(x_ref, w1_ref, b1_ref, w2_ref, b2_ref, w3_ref, b3_ref, o_ref):
    # ---- Layer 1 + ReLU (single K=512 matmul; bf16 operands, f32 acc on MXU)
    h = jnp.dot(x_ref[...], w1_ref[...], preferred_element_type=jnp.float32)
    h = jnp.maximum(h + b1_ref[...], 0.0)

    # ---- Layer 2 + ReLU
    h = jnp.dot(h.astype(jnp.bfloat16), w2_ref[...],
                preferred_element_type=jnp.float32)
    h = jnp.maximum(h + b2_ref[...], 0.0)

    # ---- Layer 3 (no activation), OUT padded to 128 lanes (zero cols in W3)
    h = jnp.dot(h.astype(jnp.bfloat16), w3_ref[...],
                preferred_element_type=jnp.float32)
    o_ref[...] = (h + b3_ref[...]).astype(o_ref.dtype)


def _pick_bm(B, block_m):
    """Balanced batch tile: bounds padding waste and engages 2 tiles for
    mid-size batches (v7x dual-TC), rows rounded to 16 (bf16 sublane pack)."""
    n_tiles = pl.cdiv(B, block_m)
    if B >= MIN_ROWS_FOR_TWO_TILES:
        n_tiles = max(n_tiles, 2)
    return _round_up(pl.cdiv(B, n_tiles), 16)


def _pack_features(x1, x2, x3, x4):
    """Zero-pad each [B,102] feature to 128 lanes and concat -> [B,512] bf16."""
    pad = ((0, 0), (0, FEAT_PAD - FEAT))
    return jnp.concatenate(
        [jnp.pad(x.astype(jnp.bfloat16), pad) for x in (x1, x2, x3, x4)],
        axis=1)


def linear_model_head(x, w1, b1, w2, b2, w3, b3, *, block_m=512):
    """x: [B, 512] bf16 packed features. w1: [512, 1024] bf16 (zero rows at the
    per-backbone pads), w2: [1024, 512] bf16, w3: [512, 128] bf16 (zero-padded
    out cols), biases f32 (b3: [1, 128] zero-padded). Returns [B, 102] f32."""
    B = x.shape[0]
    bm = _pick_bm(B, block_m)
    B_pad = _round_up(B, bm)
    if B_pad != B:
        x = jnp.pad(x, ((0, B_pad - B), (0, 0)))
    grid_m = pl.cdiv(B_pad, bm)

    def const(shape):
        # Constant block index -> weights stay resident; single-buffered so
        # they don't waste VMEM on a second (never-used) pipeline buffer.
        return pl.BlockSpec(shape, lambda i: (0,) * len(shape),
                            pipeline_mode=pl.Buffered(1))

    out = pl.pallas_call(
        _mlp_kernel,
        out_shape=jax.ShapeDtypeStruct((B_pad, OUT_PAD), jnp.float32),
        grid=(grid_m,),
        in_specs=[
            pl.BlockSpec((bm, K1), lambda i: (i, 0)),
            const((K1, H1)), const((1, H1)),
            const((H1, H2)), const((1, H2)),
            const((H2, OUT_PAD)), const((1, OUT_PAD)),
        ],
        out_specs=pl.BlockSpec((bm, OUT_PAD), lambda i: (i, 0)),
        compiler_params=pltpu.CompilerParams(
            dimension_semantics=("parallel",),
            vmem_limit_bytes=32 << 20,
        ),
    )(x, w1, b1, w2, b2, w3, b3)
    return out[:B, :OUT]


def init_params(key):
    """Deterministic init mimicking nn.Linear default (uniform +/- 1/sqrt(fan_in)).
    Weights stored transposed ([in, out]) and cast to bf16; W1 is packed into a
    single [512, 1024] slab with zero rows at the per-backbone 102->128 pads;
    W3/b3 are zero-padded to 128 output lanes."""
    def linear(key, fan_in, fan_out):
        kw, kb = jax.random.split(key)
        bound = 1.0 / jnp.sqrt(fan_in)
        w = jax.random.uniform(kw, (fan_in, fan_out), jnp.float32, -bound, bound)
        b = jax.random.uniform(kb, (1, fan_out), jnp.float32, -bound, bound)
        return w, b

    k1, k2, k3 = jax.random.split(key, 3)
    w1, b1 = linear(k1, FEAT_IN, H1)
    w2, b2 = linear(k2, H1, H2)
    w3, b3 = linear(k3, H2, OUT)

    w1p = w1.reshape(NSEG, FEAT, H1)
    w1p = jnp.pad(w1p, ((0, 0), (0, FEAT_PAD - FEAT), (0, 0)))
    w1p = w1p.reshape(K1, H1).astype(jnp.bfloat16)
    w2p = w2.astype(jnp.bfloat16)
    w3p = jnp.pad(w3, ((0, 0), (0, OUT_PAD - OUT))).astype(jnp.bfloat16)
    b3p = jnp.pad(b3, ((0, 0), (0, OUT_PAD - OUT)))
    return w1p, b1, w2p, b2, w3p, b3p


def linear_model_forward(features, params, *, block_m=512):
    """features: tuple of 4 tensors, each [B, 102] (backbone outputs)."""
    x = _pack_features(*features)
    return linear_model_head(x, *params, block_m=block_m)


def _reference(features, params):
    """Pure-JAX reference mimicking the kernel's numerics (bf16 weights/acts,
    f32 accumulation) so the tolerance check is meaningful. Validates
    self-consistency of the kernel, not bit-fidelity to the f32 PyTorch model."""
    w1p, b1, w2p, b2, w3p, b3p = params
    x = jnp.concatenate(
        [f.astype(jnp.bfloat16).astype(jnp.float32) for f in features], axis=1)
    w1 = w1p.astype(jnp.float32).reshape(NSEG, FEAT_PAD, H1)[:, :FEAT, :]
    w1 = w1.reshape(FEAT_IN, H1)
    h = jnp.maximum(x @ w1 + b1, 0.0)
    h = h.astype(jnp.bfloat16).astype(jnp.float32)
    h = jnp.maximum(h @ w2p.astype(jnp.float32) + b2, 0.0)
    h = h.astype(jnp.bfloat16).astype(jnp.float32)
    out = h @ w3p.astype(jnp.float32) + b3p
    return out[:, :OUT]


if __name__ == "__main__":
    key = jax.random.PRNGKey(0)
    k_params, k1, k2, k3, k4 = jax.random.split(key, 5)

    params = init_params(k_params)

    # Small serving-style batch (padded to a single 16-row tile).
    B = 8
    feats = tuple(jax.random.normal(k, (B, FEAT), jnp.float32)
                  for k in (k1, k2, k3, k4))
    out = jax.block_until_ready(linear_model_forward(feats, params))
    ref = _reference(feats, params)
    assert out.shape == (B, OUT), out.shape
    assert jnp.allclose(out, ref, atol=1e-2, rtol=1e-2), \
        float(jnp.max(jnp.abs(out - ref)))

    # Larger, non-multiple-of-tile batch: exercises balanced tiling (2 tiles of
    # 144 rows -> 288 padded rows instead of 512) and the parallel grid axis.
    B2 = 260
    feats2 = tuple(jax.random.normal(k, (B2, FEAT), jnp.float32)
                   for k in (k4, k3, k2, k1))
    out2 = jax.block_until_ready(linear_model_forward(feats2, params))
    ref2 = _reference(feats2, params)
    assert out2.shape == (B2, OUT), out2.shape
    assert jnp.allclose(out2, ref2, atol=1e-2, rtol=1e-2), \
        float(jnp.max(jnp.abs(out2 - ref2)))

    print("KERNEL_OK")
</pallas_src>

<mosaic_0001>
module attributes {stable_mosaic.version = 11 : i64} {
  func.func @_mlp_kernel(%arg0: i32, %arg1: memref<16x512xbf16, #tpu.memory_space<vmem>>, %arg2: memref<512x1024xbf16, #tpu.memory_space<vmem>>, %arg3: memref<1x1024xf32, #tpu.memory_space<vmem>>, %arg4: memref<1024x512xbf16, #tpu.memory_space<vmem>>, %arg5: memref<1x512xf32, #tpu.memory_space<vmem>>, %arg6: memref<512x128xbf16, #tpu.memory_space<vmem>>, %arg7: memref<1x128xf32, #tpu.memory_space<vmem>>, %arg8: memref<16x128xf32, #tpu.memory_space<vmem>>) attributes {dimension_semantics = [#tpu.dimension_semantics<parallel>], iteration_bounds = array<i64: 1>, scalar_prefetch = 0 : i64, scratch_operands = 0 : i64, tpu.core_type = #tpu.core_type<tc>, window_params = [{transform_indices = @transform_0, window_bounds = array<i64: 16, 512>}, {pipeline_mode = #tpu.pipeline_mode<synchronous>, transform_indices = @transform_1, window_bounds = array<i64: 512, 1024>}, {pipeline_mode = #tpu.pipeline_mode<synchronous>, transform_indices = @transform_2, window_bounds = array<i64: 1, 1024>}, {pipeline_mode = #tpu.pipeline_mode<synchronous>, transform_indices = @transform_3, window_bounds = array<i64: 1024, 512>}, {pipeline_mode = #tpu.pipeline_mode<synchronous>, transform_indices = @transform_4, window_bounds = array<i64: 1, 512>}, {pipeline_mode = #tpu.pipeline_mode<synchronous>, transform_indices = @transform_5, window_bounds = array<i64: 512, 128>}, {pipeline_mode = #tpu.pipeline_mode<synchronous>, transform_indices = @transform_6, window_bounds = array<i64: 1, 128>}, {transform_indices = @transform_7, window_bounds = array<i64: 16, 128>}]} {
    %c0 = arith.constant 0 : index
    %c0_0 = arith.constant 0 : index
    %0 = vector.load %arg1[%c0, %c0_0] : memref<16x512xbf16, #tpu.memory_space<vmem>>, vector<16x512xbf16>
    %c0_1 = arith.constant 0 : index
    %c0_2 = arith.constant 0 : index
    %1 = vector.load %arg2[%c0_1, %c0_2] : memref<512x1024xbf16, #tpu.memory_space<vmem>>, vector<512x1024xbf16>
    %cst = arith.constant dense<0.000000e+00> : vector<16x1024xf32>
    %2 = tpu.matmul %0, %1, %cst {dimension_numbers = #tpu.dot_dimension_numbers<[1], [0], [0], [1], [0, 0, 1, 1], [], []>} : vector<16x512xbf16>, vector<512x1024xbf16>, vector<16x1024xf32> -> vector<16x1024xf32>
    %c0_3 = arith.constant 0 : index
    %c0_4 = arith.constant 0 : index
    %3 = vector.load %arg3[%c0_3, %c0_4] : memref<1x1024xf32, #tpu.memory_space<vmem>>, vector<1x1024xf32>
    %4 = vector.broadcast %3 : vector<1x1024xf32> to vector<16x1024xf32>
    %5 = arith.addf %2, %4 : vector<16x1024xf32>
    %cst_5 = arith.constant 0.000000e+00 : f32
    %6 = vector.broadcast %cst_5 : f32 to vector<16x1024xf32>
    %7 = arith.maximumf %5, %6 : vector<16x1024xf32>
    %8 = arith.truncf %7 : vector<16x1024xf32> to vector<16x1024xbf16>
    %c0_6 = arith.constant 0 : index
    %c0_7 = arith.constant 0 : index
    %9 = vector.load %arg4[%c0_6, %c0_7] : memref<1024x512xbf16, #tpu.memory_space<vmem>>, vector<1024x512xbf16>
    %cst_8 = arith.constant dense<0.000000e+00> : vector<16x512xf32>
    %10 = tpu.matmul %8, %9, %cst_8 {dimension_numbers = #tpu.dot_dimension_numbers<[1], [0], [0], [1], [0, 0, 1, 1], [], []>} : vector<16x1024xbf16>, vector<1024x512xbf16>, vector<16x512xf32> -> vector<16x512xf32>
    %c0_9 = arith.constant 0 : index
    %c0_10 = arith.constant 0 : index
    %11 = vector.load %arg5[%c0_9, %c0_10] : memref<1x512xf32, #tpu.memory_space<vmem>>, vector<1x512xf32>
    %12 = vector.broadcast %11 : vector<1x512xf32> to vector<16x512xf32>
    %13 = arith.addf %10, %12 : vector<16x512xf32>
    %cst_11 = arith.constant 0.000000e+00 : f32
    %14 = vector.broadcast %cst_11 : f32 to vector<16x512xf32>
    %15 = arith.maximumf %13, %14 : vector<16x512xf32>
    %16 = arith.truncf %15 : vector<16x512xf32> to vector<16x512xbf16>
    %c0_12 = arith.constant 0 : index
    %c0_13 = arith.constant 0 : index
    %17 = vector.load %arg6[%c0_12, %c0_13] : memref<512x128xbf16, #tpu.memory_space<vmem>>, vector<512x128xbf16>
    %cst_14 = arith.constant dense<0.000000e+00> : vector<16x128xf32>
    %18 = tpu.matmul %16, %17, %cst_14 {dimension_numbers = #tpu.dot_dimension_numbers<[1], [0], [0], [1], [0, 0, 1, 1], [], []>} : vector<16x512xbf16>, vector<512x128xbf16>, vector<16x128xf32> -> vector<16x128xf32>
    %c0_15 = arith.constant 0 : index
    %c0_16 = arith.constant 0 : index
    %19 = vector.load %arg7[%c0_15, %c0_16] : memref<1x128xf32, #tpu.memory_space<vmem>>, vector<1x128xf32>
    %20 = vector.broadcast %19 : vector<1x128xf32> to vector<16x128xf32>
    %21 = arith.addf %18, %20 : vector<16x128xf32>
    %c0_17 = arith.constant 0 : index
    %c0_18 = arith.constant 0 : index
    %22 = vector.load %arg8[%c0_17, %c0_18] : memref<16x128xf32, #tpu.memory_space<vmem>>, vector<16x128xf32>
    tpu.vector_store %arg8[%c0_17, %c0_18], %21 {strides = array<i32>} : memref<16x128xf32, #tpu.memory_space<vmem>>, vector<16x128xf32>,
    return
  }
  func.func @transform_0(%arg0: i32) -> (i32, i32) {
    %c0_i32 = arith.constant 0 : i32
    %c0_i32_0 = arith.constant 0 : i32
    return %arg0, %c0_i32 : i32, i32
  }
  func.func @transform_1(%arg0: i32) -> (i32, i32) {
    %c0_i32 = arith.constant 0 : i32
    %c0_i32_0 = arith.constant 0 : i32
    %c0_i32_1 = arith.constant 0 : i32
    return %c0_i32, %c0_i32_0 : i32, i32
  }
  func.func @transform_2(%arg0: i32) -> (i32, i32) {
    %c0_i32 = arith.constant 0 : i32
    %c0_i32_0 = arith.constant 0 : i32
    %c0_i32_1 = arith.constant 0 : i32
    return %c0_i32, %c0_i32_0 : i32, i32
  }
  func.func @transform_3(%arg0: i32) -> (i32, i32) {
    %c0_i32 = arith.constant 0 : i32
    %c0_i32_0 = arith.constant 0 : i32
    %c0_i32_1 = arith.constant 0 : i32
    return %c0_i32, %c0_i32_0 : i32, i32
  }
  func.func @transform_4(%arg0: i32) -> (i32, i32) {
    %c0_i32 = arith.constant 0 : i32
    %c0_i32_0 = arith.constant 0 : i32
    %c0_i32_1 = arith.constant 0 : i32
    return %c0_i32, %c0_i32_0 : i32, i32
  }
  func.func @transform_5(%arg0: i32) -> (i32, i32) {
    %c0_i32 = arith.constant 0 : i32
    %c0_i32_0 = arith.constant 0 : i32
    %c0_i32_1 = arith.constant 0 : i32
    return %c0_i32, %c0_i32_0 : i32, i32
  }
  func.func @transform_6(%arg0: i32) -> (i32, i32) {
    %c0_i32 = arith.constant 0 : i32
    %c0_i32_0 = arith.constant 0 : i32
    %c0_i32_1 = arith.constant 0 : i32
    return %c0_i32, %c0_i32_0 : i32, i32
  }
  func.func @transform_7(%arg0: i32) -> (i32, i32) {
    %c0_i32 = arith.constant 0 : i32
    %c0_i32_0 = arith.constant 0 : i32
    return %arg0, %c0_i32 : i32, i32
  }
}

</mosaic_0001>

<llo_original>
// kernel: tpu_custom_call.1
$region0: #{tpu_custom_call.1}
  #allocation0 [shape = 'u32[]', space=smem, size = 0x4, offset = 0x4, fixed_abs, tag = 'smem constant byte address 0x4 - core index']
  #allocation1 [shape = 'u32[72,128]{1,0:T(1,128)}', space=vmem, size = 0x9000, scoped, tag = 'internal scratch']
  %s0 = inlined_call_operand.hbm [shape: bf16[16,512], index: 0, kind: input, shape index: {}]
  %s1 = inlined_call_operand.hbm [shape: bf16[512,1024], index: 1, kind: input, shape index: {}]
  %s2 = inlined_call_operand.hbm [shape: f32[1,1024], index: 2, kind: input, shape index: {}]
  %s3 = inlined_call_operand.hbm [shape: bf16[1024,512], index: 3, kind: input, shape index: {}]
  %s4 = inlined_call_operand.hbm [shape: f32[1,512], index: 4, kind: input, shape index: {}]
  %s5 = inlined_call_operand.hbm [shape: bf16[512,128], index: 5, kind: input, shape index: {}]
  %s6 = inlined_call_operand.vmem [shape: f32[1,128], index: 6, kind: input, shape index: {}]
  %s7 = inlined_call_operand.hbm [shape: f32[16,128], index: 7, kind: output, shape index: {}]
  %s8 = sld [smem:[#allocation0]]
  $region62: #{tpu_custom_call.1} parent=0
    _
  %s10 = ssub.s32 1, %s8
  %s11 = scalar_select 0, %s10, %s8
  $region1: #{tpu_custom_call.1} parent=0
    #allocation2 [shape = 'u8[16384]{0}', space=vmem, size = 0x4000, scoped, tag = 'input window, operand 0, single buffered']
    #allocation3 [shape = 's32[1]{0}', space=sflag, size = 0x4, scoped, tag = 'scoped memory for tpu_custom_call.1']
    #allocation4 [shape = 's32[1]{0}', space=sflag, size = 0x4, scoped, tag = 'scoped memory for tpu_custom_call.1']
    #allocation5 [shape = 'u8[1048576]{0}', space=vmem, size = 0x100000, scoped, tag = 'input window, operand 1, single buffered']
    #allocation6 [shape = 's32[1]{0}', space=sflag, size = 0x4, scoped, tag = 'scoped memory for tpu_custom_call.1']
    #allocation7 [shape = 'u8[4096]{0}', space=vmem, size = 0x1000, scoped, tag = 'input window, operand 2, single buffered']
    #allocation8 [shape = 'u8[1048576]{0}', space=vmem, size = 0x100000, scoped, tag = 'input window, operand 3, single buffered']
    #allocation9 [shape = 's32[1]{0}', space=sflag, size = 0x4, scoped, tag = 'scoped memory for tpu_custom_call.1']
    #allocation10 [shape = 'u8[2048]{0}', space=vmem, size = 0x800, scoped, tag = 'input window, operand 4, single buffered']
    #allocation11 [shape = 'u8[131072]{0}', space=vmem, size = 0x20000, scoped, tag = 'input window, operand 5, single buffered']
    #allocation12 [shape = 's32[1]{0}', space=sflag, size = 0x4, scoped, tag = 'scoped memory for tpu_custom_call.1']
    #allocation13 [shape = 'u8[8192]{0}', space=vmem, size = 0x2000, scoped, tag = 'output window, operand 0, single buffered']
    %12 = vsyncpa [#allocation3], 0
    %13 = vsyncpa [#allocation6], 0
    %14 = vsyncpa [#allocation9], 0
    %15 = vsyncpa [#allocation12], 0
    %16 = vsyncpa [#allocation4], 0
    // Predicated region
    $region2: #{tpu_custom_call.1} parent=1 // pred_check
      _
    $region3: #{tpu_custom_call.1} parent=1 // pred_check_branch
      %18 = sbr.rel (0) target = $region5
    $region4: #{tpu_custom_call.1} parent=1 // pred_region
      %20 = vsyncadd [#allocation3], 0
      %s21 = sshll.u32 %s0, 4
      %s22 = int_to_ptr.hbm [resolvable:$true] %s21
      %s23 = sshll.u32 [#allocation2], 4
      %s24 = int_to_ptr.vmem [resolvable:$true] %s23
      %29 = dma.hbm_to_vmem [thread:$0]  %s22, 512, %s24, [#allocation3], 256, 256, 16
    $region5: #{tpu_custom_call.1} parent=1 // pred_fallthru
      _
    // Predicated region
    $region6: #{tpu_custom_call.1} parent=1 // pred_check
      _
    $region7: #{tpu_custom_call.1} parent=1 // pred_check_branch
      %31 = sbr.rel (0) target = $region9
    $region8: #{tpu_custom_call.1} parent=1 // pred_region
      %33 = vsyncadd [#allocation6], 0
      %s34 = sshll.u32 %s1, 4
      %s35 = int_to_ptr.hbm [resolvable:$true] %s34
      %s36 = sshll.u32 [#allocation5], 4
      %s37 = int_to_ptr.vmem [resolvable:$true] %s36
      %42 = dma.hbm_to_vmem [thread:$0]  %s35, 32768, %s37, [#allocation6], 512, 512, 32
    $region9: #{tpu_custom_call.1} parent=1 // pred_fallthru
      _
    // Predicated region
    $region10: #{tpu_custom_call.1} parent=1 // pred_check
      _
    $region11: #{tpu_custom_call.1} parent=1 // pred_check_branch
      %44 = sbr.rel (0) target = $region13
    $region12: #{tpu_custom_call.1} parent=1 // pred_region
      %46 = vsyncadd [#allocation6], 0
      %s48 = sshll.u32 %s2, 4
      %s49 = int_to_ptr.hbm [resolvable:$true] %s48
      %s50 = sshll.u32 [#allocation7], 4
      %s51 = int_to_ptr.vmem [resolvable:$true] %s50
      %53 = dma.hbm_to_vmem [thread:$0]  %s49, 128, %s51, [#allocation6]
    $region13: #{tpu_custom_call.1} parent=1 // pred_fallthru
      _
    // Predicated region
    $region14: #{tpu_custom_call.1} parent=1 // pred_check
      _
    $region15: #{tpu_custom_call.1} parent=1 // pred_check_branch
      %55 = sbr.rel (0) target = $region17
    $region16: #{tpu_custom_call.1} parent=1 // pred_region
      %57 = vsyncadd [#allocation9], 0
      %s58 = sshll.u32 %s3, 4
      %s59 = int_to_ptr.hbm [resolvable:$true] %s58
      %s60 = sshll.u32 [#allocation8], 4
      %s61 = int_to_ptr.vmem [resolvable:$true] %s60
      %66 = dma.hbm_to_vmem [thread:$0]  %s59, 32768, %s61, [#allocation9], 256, 256, 16
    $region17: #{tpu_custom_call.1} parent=1 // pred_fallthru
      _
    // Predicated region
    $region18: #{tpu_custom_call.1} parent=1 // pred_check
      _
    $region19: #{tpu_custom_call.1} parent=1 // pred_check_branch
      %68 = sbr.rel (0) target = $region21
    $region20: #{tpu_custom_call.1} parent=1 // pred_region
      %70 = vsyncadd [#allocation9], 0
      %s72 = sshll.u32 %s4, 4
      %s73 = int_to_ptr.hbm [resolvable:$true] %s72
      %s74 = sshll.u32 [#allocation10], 4
      %s75 = int_to_ptr.vmem [resolvable:$true] %s74
      %77 = dma.hbm_to_vmem [thread:$0]  %s73, 64, %s75, [#allocation9]
    $region21: #{tpu_custom_call.1} parent=1 // pred_fallthru
      _
    // Predicated region
    $region22: #{tpu_custom_call.1} parent=1 // pred_check
      _
    $region23: #{tpu_custom_call.1} parent=1 // pred_check_branch
      %79 = sbr.rel (0) target = $region25
    $region24: #{tpu_custom_call.1} parent=1 // pred_region
      %81 = vsyncadd [#allocation12], 0
      %s82 = sshll.u32 %s5, 4
      %s83 = int_to_ptr.hbm [resolvable:$true] %s82
      %s84 = sshll.u32 [#allocation11], 4
      %s85 = int_to_ptr.vmem [resolvable:$true] %s84
      %90 = dma.hbm_to_vmem [thread:$0]  %s83, 4096, %s85, [#allocation12], 64, 64, 4
    $region25: #{tpu_custom_call.1} parent=1 // pred_fallthru
      _
    // Predicated region
    $region26: #{tpu_custom_call.1} parent=1 // pred_check
      _
    $region27: #{tpu_custom_call.1} parent=1 // pred_check_branch
      %92 = sbr.rel (0) target = $region29
    $region28: #{tpu_custom_call.1} parent=1 // pred_region
      _
    $region29: #{tpu_custom_call.1} parent=1 // pred_fallthru
      _
    // Predicated region
    $region30: #{tpu_custom_call.1} parent=1 // pred_check
      _
    $region31: #{tpu_custom_call.1} parent=1 // pred_check_branch
      %94 = sbr.rel (0) target = $region33
    $region32: #{tpu_custom_call.1} parent=1 // pred_region
      %96 = dma.done [#allocation3], 512
    $region33: #{tpu_custom_call.1} parent=1 // pred_fallthru
      _
    // Predicated region
    $region34: #{tpu_custom_call.1} parent=1 // pred_check
      _
    $region35: #{tpu_custom_call.1} parent=1 // pred_check_branch
      %98 = sbr.rel (0) target = $region37
    $region36: #{tpu_custom_call.1} parent=1 // pred_region
      %100 = dma.done [#allocation6], 32768
    $region37: #{tpu_custom_call.1} parent=1 // pred_fallthru
      _
    // Predicated region
    $region38: #{tpu_custom_call.1} parent=1 // pred_check
      _
    $region39: #{tpu_custom_call.1} parent=1 // pred_check_branch
      %102 = sbr.rel (0) target = $region41
    $region40: #{tpu_custom_call.1} parent=1 // pred_region
      %104 = dma.done [#allocation6], 128
    $region41: #{tpu_custom_call.1} parent=1 // pred_fallthru
      _
    // Predicated region
    $region42: #{tpu_custom_call.1} parent=1 // pred_check
      _
    $region43: #{tpu_custom_call.1} parent=1 // pred_check_branch
      %106 = sbr.rel (0) target = $region45
    $region44: #{tpu_custom_call.1} parent=1 // pred_region
      %108 = dma.done [#allocation9], 32768
    $region45: #{tpu_custom_call.1} parent=1 // pred_fallthru
      _
    // Predicated region
    $region46: #{tpu_custom_call.1} parent=1 // pred_check
      _
    $region47: #{tpu_custom_call.1} parent=1 // pred_check_branch
      %110 = sbr.rel (0) target = $region49
    $region48: #{tpu_custom_call.1} parent=1 // pred_region
      %112 = dma.done [#allocation9], 64
    $region49: #{tpu_custom_call.1} parent=1 // pred_fallthru
      _
    // Predicated region
    $region50: #{tpu_custom_call.1} parent=1 // pred_check
      _
    $region51: #{tpu_custom_call.1} parent=1 // pred_check_branch
      %114 = sbr.rel (0) target = $region53
    $region52: #{tpu_custom_call.1} parent=1 // pred_region
      %116 = dma.done [#allocation12], 4096
    $region53: #{tpu_custom_call.1} parent=1 // pred_fallthru
      _
    %v117 = vld [vmem:[#allocation2] sm:$0xff]
    %v118 = vld [vmem:[#allocation2 + $0x8] sm:$0xff]
    %v119 = vld [vmem:[#allocation2 + $0x10] sm:$0xff]
    %v120 = vld [vmem:[#allocation2 + $0x18] sm:$0xff]
    %v121 = vld [vmem:[#allocation5] sm:$0xff]
    %v122 = vld [vmem:[#allocation5 + $0x8] sm:$0xff]
    %v123 = vld [vmem:[#allocation5 + $0x10] sm:$0xff]
    %v124 = vld [vmem:[#allocation5 + $0x18] sm:$0xff]
    %v125 = vld [vmem:[#allocation5 + $0x20] sm:$0xff]
    %v126 = vld [vmem:[#allocation5 + $0x28] sm:$0xff]
    %v127 = vld [vmem:[#allocation5 + $0x30] sm:$0xff]
    %v128 = vld [vmem:[#allocation5 + $0x38] sm:$0xff]
    %v129 = vld [vmem:[#allocation5 + $0x40] sm:$0xff]
    %v130 = vld [vmem:[#allocation5 + $0x48] sm:$0xff]
    %v131 = vld [vmem:[#allocation5 + $0x50] sm:$0xff]
    %v132 = vld [vmem:[#allocation5 + $0x58] sm:$0xff]
    %v133 = vld [vmem:[#allocation5 + $0x60] sm:$0xff]
    %v134 = vld [vmem:[#allocation5 + $0x68] sm:$0xff]
    %v135 = vld [vmem:[#allocation5 + $0x70] sm:$0xff]
    %v136 = vld [vmem:[#allocation5 + $0x78] sm:$0xff]
    %v137 = vld [vmem:[#allocation5 + $0x80] sm:$0xff]
    %v138 = vld [vmem:[#allocation5 + $0x88] sm:$0xff]
    %v139 = vld [vmem:[#allocation5 + $0x90] sm:$0xff]
    %v140 = vld [vmem:[#allocation5 + $0x98] sm:$0xff]
    %v141 = vld [vmem:[#allocation5 + $0xa0] sm:$0xff]
    %v142 = vld [vmem:[#allocation5 + $0xa8] sm:$0xff]
    %v143 = vld [vmem:[#allocation5 + $0xb0] sm:$0xff]
    %v144 = vld [vmem:[#allocation5 + $0xb8] sm:$0xff]
    %v145 = vld [vmem:[#allocation5 + $0xc0] sm:$0xff]
    %v146 = vld [vmem:[#allocation5 + $0xc8] sm:$0xff]
    %v147 = vld [vmem:[#allocation5 + $0xd0] sm:$0xff]
    %v148 = vld [vmem:[#allocation5 + $0xd8] sm:$0xff]
    %v149 = vld [vmem:[#allocation5 + $0xe0] sm:$0xff]
    %v150 = vld [vmem:[#allocation5 + $0xe8] sm:$0xff]
    %v151 = vld [vmem:[#allocation5 + $0xf0] sm:$0xff]
    %v152 = vld [vmem:[#allocation5 + $0xf8] sm:$0xff]
    %v153 = vld [vmem:[#allocation5 + $0x100] sm:$0xff]
    %v154 = vld [vmem:[#allocation5 + $0x108] sm:$0xff]
    %v155 = vld [vmem:[#allocation5 + $0x110] sm:$0xff]
    %v156 = vld [vmem:[#allocation5 + $0x118] sm:$0xff]
    %v157 = vld [vmem:[#allocation5 + $0x120] sm:$0xff]
    %v158 = vld [vmem:[#allocation5 + $0x128] sm:$0xff]
    %v159 = vld [vmem:[#allocation5 + $0x130] sm:$0xff]
    %v160 = vld [vmem:[#allocation5 + $0x138] sm:$0xff]
    %v161 = vld [vmem:[#allocation5 + $0x140] sm:$0xff]
    %v162 = vld [vmem:[#allocation5 + $0x148] sm:$0xff]
    %v163 = vld [vmem:[#allocation5 + $0x150] sm:$0xff]
    %v164 = vld [vmem:[#allocation5 + $0x158] sm:$0xff]
    %v165 = vld [vmem:[#allocation5 + $0x160] sm:$0xff]
    %v166 = vld [vmem:[#allocation5 + $0x168] sm:$0xff]
    %v167 = vld [vmem:[#allocation5 + $0x170] sm:$0xff]
    %v168 = vld [vmem:[#allocation5 + $0x178] sm:$0xff]
    %v169 = vld [vmem:[#allocation5 + $0x180] sm:$0xff]
    %v170 = vld [vmem:[#allocation5 + $0x188] sm:$0xff]
    %v171 = vld [vmem:[#allocation5 + $0x190] sm:$0xff]
    %v172 = vld [vmem:[#allocation5 + $0x198] sm:$0xff]
    %v173 = vld [vmem:[#allocation5 + $0x1a0] sm:$0xff]
    %v174 = vld [vmem:[#allocation5 + $0x1a8] sm:$0xff]
    %v175 = vld [vmem:[#allocation5 + $0x1b0] sm:$0xff]
    %v176 = vld [vmem:[#allocation5 + $0x1b8] sm:$0xff]
    %v177 = vld [vmem:[#allocation5 + $0x1c0] sm:$0xff]
    %v178 = vld [vmem:[#allocation5 + $0x1c8] sm:$0xff]
    %v179 = vld [vmem:[#allocation5 + $0x1d0] sm:$0xff]
    %v180 = vld [vmem:[#allocation5 + $0x1d8] sm:$0xff]
    %v181 = vld [vmem:[#allocation5 + $0x1e0] sm:$0xff]
    %v182 = vld [vmem:[#allocation5 + $0x1e8] sm:$0xff]
    %v183 = vld [vmem:[#allocation5 + $0x1f0] sm:$0xff]
    %v184 = vld [vmem:[#allocation5 + $0x1f8] sm:$0xff]
    %v185 = vld [vmem:[#allocation5 + $0x200] sm:$0xff]
    %v186 = vld [vmem:[#allocation5 + $0x208] sm:$0xff]
    %v187 = vld [vmem:[#allocation5 + $0x210] sm:$0xff]
    %v188 = vld [vmem:[#allocation5 + $0x218] sm:$0xff]
    %v189 = vld [vmem:[#allocation5 + $0x220] sm:$0xff]
    %v190 = vld [vmem:[#allocation5 + $0x228] sm:$0xff]
    %v191 = vld [vmem:[#allocation5 + $0x230] sm:$0xff]
    %v192 = vld [vmem:[#allocation5 + $0x238] sm:$0xff]
    %v193 = vld [vmem:[#allocation5 + $0x240] sm:$0xff]
    %v194 = vld [vmem:[#allocation5 + $0x248] sm:$0xff]
    %v195 = vld [vmem:[#allocation5 + $0x250] sm:$0xff]
    %v196 = vld [vmem:[#allocation5 + $0x258] sm:$0xff]
    %v197 = vld [vmem:[#allocation5 + $0x260] sm:$0xff]
    %v198 = vld [vmem:[#allocation5 + $0x268] sm:$0xff]
    %v199 = vld [vmem:[#allocation5 + $0x270] sm:$0xff]
    %v200 = vld [vmem:[#allocation5 + $0x278] sm:$0xff]
    %v201 = vld [vmem:[#allocation5 + $0x280] sm:$0xff]
    %v202 = vld [vmem:[#allocation5 + $0x288] sm:$0xff]
    %v203 = vld [vmem:[#allocation5 + $0x290] sm:$0xff]
    %v204 = vld [vmem:[#allocation5 + $0x298] sm:$0xff]
    %v205 = vld [vmem:[#allocation5 + $0x2a0] sm:$0xff]
    %v206 = vld [vmem:[#allocation5 + $0x2a8] sm:$0xff]
    %v207 = vld [vmem:[#allocation5 + $0x2b0] sm:$0xff]
    %v208 = vld [vmem:[#allocation5 + $0x2b8] sm:$0xff]
    %v209 = vld [vmem:[#allocation5 + $0x2c0] sm:$0xff]
    %v210 = vld [vmem:[#allocation5 + $0x2c8] sm:$0xff]
    %v211 = vld [vmem:[#allocation5 + $0x2d0] sm:$0xff]
    %v212 = vld [vmem:[#allocation5 + $0x2d8] sm:$0xff]
    %v213 = vld [vmem:[#allocation5 + $0x2e0] sm:$0xff]
    %v214 = vld [vmem:[#allocation5 + $0x2e8] sm:$0xff]
    %v215 = vld [vmem:[#allocation5 + $0x2f0] sm:$0xff]
    %v216 = vld [vmem:[#allocation5 + $0x2f8] sm:$0xff]
    %v217 = vld [vmem:[#allocation5 + $0x300] sm:$0xff]
    %v218 = vld [vmem:[#allocation5 + $0x308] sm:$0xff]
    %v219 = vld [vmem:[#allocation5 + $0x310] sm:$0xff]
    %v220 = vld [vmem:[#allocation5 + $0x318] sm:$0xff]
    %v221 = vld [vmem:[#allocation5 + $0x320] sm:$0xff]
    %v222 = vld [vmem:[#allocation5 + $0x328] sm:$0xff]
    %v223 = vld [vmem:[#allocation5 + $0x330] sm:$0xff]
    %v224 = vld [vmem:[#allocation5 + $0x338] sm:$0xff]
    %v225 = vld [vmem:[#allocation5 + $0x340] sm:$0xff]
    %v226 = vld [vmem:[#allocation5 + $0x348] sm:$0xff]
    %v227 = vld [vmem:[#allocation5 + $0x350] sm:$0xff]
    %v228 = vld [vmem:[#allocation5 + $0x358] sm:$0xff]
    %v229 = vld [vmem:[#allocation5 + $0x360] sm:$0xff]
    %v230 = vld [vmem:[#allocation5 + $0x368] sm:$0xff]
    %v231 = vld [vmem:[#allocation5 + $0x370] sm:$0xff]
    %v232 = vld [vmem:[#allocation5 + $0x378] sm:$0xff]
    %v233 = vld [vmem:[#allocation5 + $0x380] sm:$0xff]
    %v234 = vld [vmem:[#allocation5 + $0x388] sm:$0xff]
    %v235 = vld [vmem:[#allocation5 + $0x390] sm:$0xff]
    %v236 = vld [vmem:[#allocation5 + $0x398] sm:$0xff]
    %v237 = vld [vmem:[#allocation5 + $0x3a0] sm:$0xff]
    %v238 = vld [vmem:[#allocation5 + $0x3a8] sm:$0xff]
    %v239 = vld [vmem:[#allocation5 + $0x3b0] sm:$0xff]
    %v240 = vld [vmem:[#allocation5 + $0x3b8] sm:$0xff]
    %v241 = vld [vmem:[#allocation5 + $0x3c0] sm:$0xff]
    %v242 = vld [vmem:[#allocation5 + $0x3c8] sm:$0xff]
    %v243 = vld [vmem:[#allocation5 + $0x3d0] sm:$0xff]
    %v244 = vld [vmem:[#allocation5 + $0x3d8] sm:$0xff]
    %v245 = vld [vmem:[#allocation5 + $0x3e0] sm:$0xff]
    %v246 = vld [vmem:[#allocation5 + $0x3e8] sm:$0xff]
    %v247 = vld [vmem:[#allocation5 + $0x3f0] sm:$0xff]
    %v248 = vld [vmem:[#allocation5 + $0x3f8] sm:$0xff]
    %v249 = vld [vmem:[#allocation5 + $0x400] sm:$0xff]
    %v250 = vld [vmem:[#allocation5 + $0x408] sm:$0xff]
    %v251 = vld [vmem:[#allocation5 + $0x410] sm:$0xff]
    %v252 = vld [vmem:[#allocation5 + $0x418] sm:$0xff]
    %v253 = vld [vmem:[#allocation5 + $0x420] sm:$0xff]
    %v254 = vld [vmem:[#allocation5 + $0x428] sm:$0xff]
    %v255 = vld [vmem:[#allocation5 + $0x430] sm:$0xff]
    %v256 = vld [vmem:[#allocation5 + $0x438] sm:$0xff]
    %v257 = vld [vmem:[#allocation5 + $0x440] sm:$0xff]
    %v258 = vld [vmem:[#allocation5 + $0x448] sm:$0xff]
    %v259 = vld [vmem:[#allocation5 + $0x450] sm:$0xff]
    %v260 = vld [vmem:[#allocation5 + $0x458] sm:$0xff]
    %v261 = vld [vmem:[#allocation5 + $0x460] sm:$0xff]
    %v262 = vld [vmem:[#allocation5 + $0x468] sm:$0xff]
    %v263 = vld [vmem:[#allocation5 + $0x470] sm:$0xff]
    %v264 = vld [vmem:[#allocation5 + $0x478] sm:$0xff]
    %v265 = vld [vmem:[#allocation5 + $0x480] sm:$0xff]
    %v266 = vld [vmem:[#allocation5 + $0x488] sm:$0xff]
    %v267 = vld [vmem:[#allocation5 + $0x490] sm:$0xff]
    %v268 = vld [vmem:[#allocation5 + $0x498] sm:$0xff]
    %v269 = vld [vmem:[#allocation5 + $0x4a0] sm:$0xff]
    %v270 = vld [vmem:[#allocation5 + $0x4a8] sm:$0xff]
    %v271 = vld [vmem:[#allocation5 + $0x4b0] sm:$0xff]
    %v272 = vld [vmem:[#allocation5 + $0x4b8] sm:$0xff]
    %v273 = vld [vmem:[#allocation5 + $0x4c0] sm:$0xff]
    %v274 = vld [vmem:[#allocation5 + $0x4c8] sm:$0xff]
    %v275 = vld [vmem:[#allocation5 + $0x4d0] sm:$0xff]
    %v276 = vld [vmem:[#allocation5 + $0x4d8] sm:$0xff]
    %v277 = vld [vmem:[#allocation5 + $0x4e0] sm:$0xff]
    %v278 = vld [vmem:[#allocation5 + $0x4e8] sm:$0xff]
    %v279 = vld [vmem:[#allocation5 + $0x4f0] sm:$0xff]
    %v280 = vld [vmem:[#allocation5 + $0x4f8] sm:$0xff]
    %v281 = vld [vmem:[#allocation5 + $0x500] sm:$0xff]
    %v282 = vld [vmem:[#allocation5 + $0x508] sm:$0xff]
    %v283 = vld [vmem:[#allocation5 + $0x510] sm:$0xff]
    %v284 = vld [vmem:[#allocation5 + $0x518] sm:$0xff]
    %v285 = vld [vmem:[#allocation5 + $0x520] sm:$0xff]
    %v286 = vld [vmem:[#allocation5 + $0x528] sm:$0xff]
    %v287 = vld [vmem:[#allocation5 + $0x530] sm:$0xff]
    %v288 = vld [vmem:[#allocation5 + $0x538] sm:$0xff]
    %v289 = vld [vmem:[#allocation5 + $0x540] sm:$0xff]
    %v290 = vld [vmem:[#allocation5 + $0x548] sm:$0xff]
    %v291 = vld [vmem:[#allocation5 + $0x550] sm:$0xff]
    %v292 = vld [vmem:[#allocation5 + $0x558] sm:$0xff]
    %v293 = vld [vmem:[#allocation5 + $0x560] sm:$0xff]
    %v294 = vld [vmem:[#allocation5 + $0x568] sm:$0xff]
    %v295 = vld [vmem:[#allocation5 + $0x570] sm:$0xff]
    %v296 = vld [vmem:[#allocation5 + $0x578] sm:$0xff]
    %v297 = vld [vmem:[#allocation5 + $0x580] sm:$0xff]
    %v298 = vld [vmem:[#allocation5 + $0x588] sm:$0xff]
    %v299 = vld [vmem:[#allocation5 + $0x590] sm:$0xff]
    %v300 = vld [vmem:[#allocation5 + $0x598] sm:$0xff]
    %v301 = vld [vmem:[#allocation5 + $0x5a0] sm:$0xff]
    %v302 = vld [vmem:[#allocation5 + $0x5a8] sm:$0xff]
    %v303 = vld [vmem:[#allocation5 + $0x5b0] sm:$0xff]
    %v304 = vld [vmem:[#allocation5 + $0x5b8] sm:$0xff]
    %v305 = vld [vmem:[#allocation5 + $0x5c0] sm:$0xff]
    %v306 = vld [vmem:[#allocation5 + $0x5c8] sm:$0xff]
    %v307 = vld [vmem:[#allocation5 + $0x5d0] sm:$0xff]
    %v308 = vld [vmem:[#allocation5 + $0x5d8] sm:$0xff]
    %v309 = vld [vmem:[#allocation5 + $0x5e0] sm:$0xff]
    %v310 = vld [vmem:[#allocation5 + $0x5e8] sm:$0xff]
    %v311 = vld [vmem:[#allocation5 + $0x5f0] sm:$0xff]
    %v312 = vld [vmem:[#allocation5 + $0x5f8] sm:$0xff]
    %v313 = vld [vmem:[#allocation5 + $0x600] sm:$0xff]
    %v314 = vld [vmem:[#allocation5 + $0x608] sm:$0xff]
    %v315 = vld [vmem:[#allocation5 + $0x610] sm:$0xff]
    %v316 = vld [vmem:[#allocation5 + $0x618] sm:$0xff]
    %v317 = vld [vmem:[#allocation5 + $0x620] sm:$0xff]
    %v318 = vld [vmem:[#allocation5 + $0x628] sm:$0xff]
    %v319 = vld [vmem:[#allocation5 + $0x630] sm:$0xff]
    %v320 = vld [vmem:[#allocation5 + $0x638] sm:$0xff]
    %v321 = vld [vmem:[#allocation5 + $0x640] sm:$0xff]
    %v322 = vld [vmem:[#allocation5 + $0x648] sm:$0xff]
    %v323 = vld [vmem:[#allocation5 + $0x650] sm:$0xff]
    %v324 = vld [vmem:[#allocation5 + $0x658] sm:$0xff]
    %v325 = vld [vmem:[#allocation5 + $0x660] sm:$0xff]
    %v326 = vld [vmem:[#allocation5 + $0x668] sm:$0xff]
    %v327 = vld [vmem:[#allocation5 + $0x670] sm:$0xff]
    %v328 = vld [vmem:[#allocation5 + $0x678] sm:$0xff]
    %v329 = vld [vmem:[#allocation5 + $0x680] sm:$0xff]
    %v330 = vld [vmem:[#allocation5 + $0x688] sm:$0xff]
    %v331 = vld [vmem:[#allocation5 + $0x690] sm:$0xff]
    %v332 = vld [vmem:[#allocation5 + $0x698] sm:$0xff]
    %v333 = vld [vmem:[#allocation5 + $0x6a0] sm:$0xff]
    %v334 = vld [vmem:[#allocation5 + $0x6a8] sm:$0xff]
    %v335 = vld [vmem:[#allocation5 + $0x6b0] sm:$0xff]
    %v336 = vld [vmem:[#allocation5 + $0x6b8] sm:$0xff]
    %v337 = vld [vmem:[#allocation5 + $0x6c0] sm:$0xff]
    %v338 = vld [vmem:[#allocation5 + $0x6c8] sm:$0xff]
    %v339 = vld [vmem:[#allocation5 + $0x6d0] sm:$0xff]
    %v340 = vld [vmem:[#allocation5 + $0x6d8] sm:$0xff]
    %v341 = vld [vmem:[#allocation5 + $0x6e0] sm:$0xff]
    %v342 = vld [vmem:[#allocation5 + $0x6e8] sm:$0xff]
    %v343 = vld [vmem:[#allocation5 + $0x6f0] sm:$0xff]
    %v344 = vld [vmem:[#allocation5 + $0x6f8] sm:$0xff]
    %v345 = vld [vmem:[#allocation5 + $0x700] sm:$0xff]
    %v346 = vld [vmem:[#allocation5 + $0x708] sm:$0xff]
    %v347 = vld [vmem:[#allocation5 + $0x710] sm:$0xff]
    %v348 = vld [vmem:[#allocation5 + $0x718] sm:$0xff]
    %v349 = vld [vmem:[#allocation5 + $0x720] sm:$0xff]
    %v350 = vld [vmem:[#allocation5 + $0x728] sm:$0xff]
    %v351 = vld [vmem:[#allocation5 + $0x730] sm:$0xff]
    %v352 = vld [vmem:[#allocation5 + $0x738] sm:$0xff]
    %v353 = vld [vmem:[#allocation5 + $0x740] sm:$0xff]
    %v354 = vld [vmem:[#allocation5 + $0x748] sm:$0xff]
    %v355 = vld [vmem:[#allocation5 + $0x750] sm:$0xff]
    %v356 = vld [vmem:[#allocation5 + $0x758] sm:$0xff]
    %v357 = vld [vmem:[#allocation5 + $0x760] sm:$0xff]
    %v358 = vld [vmem:[#allocation5 + $0x768] sm:$0xff]
    %v359 = vld [vmem:[#allocation5 + $0x770] sm:$0xff]
    %v360 = vld [vmem:[#allocation5 + $0x778] sm:$0xff]
    %v361 = vld [vmem:[#allocation5 + $0x780] sm:$0xff]
    %v362 = vld [vmem:[#allocation5 + $0x788] sm:$0xff]
    %v363 = vld [vmem:[#allocation5 + $0x790] sm:$0xff]
    %v364 = vld [vmem:[#allocation5 + $0x798] sm:$0xff]
    %v365 = vld [vmem:[#allocation5 + $0x7a0] sm:$0xff]
    %v366 = vld [vmem:[#allocation5 + $0x7a8] sm:$0xff]
    %v367 = vld [vmem:[#allocation5 + $0x7b0] sm:$0xff]
    %v368 = vld [vmem:[#allocation5 + $0x7b8] sm:$0xff]
    %v369 = vld [vmem:[#allocation5 + $0x7c0] sm:$0xff]
    %v370 = vld [vmem:[#allocation5 + $0x7c8] sm:$0xff]
    %v371 = vld [vmem:[#allocation5 + $0x7d0] sm:$0xff]
    %v372 = vld [vmem:[#allocation5 + $0x7d8] sm:$0xff]
    %v373 = vld [vmem:[#allocation5 + $0x7e0] sm:$0xff]
    %v374 = vld [vmem:[#allocation5 + $0x7e8] sm:$0xff]
    %v375 = vld [vmem:[#allocation5 + $0x7f0] sm:$0xff]
    %v376 = vld [vmem:[#allocation5 + $0x7f8] sm:$0xff]
    %v377 = vld [vmem:[#allocation7] sm:$0xff]
    %v379 = vperm.slane %v377, 0
    %v380 = vperm.slane %v377, 1
    %v381 = vperm.slane %v377, 2
    %v382 = vperm.slane %v377, 3
    %v383 = vperm.slane %v377, 4
    %v384 = vperm.slane %v377, 5
    %v385 = vperm.slane %v377, 6
    %v386 = vperm.slane %v377, 7
    %v399 = vunpack.c.l.b16 %v117
    %v400 = vunpack.c.h.b16 %v117
    %v401 = vunpack.c.l.b16 %v118
    %v402 = vunpack.c.h.b16 %v118
    %v403 = vunpack.c.l.b16 %v119
    %v404 = vunpack.c.h.b16 %v119
    %v405 = vunpack.c.l.b16 %v120
    %v406 = vunpack.c.h.b16 %v120
    %v407 = vpack.c.b16 %v403, %v399
    %v408 = vpack.c.b16 %v404, %v400
    %v409 = vpack.c.b16 %v405, %v401
    %v410 = vpack.c.b16 %v406, %v402
    %v671 = vunpack.c.l.b16 %v121
    %v672 = vunpack.c.h.b16 %v121
    %v673 = vunpack.c.l.b16 %v122
    %v674 = vunpack.c.h.b16 %v122
    %v675 = vunpack.c.l.b16 %v123
    %v676 = vunpack.c.h.b16 %v123
    %v677 = vunpack.c.l.b16 %v124
    %v678 = vunpack.c.h.b16 %v124
    %v679 = vunpack.c.l.b16 %v125
    %v680 = vunpack.c.h.b16 %v125
    %v681 = vunpack.c.l.b16 %v126
    %v682 = vunpack.c.h.b16 %v126
    %v683 = vunpack.c.l.b16 %v127
    %v684 = vunpack.c.h.b16 %v127
    %v685 = vunpack.c.l.b16 %v128
    %v686 = vunpack.c.h.b16 %v128
    %v687 = vunpack.c.l.b16 %v129
    %v688 = vunpack.c.h.b16 %v129
    %v689 = vunpack.c.l.b16 %v130
    %v690 = vunpack.c.h.b16 %v130
    %v691 = vunpack.c.l.b16 %v131
    %v692 = vunpack.c.h.b16 %v131
    %v693 = vunpack.c.l.b16 %v132
    %v694 = vunpack.c.h.b16 %v132
    %v695 = vunpack.c.l.b16 %v133
    %v696 = vunpack.c.h.b16 %v133
    %v697 = vunpack.c.l.b16 %v134
    %v698 = vunpack.c.h.b16 %v134
    %v699 = vunpack.c.l.b16 %v135
    %v700 = vunpack.c.h.b16 %v135
    %v701 = vunpack.c.l.b16 %v136
    %v702 = vunpack.c.h.b16 %v136
    %v703 = vunpack.c.l.b16 %v137
    %v704 = vunpack.c.h.b16 %v137
    %v705 = vunpack.c.l.b16 %v138
    %v706 = vunpack.c.h.b16 %v138
    %v707 = vunpack.c.l.b16 %v139
    %v708 = vunpack.c.h.b16 %v139
    %v709 = vunpack.c.l.b16 %v140
    %v710 = vunpack.c.h.b16 %v140
    %v711 = vunpack.c.l.b16 %v141
    %v712 = vunpack.c.h.b16 %v141
    %v713 = vunpack.c.l.b16 %v142
    %v714 = vunpack.c.h.b16 %v142
    %v715 = vunpack.c.l.b16 %v143
    %v716 = vunpack.c.h.b16 %v143
    %v717 = vunpack.c.l.b16 %v144
    %v718 = vunpack.c.h.b16 %v144
    %v719 = vunpack.c.l.b16 %v145
    %v720 = vunpack.c.h.b16 %v145
    %v721 = vunpack.c.l.b16 %v146
    %v722 = vunpack.c.h.b16 %v146
    %v723 = vunpack.c.l.b16 %v147
    %v724 = vunpack.c.h.b16 %v147
    %v725 = vunpack.c.l.b16 %v148
    %v726 = vunpack.c.h.b16 %v148
    %v727 = vunpack.c.l.b16 %v149
    %v728 = vunpack.c.h.b16 %v149
    %v729 = vunpack.c.l.b16 %v150
    %v730 = vunpack.c.h.b16 %v150
    %v731 = vunpack.c.l.b16 %v151
    %v732 = vunpack.c.h.b16 %v151
    %v733 = vunpack.c.l.b16 %v152
    %v734 = vunpack.c.h.b16 %v152
    %v735 = vunpack.c.l.b16 %v153
    %v736 = vunpack.c.h.b16 %v153
    %v737 = vunpack.c.l.b16 %v154
    %v738 = vunpack.c.h.b16 %v154
    %v739 = vunpack.c.l.b16 %v155
    %v740 = vunpack.c.h.b16 %v155
    %v741 = vunpack.c.l.b16 %v156
    %v742 = vunpack.c.h.b16 %v156
    %v743 = vunpack.c.l.b16 %v157
    %v744 = vunpack.c.h.b16 %v157
    %v745 = vunpack.c.l.b16 %v158
    %v746 = vunpack.c.h.b16 %v158
    %v747 = vunpack.c.l.b16 %v159
    %v748 = vunpack.c.h.b16 %v159
    %v749 = vunpack.c.l.b16 %v160
    %v750 = vunpack.c.h.b16 %v160
    %v751 = vunpack.c.l.b16 %v161
    %v752 = vunpack.c.h.b16 %v161
    %v753 = vunpack.c.l.b16 %v162
    %v754 = vunpack.c.h.b16 %v162
    %v755 = vunpack.c.l.b16 %v163
    %v756 = vunpack.c.h.b16 %v163
    %v757 = vunpack.c.l.b16 %v164
    %v758 = vunpack.c.h.b16 %v164
    %v759 = vunpack.c.l.b16 %v165
    %v760 = vunpack.c.h.b16 %v165
    %v761 = vunpack.c.l.b16 %v166
    %v762 = vunpack.c.h.b16 %v166
    %v763 = vunpack.c.l.b16 %v167
    %v764 = vunpack.c.h.b16 %v167
    %v765 = vunpack.c.l.b16 %v168
    %v766 = vunpack.c.h.b16 %v168
    %v767 = vunpack.c.l.b16 %v169
    %v768 = vunpack.c.h.b16 %v169
    %v769 = vunpack.c.l.b16 %v170
    %v770 = vunpack.c.h.b16 %v170
    %v771 = vunpack.c.l.b16 %v171
    %v772 = vunpack.c.h.b16 %v171
    %v773 = vunpack.c.l.b16 %v172
    %v774 = vunpack.c.h.b16 %v172
    %v775 = vunpack.c.l.b16 %v173
    %v776 = vunpack.c.h.b16 %v173
    %v777 = vunpack.c.l.b16 %v174
    %v778 = vunpack.c.h.b16 %v174
    %v779 = vunpack.c.l.b16 %v175
    %v780 = vunpack.c.h.b16 %v175
    %v781 = vunpack.c.l.b16 %v176
    %v782 = vunpack.c.h.b16 %v176
    %v783 = vunpack.c.l.b16 %v177
    %v784 = vunpack.c.h.b16 %v177
    %v785 = vunpack.c.l.b16 %v178
    %v786 = vunpack.c.h.b16 %v178
    %v787 = vunpack.c.l.b16 %v179
    %v788 = vunpack.c.h.b16 %v179
    %v789 = vunpack.c.l.b16 %v180
    %v790 = vunpack.c.h.b16 %v180
    %v791 = vunpack.c.l.b16 %v181
    %v792 = vunpack.c.h.b16 %v181
    %v793 = vunpack.c.l.b16 %v182
    %v794 = vunpack.c.h.b16 %v182
    %v795 = vunpack.c.l.b16 %v183
    %v796 = vunpack.c.h.b16 %v183
    %v797 = vunpack.c.l.b16 %v184
    %v798 = vunpack.c.h.b16 %v184
    %v799 = vunpack.c.l.b16 %v185
    %v800 = vunpack.c.h.b16 %v185
    %v801 = vunpack.c.l.b16 %v186
    %v802 = vunpack.c.h.b16 %v186
    %v803 = vunpack.c.l.b16 %v187
    %v804 = vunpack.c.h.b16 %v187
    %v805 = vunpack.c.l.b16 %v188
    %v806 = vunpack.c.h.b16 %v188
    %v807 = vunpack.c.l.b16 %v189
    %v808 = vunpack.c.h.b16 %v189
    %v809 = vunpack.c.l.b16 %v190
    %v810 = vunpack.c.h.b16 %v190
    %v811 = vunpack.c.l.b16 %v191
    %v812 = vunpack.c.h.b16 %v191
    %v813 = vunpack.c.l.b16 %v192
    %v814 = vunpack.c.h.b16 %v192
    %v815 = vunpack.c.l.b16 %v193
    %v816 = vunpack.c.h.b16 %v193
    %v817 = vunpack.c.l.b16 %v194
    %v818 = vunpack.c.h.b16 %v194
    %v819 = vunpack.c.l.b16 %v195
    %v820 = vunpack.c.h.b16 %v195
    %v821 = vunpack.c.l.b16 %v196
    %v822 = vunpack.c.h.b16 %v196
    %v823 = vunpack.c.l.b16 %v197
    %v824 = vunpack.c.h.b16 %v197
    %v825 = vunpack.c.l.b16 %v198
    %v826 = vunpack.c.h.b16 %v198
    %v827 = vunpack.c.l.b16 %v199
    %v828 = vunpack.c.h.b16 %v199
    %v829 = vunpack.c.l.b16 %v200
    %v830 = vunpack.c.h.b16 %v200
    %v831 = vunpack.c.l.b16 %v201
    %v832 = vunpack.c.h.b16 %v201
    %v833 = vunpack.c.l.b16 %v202
    %v834 = vunpack.c.h.b16 %v202
    %v835 = vunpack.c.l.b16 %v203
    %v836 = vunpack.c.h.b16 %v203
    %v837 = vunpack.c.l.b16 %v204
    %v838 = vunpack.c.h.b16 %v204
    %v839 = vunpack.c.l.b16 %v205
    %v840 = vunpack.c.h.b16 %v205
    %v841 = vunpack.c.l.b16 %v206
    %v842 = vunpack.c.h.b16 %v206
    %v843 = vunpack.c.l.b16 %v207
    %v844 = vunpack.c.h.b16 %v207
    %v845 = vunpack.c.l.b16 %v208
    %v846 = vunpack.c.h.b16 %v208
    %v847 = vunpack.c.l.b16 %v209
    %v848 = vunpack.c.h.b16 %v209
    %v849 = vunpack.c.l.b16 %v210
    %v850 = vunpack.c.h.b16 %v210
    %v851 = vunpack.c.l.b16 %v211
    %v852 = vunpack.c.h.b16 %v211
    %v853 = vunpack.c.l.b16 %v212
    %v854 = vunpack.c.h.b16 %v212
    %v855 = vunpack.c.l.b16 %v213
    %v856 = vunpack.c.h.b16 %v213
    %v857 = vunpack.c.l.b16 %v214
    %v858 = vunpack.c.h.b16 %v214
    %v859 = vunpack.c.l.b16 %v215
    %v860 = vunpack.c.h.b16 %v215
    %v861 = vunpack.c.l.b16 %v216
    %v862 = vunpack.c.h.b16 %v216
    %v863 = vunpack.c.l.b16 %v217
    %v864 = vunpack.c.h.b16 %v217
    %v865 = vunpack.c.l.b16 %v218
    %v866 = vunpack.c.h.b16 %v218
    %v867 = vunpack.c.l.b16 %v219
    %v868 = vunpack.c.h.b16 %v219
    %v869 = vunpack.c.l.b16 %v220
    %v870 = vunpack.c.h.b16 %v220
    %v871 = vunpack.c.l.b16 %v221
    %v872 = vunpack.c.h.b16 %v221
    %v873 = vunpack.c.l.b16 %v222
    %v874 = vunpack.c.h.b16 %v222
    %v875 = vunpack.c.l.b16 %v223
    %v876 = vunpack.c.h.b16 %v223
    %v877 = vunpack.c.l.b16 %v224
    %v878 = vunpack.c.h.b16 %v224
    %v879 = vunpack.c.l.b16 %v225
    %v880 = vunpack.c.h.b16 %v225
    %v881 = vunpack.c.l.b16 %v226
    %v882 = vunpack.c.h.b16 %v226
    %v883 = vunpack.c.l.b16 %v227
    %v884 = vunpack.c.h.b16 %v227
    %v885 = vunpack.c.l.b16 %v228
    %v886 = vunpack.c.h.b16 %v228
    %v887 = vunpack.c.l.b16 %v229
    %v888 = vunpack.c.h.b16 %v229
    %v889 = vunpack.c.l.b16 %v230
    %v890 = vunpack.c.h.b16 %v230
    %v891 = vunpack.c.l.b16 %v231
    %v892 = vunpack.c.h.b16 %v231
    %v893 = vunpack.c.l.b16 %v232
    %v894 = vunpack.c.h.b16 %v232
    %v895 = vunpack.c.l.b16 %v233
    %v896 = vunpack.c.h.b16 %v233
    %v897 = vunpack.c.l.b16 %v234
    %v898 = vunpack.c.h.b16 %v234
    %v899 = vunpack.c.l.b16 %v235
    %v900 = vunpack.c.h.b16 %v235
    %v901 = vunpack.c.l.b16 %v236
    %v902 = vunpack.c.h.b16 %v236
    %v903 = vunpack.c.l.b16 %v237
    %v904 = vunpack.c.h.b16 %v237
    %v905 = vunpack.c.l.b16 %v238
    %v906 = vunpack.c.h.b16 %v238
    %v907 = vunpack.c.l.b16 %v239
    %v908 = vunpack.c.h.b16 %v239
    %v909 = vunpack.c.l.b16 %v240
    %v910 = vunpack.c.h.b16 %v240
    %v911 = vunpack.c.l.b16 %v241
    %v912 = vunpack.c.h.b16 %v241
    %v913 = vunpack.c.l.b16 %v242
    %v914 = vunpack.c.h.b16 %v242
    %v915 = vunpack.c.l.b16 %v243
    %v916 = vunpack.c.h.b16 %v243
    %v917 = vunpack.c.l.b16 %v244
    %v918 = vunpack.c.h.b16 %v244
    %v919 = vunpack.c.l.b16 %v245
    %v920 = vunpack.c.h.b16 %v245
    %v921 = vunpack.c.l.b16 %v246
    %v922 = vunpack.c.h.b16 %v246
    %v923 = vunpack.c.l.b16 %v247
    %v924 = vunpack.c.h.b16 %v247
    %v925 = vunpack.c.l.b16 %v248
    %v926 = vunpack.c.h.b16 %v248
    %v927 = vunpack.c.l.b16 %v249
    %v928 = vunpack.c.h.b16 %v249
    %v929 = vunpack.c.l.b16 %v250
    %v930 = vunpack.c.h.b16 %v250
    %v931 = vunpack.c.l.b16 %v251
    %v932 = vunpack.c.h.b16 %v251
    %v933 = vunpack.c.l.b16 %v252
    %v934 = vunpack.c.h.b16 %v252
    %v935 = vunpack.c.l.b16 %v253
    %v936 = vunpack.c.h.b16 %v253
    %v937 = vunpack.c.l.b16 %v254
    %v938 = vunpack.c.h.b16 %v254
    %v939 = vunpack.c.l.b16 %v255
    %v940 = vunpack.c.h.b16 %v255
    %v941 = vunpack.c.l.b16 %v256
    %v942 = vunpack.c.h.b16 %v256
    %v943 = vunpack.c.l.b16 %v257
    %v944 = vunpack.c.h.b16 %v257
    %v945 = vunpack.c.l.b16 %v258
    %v946 = vunpack.c.h.b16 %v258
    %v947 = vunpack.c.l.b16 %v259
    %v948 = vunpack.c.h.b16 %v259
    %v949 = vunpack.c.l.b16 %v260
    %v950 = vunpack.c.h.b16 %v260
    %v951 = vunpack.c.l.b16 %v261
    %v952 = vunpack.c.h.b16 %v261
    %v953 = vunpack.c.l.b16 %v262
    %v954 = vunpack.c.h.b16 %v262
    %v955 = vunpack.c.l.b16 %v263
    %v956 = vunpack.c.h.b16 %v263
    %v957 = vunpack.c.l.b16 %v264
    %v958 = vunpack.c.h.b16 %v264
    %v959 = vunpack.c.l.b16 %v265
    %v960 = vunpack.c.h.b16 %v265
    %v961 = vunpack.c.l.b16 %v266
    %v962 = vunpack.c.h.b16 %v266
    %v963 = vunpack.c.l.b16 %v267
    %v964 = vunpack.c.h.b16 %v267
    %v965 = vunpack.c.l.b16 %v268
    %v966 = vunpack.c.h.b16 %v268
    %v967 = vunpack.c.l.b16 %v269
    %v968 = vunpack.c.h.b16 %v269
    %v969 = vunpack.c.l.b16 %v270
    %v970 = vunpack.c.h.b16 %v270
    %v971 = vunpack.c.l.b16 %v271
    %v972 = vunpack.c.h.b16 %v271
    %v973 = vunpack.c.l.b16 %v272
    %v974 = vunpack.c.h.b16 %v272
    %v975 = vunpack.c.l.b16 %v273
    %v976 = vunpack.c.h.b16 %v273
    %v977 = vunpack.c.l.b16 %v274
    %v978 = vunpack.c.h.b16 %v274
    %v979 = vunpack.c.l.b16 %v275
    %v980 = vunpack.c.h.b16 %v275
    %v981 = vunpack.c.l.b16 %v276
    %v982 = vunpack.c.h.b16 %v276
    %v983 = vunpack.c.l.b16 %v277
    %v984 = vunpack.c.h.b16 %v277
    %v985 = vunpack.c.l.b16 %v278
    %v986 = vunpack.c.h.b16 %v278
    %v987 = vunpack.c.l.b16 %v279
    %v988 = vunpack.c.h.b16 %v279
    %v989 = vunpack.c.l.b16 %v280
    %v990 = vunpack.c.h.b16 %v280
    %v991 = vunpack.c.l.b16 %v281
    %v992 = vunpack.c.h.b16 %v281
    %v993 = vunpack.c.l.b16 %v282
    %v994 = vunpack.c.h.b16 %v282
    %v995 = vunpack.c.l.b16 %v283
    %v996 = vunpack.c.h.b16 %v283
    %v997 = vunpack.c.l.b16 %v284
    %v998 = vunpack.c.h.b16 %v284
    %v999 = vunpack.c.l.b16 %v285
    %v1000 = vunpack.c.h.b16 %v285
    %v1001 = vunpack.c.l.b16 %v286
    %v1002 = vunpack.c.h.b16 %v286
    %v1003 = vunpack.c.l.b16 %v287
    %v1004 = vunpack.c.h.b16 %v287
    %v1005 = vunpack.c.l.b16 %v288
    %v1006 = vunpack.c.h.b16 %v288
    %v1007 = vunpack.c.l.b16 %v289
    %v1008 = vunpack.c.h.b16 %v289
    %v1009 = vunpack.c.l.b16 %v290
    %v1010 = vunpack.c.h.b16 %v290
    %v1011 = vunpack.c.l.b16 %v291
    %v1012 = vunpack.c.h.b16 %v291
    %v1013 = vunpack.c.l.b16 %v292
    %v1014 = vunpack.c.h.b16 %v292
    %v1015 = vunpack.c.l.b16 %v293
    %v1016 = vunpack.c.h.b16 %v293
    %v1017 = vunpack.c.l.b16 %v294
    %v1018 = vunpack.c.h.b16 %v294
    %v1019 = vunpack.c.l.b16 %v295
    %v1020 = vunpack.c.h.b16 %v295
    %v1021 = vunpack.c.l.b16 %v296
    %v1022 = vunpack.c.h.b16 %v296
    %v1023 = vunpack.c.l.b16 %v297
    %v1024 = vunpack.c.h.b16 %v297
    %v1025 = vunpack.c.l.b16 %v298
    %v1026 = vunpack.c.h.b16 %v298
    %v1027 = vunpack.c.l.b16 %v299
    %v1028 = vunpack.c.h.b16 %v299
    %v1029 = vunpack.c.l.b16 %v300
    %v1030 = vunpack.c.h.b16 %v300
    %v1031 = vunpack.c.l.b16 %v301
    %v1032 = vunpack.c.h.b16 %v301
    %v1033 = vunpack.c.l.b16 %v302
    %v1034 = vunpack.c.h.b16 %v302
    %v1035 = vunpack.c.l.b16 %v303
    %v1036 = vunpack.c.h.b16 %v303
    %v1037 = vunpack.c.l.b16 %v304
    %v1038 = vunpack.c.h.b16 %v304
    %v1039 = vunpack.c.l.b16 %v305
    %v1040 = vunpack.c.h.b16 %v305
    %v1041 = vunpack.c.l.b16 %v306
    %v1042 = vunpack.c.h.b16 %v306
    %v1043 = vunpack.c.l.b16 %v307
    %v1044 = vunpack.c.h.b16 %v307
    %v1045 = vunpack.c.l.b16 %v308
    %v1046 = vunpack.c.h.b16 %v308
    %v1047 = vunpack.c.l.b16 %v309
    %v1048 = vunpack.c.h.b16 %v309
    %v1049 = vunpack.c.l.b16 %v310
    %v1050 = vunpack.c.h.b16 %v310
    %v1051 = vunpack.c.l.b16 %v311
    %v1052 = vunpack.c.h.b16 %v311
    %v1053 = vunpack.c.l.b16 %v312
    %v1054 = vunpack.c.h.b16 %v312
    %v1055 = vunpack.c.l.b16 %v313
    %v1056 = vunpack.c.h.b16 %v313
    %v1057 = vunpack.c.l.b16 %v314
    %v1058 = vunpack.c.h.b16 %v314
    %v1059 = vunpack.c.l.b16 %v315
    %v1060 = vunpack.c.h.b16 %v315
    %v1061 = vunpack.c.l.b16 %v316
    %v1062 = vunpack.c.h.b16 %v316
    %v1063 = vunpack.c.l.b16 %v317
    %v1064 = vunpack.c.h.b16 %v317
    %v1065 = vunpack.c.l.b16 %v318
    %v1066 = vunpack.c.h.b16 %v318
    %v1067 = vunpack.c.l.b16 %v319
    %v1068 = vunpack.c.h.b16 %v319
    %v1069 = vunpack.c.l.b16 %v320
    %v1070 = vunpack.c.h.b16 %v320
    %v1071 = vunpack.c.l.b16 %v321
    %v1072 = vunpack.c.h.b16 %v321
    %v1073 = vunpack.c.l.b16 %v322
    %v1074 = vunpack.c.h.b16 %v322
    %v1075 = vunpack.c.l.b16 %v323
    %v1076 = vunpack.c.h.b16 %v323
    %v1077 = vunpack.c.l.b16 %v324
    %v1078 = vunpack.c.h.b16 %v324
    %v1079 = vunpack.c.l.b16 %v325
    %v1080 = vunpack.c.h.b16 %v325
    %v1081 = vunpack.c.l.b16 %v326
    %v1082 = vunpack.c.h.b16 %v326
    %v1083 = vunpack.c.l.b16 %v327
    %v1084 = vunpack.c.h.b16 %v327
    %v1085 = vunpack.c.l.b16 %v328
    %v1086 = vunpack.c.h.b16 %v328
    %v1087 = vunpack.c.l.b16 %v329
    %v1088 = vunpack.c.h.b16 %v329
    %v1089 = vunpack.c.l.b16 %v330
    %v1090 = vunpack.c.h.b16 %v330
    %v1091 = vunpack.c.l.b16 %v331
    %v1092 = vunpack.c.h.b16 %v331
    %v1093 = vunpack.c.l.b16 %v332
    %v1094 = vunpack.c.h.b16 %v332
    %v1095 = vunpack.c.l.b16 %v333
    %v1096 = vunpack.c.h.b16 %v333
    %v1097 = vunpack.c.l.b16 %v334
    %v1098 = vunpack.c.h.b16 %v334
    %v1099 = vunpack.c.l.b16 %v335
    %v1100 = vunpack.c.h.b16 %v335
    %v1101 = vunpack.c.l.b16 %v336
    %v1102 = vunpack.c.h.b16 %v336
    %v1103 = vunpack.c.l.b16 %v337
    %v1104 = vunpack.c.h.b16 %v337
    %v1105 = vunpack.c.l.b16 %v338
    %v1106 = vunpack.c.h.b16 %v338
    %v1107 = vunpack.c.l.b16 %v339
    %v1108 = vunpack.c.h.b16 %v339
    %v1109 = vunpack.c.l.b16 %v340
    %v1110 = vunpack.c.h.b16 %v340
    %v1111 = vunpack.c.l.b16 %v341
    %v1112 = vunpack.c.h.b16 %v341
    %v1113 = vunpack.c.l.b16 %v342
    %v1114 = vunpack.c.h.b16 %v342
    %v1115 = vunpack.c.l.b16 %v343
    %v1116 = vunpack.c.h.b16 %v343
    %v1117 = vunpack.c.l.b16 %v344
    %v1118 = vunpack.c.h.b16 %v344
    %v1119 = vunpack.c.l.b16 %v345
    %v1120 = vunpack.c.h.b16 %v345
    %v1121 = vunpack.c.l.b16 %v346
    %v1122 = vunpack.c.h.b16 %v346
    %v1123 = vunpack.c.l.b16 %v347
    %v1124 = vunpack.c.h.b16 %v347
    %v1125 = vunpack.c.l.b16 %v348
    %v1126 = vunpack.c.h.b16 %v348
    %v1127 = vunpack.c.l.b16 %v349
    %v1128 = vunpack.c.h.b16 %v349
    %v1129 = vunpack.c.l.b16 %v350
    %v1130 = vunpack.c.h.b16 %v350
    %v1131 = vunpack.c.l.b16 %v351
    %v1132 = vunpack.c.h.b16 %v351
    %v1133 = vunpack.c.l.b16 %v352
    %v1134 = vunpack.c.h.b16 %v352
    %v1135 = vunpack.c.l.b16 %v353
    %v1136 = vunpack.c.h.b16 %v353
    %v1137 = vunpack.c.l.b16 %v354
    %v1138 = vunpack.c.h.b16 %v354
    %v1139 = vunpack.c.l.b16 %v355
    %v1140 = vunpack.c.h.b16 %v355
    %v1141 = vunpack.c.l.b16 %v356
    %v1142 = vunpack.c.h.b16 %v356
    %v1143 = vunpack.c.l.b16 %v357
    %v1144 = vunpack.c.h.b16 %v357
    %v1145 = vunpack.c.l.b16 %v358
    %v1146 = vunpack.c.h.b16 %v358
    %v1147 = vunpack.c.l.b16 %v359
    %v1148 = vunpack.c.h.b16 %v359
    %v1149 = vunpack.c.l.b16 %v360
    %v1150 = vunpack.c.h.b16 %v360
    %v1151 = vunpack.c.l.b16 %v361
    %v1152 = vunpack.c.h.b16 %v361
    %v1153 = vunpack.c.l.b16 %v362
    %v1154 = vunpack.c.h.b16 %v362
    %v1155 = vunpack.c.l.b16 %v363
    %v1156 = vunpack.c.h.b16 %v363
    %v1157 = vunpack.c.l.b16 %v364
    %v1158 = vunpack.c.h.b16 %v364
    %v1159 = vunpack.c.l.b16 %v365
    %v1160 = vunpack.c.h.b16 %v365
    %v1161 = vunpack.c.l.b16 %v366
    %v1162 = vunpack.c.h.b16 %v366
    %v1163 = vunpack.c.l.b16 %v367
    %v1164 = vunpack.c.h.b16 %v367
    %v1165 = vunpack.c.l.b16 %v368
    %v1166 = vunpack.c.h.b16 %v368
    %v1167 = vunpack.c.l.b16 %v369
    %v1168 = vunpack.c.h.b16 %v369
    %v1169 = vunpack.c.l.b16 %v370
    %v1170 = vunpack.c.h.b16 %v370
    %v1171 = vunpack.c.l.b16 %v371
    %v1172 = vunpack.c.h.b16 %v371
    %v1173 = vunpack.c.l.b16 %v372
    %v1174 = vunpack.c.h.b16 %v372
    %v1175 = vunpack.c.l.b16 %v373
    %v1176 = vunpack.c.h.b16 %v373
    %v1177 = vunpack.c.l.b16 %v374
    %v1178 = vunpack.c.h.b16 %v374
    %v1179 = vunpack.c.l.b16 %v375
    %v1180 = vunpack.c.h.b16 %v375
    %v1181 = vunpack.c.l.b16 %v376
    %v1182 = vunpack.c.h.b16 %v376
    %v1183 = vpack.c.b16 %v679, %v671
    %v1184 = vpack.c.b16 %v680, %v672
    %v1185 = vpack.c.b16 %v681, %v673
    %v1186 = vpack.c.b16 %v682, %v674
    %v1187 = vpack.c.b16 %v683, %v675
    %v1188 = vpack.c.b16 %v684, %v676
    %v1189 = vpack.c.b16 %v685, %v677
    %v1190 = vpack.c.b16 %v686, %v678
    %v1191 = vpack.c.b16 %v695, %v687
    %v1192 = vpack.c.b16 %v696, %v688
    %v1193 = vpack.c.b16 %v697, %v689
    %v1194 = vpack.c.b16 %v698, %v690
    %v1195 = vpack.c.b16 %v699, %v691
    %v1196 = vpack.c.b16 %v700, %v692
    %v1197 = vpack.c.b16 %v701, %v693
    %v1198 = vpack.c.b16 %v702, %v694
    %v1199 = vpack.c.b16 %v711, %v703
    %v1200 = vpack.c.b16 %v712, %v704
    %v1201 = vpack.c.b16 %v713, %v705
    %v1202 = vpack.c.b16 %v714, %v706
    %v1203 = vpack.c.b16 %v715, %v707
    %v1204 = vpack.c.b16 %v716, %v708
    %v1205 = vpack.c.b16 %v717, %v709
    %v1206 = vpack.c.b16 %v718, %v710
    %v1207 = vpack.c.b16 %v727, %v719
    %v1208 = vpack.c.b16 %v728, %v720
    %v1209 = vpack.c.b16 %v729, %v721
    %v1210 = vpack.c.b16 %v730, %v722
    %v1211 = vpack.c.b16 %v731, %v723
    %v1212 = vpack.c.b16 %v732, %v724
    %v1213 = vpack.c.b16 %v733, %v725
    %v1214 = vpack.c.b16 %v734, %v726
    %v1215 = vpack.c.b16 %v743, %v735
    %v1216 = vpack.c.b16 %v744, %v736
    %v1217 = vpack.c.b16 %v745, %v737
    %v1218 = vpack.c.b16 %v746, %v738
    %v1219 = vpack.c.b16 %v747, %v739
    %v1220 = vpack.c.b16 %v748, %v740
    %v1221 = vpack.c.b16 %v749, %v741
    %v1222 = vpack.c.b16 %v750, %v742
    %v1223 = vpack.c.b16 %v759, %v751
    %v1224 = vpack.c.b16 %v760, %v752
    %v1225 = vpack.c.b16 %v761, %v753
    %v1226 = vpack.c.b16 %v762, %v754
    %v1227 = vpack.c.b16 %v763, %v755
    %v1228 = vpack.c.b16 %v764, %v756
    %v1229 = vpack.c.b16 %v765, %v757
    %v1230 = vpack.c.b16 %v766, %v758
    %v1231 = vpack.c.b16 %v775, %v767
    %v1232 = vpack.c.b16 %v776, %v768
    %v1233 = vpack.c.b16 %v777, %v769
    %v1234 = vpack.c.b16 %v778, %v770
    %v1235 = vpack.c.b16 %v779, %v771
    %v1236 = vpack.c.b16 %v780, %v772
    %v1237 = vpack.c.b16 %v781, %v773
    %v1238 = vpack.c.b16 %v782, %v774
    %v1239 = vpack.c.b16 %v791, %v783
    %v1240 = vpack.c.b16 %v792, %v784
    %v1241 = vpack.c.b16 %v793, %v785
    %v1242 = vpack.c.b16 %v794, %v786
    %v1243 = vpack.c.b16 %v795, %v787
    %v1244 = vpack.c.b16 %v796, %v788
    %v1245 = vpack.c.b16 %v797, %v789
    %v1246 = vpack.c.b16 %v798, %v790
    %v1247 = vpack.c.b16 %v807, %v799
    %v1248 = vpack.c.b16 %v808, %v800
    %v1249 = vpack.c.b16 %v809, %v801
    %v1250 = vpack.c.b16 %v810, %v802
    %v1251 = vpack.c.b16 %v811, %v803
    %v1252 = vpack.c.b16 %v812, %v804
    %v1253 = vpack.c.b16 %v813, %v805
    %v1254 = vpack.c.b16 %v814, %v806
    %v1255 = vpack.c.b16 %v823, %v815
    %v1256 = vpack.c.b16 %v824, %v816
    %v1257 = vpack.c.b16 %v825, %v817
    %v1258 = vpack.c.b16 %v826, %v818
    %v1259 = vpack.c.b16 %v827, %v819
    %v1260 = vpack.c.b16 %v828, %v820
    %v1261 = vpack.c.b16 %v829, %v821
    %v1262 = vpack.c.b16 %v830, %v822
    %v1263 = vpack.c.b16 %v839, %v831
    %v1264 = vpack.c.b16 %v840, %v832
    %v1265 = vpack.c.b16 %v841, %v833
    %v1266 = vpack.c.b16 %v842, %v834
    %v1267 = vpack.c.b16 %v843, %v835
    %v1268 = vpack.c.b16 %v844, %v836
    %v1269 = vpack.c.b16 %v845, %v837
    %v1270 = vpack.c.b16 %v846, %v838
    %v1271 = vpack.c.b16 %v855, %v847
    %v1272 = vpack.c.b16 %v856, %v848
    %v1273 = vpack.c.b16 %v857, %v849
    %v1274 = vpack.c.b16 %v858, %v850
    %v1275 = vpack.c.b16 %v859, %v851
    %v1276 = vpack.c.b16 %v860, %v852
    %v1277 = vpack.c.b16 %v861, %v853
    %v1278 = vpack.c.b16 %v862, %v854
    %v1279 = vpack.c.b16 %v871, %v863
    %v1280 = vpack.c.b16 %v872, %v864
    %v1281 = vpack.c.b16 %v873, %v865
    %v1282 = vpack.c.b16 %v874, %v866
    %v1283 = vpack.c.b16 %v875, %v867
    %v1284 = vpack.c.b16 %v876, %v868
    %v1285 = vpack.c.b16 %v877, %v869
    %v1286 = vpack.c.b16 %v878, %v870
    %v1287 = vpack.c.b16 %v887, %v879
    %v1288 = vpack.c.b16 %v888, %v880
    %v1289 = vpack.c.b16 %v889, %v881
    %v1290 = vpack.c.b16 %v890, %v882
    %v1291 = vpack.c.b16 %v891, %v883
    %v1292 = vpack.c.b16 %v892, %v884
    %v1293 = vpack.c.b16 %v893, %v885
    %v1294 = vpack.c.b16 %v894, %v886
    %v1295 = vpack.c.b16 %v903, %v895
    %v1296 = vpack.c.b16 %v904, %v896
    %v1297 = vpack.c.b16 %v905, %v897
    %v1298 = vpack.c.b16 %v906, %v898
    %v1299 = vpack.c.b16 %v907, %v899
    %v1300 = vpack.c.b16 %v908, %v900
    %v1301 = vpack.c.b16 %v909, %v901
    %v1302 = vpack.c.b16 %v910, %v902
    %v1303 = vpack.c.b16 %v919, %v911
    %v1304 = vpack.c.b16 %v920, %v912
    %v1305 = vpack.c.b16 %v921, %v913
    %v1306 = vpack.c.b16 %v922, %v914
    %v1307 = vpack.c.b16 %v923, %v915
    %v1308 = vpack.c.b16 %v924, %v916
    %v1309 = vpack.c.b16 %v925, %v917
    %v1310 = vpack.c.b16 %v926, %v918
    %v1311 = vpack.c.b16 %v935, %v927
    %v1312 = vpack.c.b16 %v936, %v928
    %v1313 = vpack.c.b16 %v937, %v929
    %v1314 = vpack.c.b16 %v938, %v930
    %v1315 = vpack.c.b16 %v939, %v931
    %v1316 = vpack.c.b16 %v940, %v932
    %v1317 = vpack.c.b16 %v941, %v933
    %v1318 = vpack.c.b16 %v942, %v934
    %v1319 = vpack.c.b16 %v951, %v943
    %v1320 = vpack.c.b16 %v952, %v944
    %v1321 = vpack.c.b16 %v953, %v945
    %v1322 = vpack.c.b16 %v954, %v946
    %v1323 = vpack.c.b16 %v955, %v947
    %v1324 = vpack.c.b16 %v956, %v948
    %v1325 = vpack.c.b16 %v957, %v949
    %v1326 = vpack.c.b16 %v958, %v950
    %v1327 = vpack.c.b16 %v967, %v959
    %v1328 = vpack.c.b16 %v968, %v960
    %v1329 = vpack.c.b16 %v969, %v961
    %v1330 = vpack.c.b16 %v970, %v962
    %v1331 = vpack.c.b16 %v971, %v963
    %v1332 = vpack.c.b16 %v972, %v964
    %v1333 = vpack.c.b16 %v973, %v965
    %v1334 = vpack.c.b16 %v974, %v966
    %v1335 = vpack.c.b16 %v983, %v975
    %v1336 = vpack.c.b16 %v984, %v976
    %v1337 = vpack.c.b16 %v985, %v977
    %v1338 = vpack.c.b16 %v986, %v978
    %v1339 = vpack.c.b16 %v987, %v979
    %v1340 = vpack.c.b16 %v988, %v980
    %v1341 = vpack.c.b16 %v989, %v981
    %v1342 = vpack.c.b16 %v990, %v982
    %v1343 = vpack.c.b16 %v999, %v991
    %v1344 = vpack.c.b16 %v1000, %v992
    %v1345 = vpack.c.b16 %v1001, %v993
    %v1346 = vpack.c.b16 %v1002, %v994
    %v1347 = vpack.c.b16 %v1003, %v995
    %v1348 = vpack.c.b16 %v1004, %v996
    %v1349 = vpack.c.b16 %v1005, %v997
    %v1350 = vpack.c.b16 %v1006, %v998
    %v1351 = vpack.c.b16 %v1015, %v1007
    %v1352 = vpack.c.b16 %v1016, %v1008
    %v1353 = vpack.c.b16 %v1017, %v1009
    %v1354 = vpack.c.b16 %v1018, %v1010
    %v1355 = vpack.c.b16 %v1019, %v1011
    %v1356 = vpack.c.b16 %v1020, %v1012
    %v1357 = vpack.c.b16 %v1021, %v1013
    %v1358 = vpack.c.b16 %v1022, %v1014
    %v1359 = vpack.c.b16 %v1031, %v1023
    %v1360 = vpack.c.b16 %v1032, %v1024
    %v1361 = vpack.c.b16 %v1033, %v1025
    %v1362 = vpack.c.b16 %v1034, %v1026
    %v1363 = vpack.c.b16 %v1035, %v1027
    %v1364 = vpack.c.b16 %v1036, %v1028
    %v1365 = vpack.c.b16 %v1037, %v1029
    %v1366 = vpack.c.b16 %v1038, %v1030
    %v1367 = vpack.c.b16 %v1047, %v1039
    %v1368 = vpack.c.b16 %v1048, %v1040
    %v1369 = vpack.c.b16 %v1049, %v1041
    %v1370 = vpack.c.b16 %v1050, %v1042
    %v1371 = vpack.c.b16 %v1051, %v1043
    %v1372 = vpack.c.b16 %v1052, %v1044
    %v1373 = vpack.c.b16 %v1053, %v1045
    %v1374 = vpack.c.b16 %v1054, %v1046
    %v1375 = vpack.c.b16 %v1063, %v1055
    %v1376 = vpack.c.b16 %v1064, %v1056
    %v1377 = vpack.c.b16 %v1065, %v1057
    %v1378 = vpack.c.b16 %v1066, %v1058
    %v1379 = vpack.c.b16 %v1067, %v1059
    %v1380 = vpack.c.b16 %v1068, %v1060
    %v1381 = vpack.c.b16 %v1069, %v1061
    %v1382 = vpack.c.b16 %v1070, %v1062
    %v1383 = vpack.c.b16 %v1079, %v1071
    %v1384 = vpack.c.b16 %v1080, %v1072
    %v1385 = vpack.c.b16 %v1081, %v1073
    %v1386 = vpack.c.b16 %v1082, %v1074
    %v1387 = vpack.c.b16 %v1083, %v1075
    %v1388 = vpack.c.b16 %v1084, %v1076
    %v1389 = vpack.c.b16 %v1085, %v1077
    %v1390 = vpack.c.b16 %v1086, %v1078
    %v1391 = vpack.c.b16 %v1095, %v1087
    %v1392 = vpack.c.b16 %v1096, %v1088
    %v1393 = vpack.c.b16 %v1097, %v1089
    %v1394 = vpack.c.b16 %v1098, %v1090
    %v1395 = vpack.c.b16 %v1099, %v1091
    %v1396 = vpack.c.b16 %v1100, %v1092
    %v1397 = vpack.c.b16 %v1101, %v1093
    %v1398 = vpack.c.b16 %v1102, %v1094
    %v1399 = vpack.c.b16 %v1111, %v1103
    %v1400 = vpack.c.b16 %v1112, %v1104
    %v1401 = vpack.c.b16 %v1113, %v1105
    %v1402 = vpack.c.b16 %v1114, %v1106
    %v1403 = vpack.c.b16 %v1115, %v1107
    %v1404 = vpack.c.b16 %v1116, %v1108
    %v1405 = vpack.c.b16 %v1117, %v1109
    %v1406 = vpack.c.b16 %v1118, %v1110
    %v1407 = vpack.c.b16 %v1127, %v1119
    %v1408 = vpack.c.b16 %v1128, %v1120
    %v1409 = vpack.c.b16 %v1129, %v1121
    %v1410 = vpack.c.b16 %v1130, %v1122
    %v1411 = vpack.c.b16 %v1131, %v1123
    %v1412 = vpack.c.b16 %v1132, %v1124
    %v1413 = vpack.c.b16 %v1133, %v1125
    %v1414 = vpack.c.b16 %v1134, %v1126
    %v1415 = vpack.c.b16 %v1143, %v1135
    %v1416 = vpack.c.b16 %v1144, %v1136
    %v1417 = vpack.c.b16 %v1145, %v1137
    %v1418 = vpack.c.b16 %v1146, %v1138
    %v1419 = vpack.c.b16 %v1147, %v1139
    %v1420 = vpack.c.b16 %v1148, %v1140
    %v1421 = vpack.c.b16 %v1149, %v1141
    %v1422 = vpack.c.b16 %v1150, %v1142
    %v1423 = vpack.c.b16 %v1159, %v1151
    %v1424 = vpack.c.b16 %v1160, %v1152
    %v1425 = vpack.c.b16 %v1161, %v1153
    %v1426 = vpack.c.b16 %v1162, %v1154
    %v1427 = vpack.c.b16 %v1163, %v1155
    %v1428 = vpack.c.b16 %v1164, %v1156
    %v1429 = vpack.c.b16 %v1165, %v1157
    %v1430 = vpack.c.b16 %v1166, %v1158
    %v1431 = vpack.c.b16 %v1175, %v1167
    %v1432 = vpack.c.b16 %v1176, %v1168
    %v1433 = vpack.c.b16 %v1177, %v1169
    %v1434 = vpack.c.b16 %v1178, %v1170
    %v1435 = vpack.c.b16 %v1179, %v1171
    %v1436 = vpack.c.b16 %v1180, %v1172
    %v1437 = vpack.c.b16 %v1181, %v1173
    %v1438 = vpack.c.b16 %v1182, %v1174
    %1695 = vmatpush.bf16.msra.mxu0 %v1239
    %1696 = vmatpush.bf16.msra.mxu0 %v1231
    %1697 = vmatpush.bf16.msra.mxu0 %v1223
    %1698 = vmatpush.bf16.msra.mxu0 %v1215
    %1699 = vmatpush.bf16.msra.mxu0 %v1207
    %1700 = vmatpush.bf16.msra.mxu0 %v1199
    %1701 = vmatpush.bf16.msra.mxu0 %v1191
    %1702 = vmatpush.bf16.msra.mxu0 %v1183
    %1703 = vmatmul.bf16.gmra.mxu0 %v407
    %v1704 = vpop.f32.mrf.mxu0
    %v1705 = vadd.f32 %v379, %v1704
    %v1706 = vpop.f32.mrf.mxu0
    %v1707 = vadd.f32 %v379, %v1706
    %1708 = vdwg.mxu0
    %1709 = vmatpush.bf16.msra.mxu0 %v1303
    %1710 = vmatpush.bf16.msra.mxu0 %v1295
    %1711 = vmatpush.bf16.msra.mxu0 %v1287
    %1712 = vmatpush.bf16.msra.mxu0 %v1279
    %1713 = vmatpush.bf16.msra.mxu0 %v1271
    %1714 = vmatpush.bf16.msra.mxu0 %v1263
    %1715 = vmatpush.bf16.msra.mxu0 %v1255
    %1716 = vmatpush.bf16.msra.mxu0 %v1247
    %1717 = vmatmul.bf16.gmra.mxu0 %v408
    %v1718 = vpop.f32.mrf.mxu0
    %v1719 = vadd.f32 %v1705, %v1718
    %v1720 = vpop.f32.mrf.mxu0
    %v1721 = vadd.f32 %v1707, %v1720
    %1722 = vdwg.mxu0
    %1723 = vmatpush.bf16.msra.mxu0 %v1367
    %1724 = vmatpush.bf16.msra.mxu0 %v1359
    %1725 = vmatpush.bf16.msra.mxu0 %v1351
    %1726 = vmatpush.bf16.msra.mxu0 %v1343
    %1727 = vmatpush.bf16.msra.mxu0 %v1335
    %1728 = vmatpush.bf16.msra.mxu0 %v1327
    %1729 = vmatpush.bf16.msra.mxu0 %v1319
    %1730 = vmatpush.bf16.msra.mxu0 %v1311
    %1731 = vmatmul.bf16.gmra.mxu0 %v409
    %v1732 = vpop.f32.mrf.mxu0
    %v1733 = vadd.f32 %v1719, %v1732
    %v1734 = vpop.f32.mrf.mxu0
    %v1735 = vadd.f32 %v1721, %v1734
    %1736 = vdwg.mxu0
    %1737 = vmatpush.bf16.msra.mxu0 %v1431
    %1738 = vmatpush.bf16.msra.mxu0 %v1423
    %1739 = vmatpush.bf16.msra.mxu0 %v1415
    %1740 = vmatpush.bf16.msra.mxu0 %v1407
    %1741 = vmatpush.bf16.msra.mxu0 %v1399
    %1742 = vmatpush.bf16.msra.mxu0 %v1391
    %1743 = vmatpush.bf16.msra.mxu0 %v1383
    %1744 = vmatpush.bf16.msra.mxu0 %v1375
    %1745 = vmatmul.bf16.gmra.mxu0 %v410
    %v1746 = vpop.f32.mrf.mxu0
    %v1747 = vadd.f32 %v1733, %v1746
    %v1748 = vpop.f32.mrf.mxu0
    %v1749 = vadd.f32 %v1735, %v1748
    %1750 = vdwg.mxu0
    %1751 = vmatpush.bf16.msra.mxu0 %v1240
    %1752 = vmatpush.bf16.msra.mxu0 %v1232
    %1753 = vmatpush.bf16.msra.mxu0 %v1224
    %1754 = vmatpush.bf16.msra.mxu0 %v1216
    %1755 = vmatpush.bf16.msra.mxu0 %v1208
    %1756 = vmatpush.bf16.msra.mxu0 %v1200
    %1757 = vmatpush.bf16.msra.mxu0 %v1192
    %1758 = vmatpush.bf16.msra.mxu0 %v1184
    %1759 = vmatmul.bf16.gmra.mxu0 %v407
    %v1760 = vpop.f32.mrf.mxu0
    %v1761 = vadd.f32 %v380, %v1760
    %v1762 = vpop.f32.mrf.mxu0
    %v1763 = vadd.f32 %v380, %v1762
    %1764 = vdwg.mxu0
    %1765 = vmatpush.bf16.msra.mxu0 %v1304
    %1766 = vmatpush.bf16.msra.mxu0 %v1296
    %1767 = vmatpush.bf16.msra.mxu0 %v1288
    %1768 = vmatpush.bf16.msra.mxu0 %v1280
    %1769 = vmatpush.bf16.msra.mxu0 %v1272
    %1770 = vmatpush.bf16.msra.mxu0 %v1264
    %1771 = vmatpush.bf16.msra.mxu0 %v1256
    %1772 = vmatpush.bf16.msra.mxu0 %v1248
    %1773 = vmatmul.bf16.gmra.mxu0 %v408
    %v1774 = vpop.f32.mrf.mxu0
    %v1775 = vadd.f32 %v1761, %v1774
    %v1776 = vpop.f32.mrf.mxu0
    %v1777 = vadd.f32 %v1763, %v1776
    %1778 = vdwg.mxu0
    %1779 = vmatpush.bf16.msra.mxu0 %v1368
    %1780 = vmatpush.bf16.msra.mxu0 %v1360
    %1781 = vmatpush.bf16.msra.mxu0 %v1352
    %1782 = vmatpush.bf16.msra.mxu0 %v1344
    %1783 = vmatpush.bf16.msra.mxu0 %v1336
    %1784 = vmatpush.bf16.msra.mxu0 %v1328
    %1785 = vmatpush.bf16.msra.mxu0 %v1320
    %1786 = vmatpush.bf16.msra.mxu0 %v1312
    %1787 = vmatmul.bf16.gmra.mxu0 %v409
    %v1788 = vpop.f32.mrf.mxu0
    %v1789 = vadd.f32 %v1775, %v1788
    %v1790 = vpop.f32.mrf.mxu0
    %v1791 = vadd.f32 %v1777, %v1790
    %1792 = vdwg.mxu0
    %1793 = vmatpush.bf16.msra.mxu0 %v1432
    %1794 = vmatpush.bf16.msra.mxu0 %v1424
    %1795 = vmatpush.bf16.msra.mxu0 %v1416
    %1796 = vmatpush.bf16.msra.mxu0 %v1408
    %1797 = vmatpush.bf16.msra.mxu0 %v1400
    %1798 = vmatpush.bf16.msra.mxu0 %v1392
    %1799 = vmatpush.bf16.msra.mxu0 %v1384
    %1800 = vmatpush.bf16.msra.mxu0 %v1376
    %1801 = vmatmul.bf16.gmra.mxu0 %v410
    %v1802 = vpop.f32.mrf.mxu0
    %v1803 = vadd.f32 %v1789, %v1802
    %v1804 = vpop.f32.mrf.mxu0
    %v1805 = vadd.f32 %v1791, %v1804
    %1806 = vdwg.mxu0
    %1807 = vmatpush.bf16.msra.mxu0 %v1241
    %1808 = vmatpush.bf16.msra.mxu0 %v1233
    %1809 = vmatpush.bf16.msra.mxu0 %v1225
    %1810 = vmatpush.bf16.msra.mxu0 %v1217
    %1811 = vmatpush.bf16.msra.mxu0 %v1209
    %1812 = vmatpush.bf16.msra.mxu0 %v1201
    %1813 = vmatpush.bf16.msra.mxu0 %v1193
    %1814 = vmatpush.bf16.msra.mxu0 %v1185
    %1815 = vmatmul.bf16.gmra.mxu0 %v407
    %v1816 = vpop.f32.mrf.mxu0
    %v1817 = vadd.f32 %v381, %v1816
    %v1818 = vpop.f32.mrf.mxu0
    %v1819 = vadd.f32 %v381, %v1818
    %1820 = vdwg.mxu0
    %1821 = vmatpush.bf16.msra.mxu0 %v1305
    %1822 = vmatpush.bf16.msra.mxu0 %v1297
    %1823 = vmatpush.bf16.msra.mxu0 %v1289
    %1824 = vmatpush.bf16.msra.mxu0 %v1281
    %1825 = vmatpush.bf16.msra.mxu0 %v1273
    %1826 = vmatpush.bf16.msra.mxu0 %v1265
    %1827 = vmatpush.bf16.msra.mxu0 %v1257
    %1828 = vmatpush.bf16.msra.mxu0 %v1249
    %1829 = vmatmul.bf16.gmra.mxu0 %v408
    %v1830 = vpop.f32.mrf.mxu0
    %v1831 = vadd.f32 %v1817, %v1830
    %v1832 = vpop.f32.mrf.mxu0
    %v1833 = vadd.f32 %v1819, %v1832
    %1834 = vdwg.mxu0
    %1835 = vmatpush.bf16.msra.mxu0 %v1369
    %1836 = vmatpush.bf16.msra.mxu0 %v1361
    %1837 = vmatpush.bf16.msra.mxu0 %v1353
    %1838 = vmatpush.bf16.msra.mxu0 %v1345
    %1839 = vmatpush.bf16.msra.mxu0 %v1337
    %1840 = vmatpush.bf16.msra.mxu0 %v1329
    %1841 = vmatpush.bf16.msra.mxu0 %v1321
    %1842 = vmatpush.bf16.msra.mxu0 %v1313
    %1843 = vmatmul.bf16.gmra.mxu0 %v409
    %v1844 = vpop.f32.mrf.mxu0
    %v1845 = vadd.f32 %v1831, %v1844
    %v1846 = vpop.f32.mrf.mxu0
    %v1847 = vadd.f32 %v1833, %v1846
    %1848 = vdwg.mxu0
    %1849 = vmatpush.bf16.msra.mxu0 %v1433
    %1850 = vmatpush.bf16.msra.mxu0 %v1425
    %1851 = vmatpush.bf16.msra.mxu0 %v1417
    %1852 = vmatpush.bf16.msra.mxu0 %v1409
    %1853 = vmatpush.bf16.msra.mxu0 %v1401
    %1854 = vmatpush.bf16.msra.mxu0 %v1393
    %1855 = vmatpush.bf16.msra.mxu0 %v1385
    %1856 = vmatpush.bf16.msra.mxu0 %v1377
    %1857 = vmatmul.bf16.gmra.mxu0 %v410
    %v1858 = vpop.f32.mrf.mxu0
    %v1859 = vadd.f32 %v1845, %v1858
    %v1860 = vpop.f32.mrf.mxu0
    %v1861 = vadd.f32 %v1847, %v1860
    %1862 = vdwg.mxu0
    %1863 = vmatpush.bf16.msra.mxu0 %v1242
    %1864 = vmatpush.bf16.msra.mxu0 %v1234
    %1865 = vmatpush.bf16.msra.mxu0 %v1226
    %1866 = vmatpush.bf16.msra.mxu0 %v1218
    %1867 = vmatpush.bf16.msra.mxu0 %v1210
    %1868 = vmatpush.bf16.msra.mxu0 %v1202
    %1869 = vmatpush.bf16.msra.mxu0 %v1194
    %1870 = vmatpush.bf16.msra.mxu0 %v1186
    %1871 = vmatmul.bf16.gmra.mxu0 %v407
    %v1872 = vpop.f32.mrf.mxu0
    %v1873 = vadd.f32 %v382, %v1872
    %v1874 = vpop.f32.mrf.mxu0
    %v1875 = vadd.f32 %v382, %v1874
    %1876 = vdwg.mxu0
    %1877 = vmatpush.bf16.msra.mxu0 %v1306
    %1878 = vmatpush.bf16.msra.mxu0 %v1298
    %1879 = vmatpush.bf16.msra.mxu0 %v1290
    %1880 = vmatpush.bf16.msra.mxu0 %v1282
    %1881 = vmatpush.bf16.msra.mxu0 %v1274
    %1882 = vmatpush.bf16.msra.mxu0 %v1266
    %1883 = vmatpush.bf16.msra.mxu0 %v1258
    %1884 = vmatpush.bf16.msra.mxu0 %v1250
    %1885 = vmatmul.bf16.gmra.mxu0 %v408
    %v1886 = vpop.f32.mrf.mxu0
    %v1887 = vadd.f32 %v1873, %v1886
    %v1888 = vpop.f32.mrf.mxu0
    %v1889 = vadd.f32 %v1875, %v1888
    %1890 = vdwg.mxu0
    %1891 = vmatpush.bf16.msra.mxu0 %v1370
    %1892 = vmatpush.bf16.msra.mxu0 %v1362
    %1893 = vmatpush.bf16.msra.mxu0 %v1354
    %1894 = vmatpush.bf16.msra.mxu0 %v1346
    %1895 = vmatpush.bf16.msra.mxu0 %v1338
    %1896 = vmatpush.bf16.msra.mxu0 %v1330
    %1897 = vmatpush.bf16.msra.mxu0 %v1322
    %1898 = vmatpush.bf16.msra.mxu0 %v1314
    %1899 = vmatmul.bf16.gmra.mxu0 %v409
    %v1900 = vpop.f32.mrf.mxu0
    %v1901 = vadd.f32 %v1887, %v1900
    %v1902 = vpop.f32.mrf.mxu0
    %v1903 = vadd.f32 %v1889, %v1902
    %1904 = vdwg.mxu0
    %1905 = vmatpush.bf16.msra.mxu0 %v1434
    %1906 = vmatpush.bf16.msra.mxu0 %v1426
    %1907 = vmatpush.bf16.msra.mxu0 %v1418
    %1908 = vmatpush.bf16.msra.mxu0 %v1410
    %1909 = vmatpush.bf16.msra.mxu0 %v1402
    %1910 = vmatpush.bf16.msra.mxu0 %v1394
    %1911 = vmatpush.bf16.msra.mxu0 %v1386
    %1912 = vmatpush.bf16.msra.mxu0 %v1378
    %1913 = vmatmul.bf16.gmra.mxu0 %v410
    %v1914 = vpop.f32.mrf.mxu0
    %v1915 = vadd.f32 %v1901, %v1914
    %v1916 = vpop.f32.mrf.mxu0
    %v1917 = vadd.f32 %v1903, %v1916
    %1918 = vdwg.mxu0
    %1919 = vmatpush.bf16.msra.mxu0 %v1243
    %1920 = vmatpush.bf16.msra.mxu0 %v1235
    %1921 = vmatpush.bf16.msra.mxu0 %v1227
    %1922 = vmatpush.bf16.msra.mxu0 %v1219
    %1923 = vmatpush.bf16.msra.mxu0 %v1211
    %1924 = vmatpush.bf16.msra.mxu0 %v1203
    %1925 = vmatpush.bf16.msra.mxu0 %v1195
    %1926 = vmatpush.bf16.msra.mxu0 %v1187
    %1927 = vmatmul.bf16.gmra.mxu0 %v407
    %v1928 = vpop.f32.mrf.mxu0
    %v1929 = vadd.f32 %v383, %v1928
    %v1930 = vpop.f32.mrf.mxu0
    %v1931 = vadd.f32 %v383, %v1930
    %1932 = vdwg.mxu0
    %1933 = vmatpush.bf16.msra.mxu0 %v1307
    %1934 = vmatpush.bf16.msra.mxu0 %v1299
    %1935 = vmatpush.bf16.msra.mxu0 %v1291
    %1936 = vmatpush.bf16.msra.mxu0 %v1283
    %1937 = vmatpush.bf16.msra.mxu0 %v1275
    %1938 = vmatpush.bf16.msra.mxu0 %v1267
    %1939 = vmatpush.bf16.msra.mxu0 %v1259
    %1940 = vmatpush.bf16.msra.mxu0 %v1251
    %1941 = vmatmul.bf16.gmra.mxu0 %v408
    %v1942 = vpop.f32.mrf.mxu0
    %v1943 = vadd.f32 %v1929, %v1942
    %v1944 = vpop.f32.mrf.mxu0
    %v1945 = vadd.f32 %v1931, %v1944
    %1946 = vdwg.mxu0
    %1947 = vmatpush.bf16.msra.mxu0 %v1371
    %1948 = vmatpush.bf16.msra.mxu0 %v1363
    %1949 = vmatpush.bf16.msra.mxu0 %v1355
    %1950 = vmatpush.bf16.msra.mxu0 %v1347
    %1951 = vmatpush.bf16.msra.mxu0 %v1339
    %1952 = vmatpush.bf16.msra.mxu0 %v1331
    %1953 = vmatpush.bf16.msra.mxu0 %v1323
    %1954 = vmatpush.bf16.msra.mxu0 %v1315
    %1955 = vmatmul.bf16.gmra.mxu0 %v409
    %v1956 = vpop.f32.mrf.mxu0
    %v1957 = vadd.f32 %v1943, %v1956
    %v1958 = vpop.f32.mrf.mxu0
    %v1959 = vadd.f32 %v1945, %v1958
    %1960 = vdwg.mxu0
    %1961 = vmatpush.bf16.msra.mxu0 %v1435
    %1962 = vmatpush.bf16.msra.mxu0 %v1427
    %1963 = vmatpush.bf16.msra.mxu0 %v1419
    %1964 = vmatpush.bf16.msra.mxu0 %v1411
    %1965 = vmatpush.bf16.msra.mxu0 %v1403
    %1966 = vmatpush.bf16.msra.mxu0 %v1395
    %1967 = vmatpush.bf16.msra.mxu0 %v1387
    %1968 = vmatpush.bf16.msra.mxu0 %v1379
    %1969 = vmatmul.bf16.gmra.mxu0 %v410
    %v1970 = vpop.f32.mrf.mxu0
    %v1971 = vadd.f32 %v1957, %v1970
    %v1972 = vpop.f32.mrf.mxu0
    %v1973 = vadd.f32 %v1959, %v1972
    %1974 = vdwg.mxu0
    %1975 = vmatpush.bf16.msra.mxu0 %v1244
    %1976 = vmatpush.bf16.msra.mxu0 %v1236
    %1977 = vmatpush.bf16.msra.mxu0 %v1228
    %1978 = vmatpush.bf16.msra.mxu0 %v1220
    %1979 = vmatpush.bf16.msra.mxu0 %v1212
    %1980 = vmatpush.bf16.msra.mxu0 %v1204
    %1981 = vmatpush.bf16.msra.mxu0 %v1196
    %1982 = vmatpush.bf16.msra.mxu0 %v1188
    %1983 = vmatmul.bf16.gmra.mxu0 %v407
    %v1984 = vpop.f32.mrf.mxu0
    %v1985 = vadd.f32 %v384, %v1984
    %v1986 = vpop.f32.mrf.mxu0
    %v1987 = vadd.f32 %v384, %v1986
    %1988 = vdwg.mxu0
    %1989 = vmatpush.bf16.msra.mxu0 %v1308
    %1990 = vmatpush.bf16.msra.mxu0 %v1300
    %1991 = vmatpush.bf16.msra.mxu0 %v1292
    %1992 = vmatpush.bf16.msra.mxu0 %v1284
    %1993 = vmatpush.bf16.msra.mxu0 %v1276
    %1994 = vmatpush.bf16.msra.mxu0 %v1268
    %1995 = vmatpush.bf16.msra.mxu0 %v1260
    %1996 = vmatpush.bf16.msra.mxu0 %v1252
    %1997 = vmatmul.bf16.gmra.mxu0 %v408
    %v1998 = vpop.f32.mrf.mxu0
    %v1999 = vadd.f32 %v1985, %v1998
    %v2000 = vpop.f32.mrf.mxu0
    %v2001 = vadd.f32 %v1987, %v2000
    %2002 = vdwg.mxu0
    %2003 = vmatpush.bf16.msra.mxu0 %v1372
    %2004 = vmatpush.bf16.msra.mxu0 %v1364
    %2005 = vmatpush.bf16.msra.mxu0 %v1356
    %2006 = vmatpush.bf16.msra.mxu0 %v1348
    %2007 = vmatpush.bf16.msra.mxu0 %v1340
    %2008 = vmatpush.bf16.msra.mxu0 %v1332
    %2009 = vmatpush.bf16.msra.mxu0 %v1324
    %2010 = vmatpush.bf16.msra.mxu0 %v1316
    %2011 = vmatmul.bf16.gmra.mxu0 %v409
    %v2012 = vpop.f32.mrf.mxu0
    %v2013 = vadd.f32 %v1999, %v2012
    %v2014 = vpop.f32.mrf.mxu0
    %v2015 = vadd.f32 %v2001, %v2014
    %2016 = vdwg.mxu0
    %2017 = vmatpush.bf16.msra.mxu0 %v1436
    %2018 = vmatpush.bf16.msra.mxu0 %v1428
    %2019 = vmatpush.bf16.msra.mxu0 %v1420
    %2020 = vmatpush.bf16.msra.mxu0 %v1412
    %2021 = vmatpush.bf16.msra.mxu0 %v1404
    %2022 = vmatpush.bf16.msra.mxu0 %v1396
    %2023 = vmatpush.bf16.msra.mxu0 %v1388
    %2024 = vmatpush.bf16.msra.mxu0 %v1380
    %2025 = vmatmul.bf16.gmra.mxu0 %v410
    %v2026 = vpop.f32.mrf.mxu0
    %v2027 = vadd.f32 %v2013, %v2026
    %v2028 = vpop.f32.mrf.mxu0
    %v2029 = vadd.f32 %v2015, %v2028
    %2030 = vdwg.mxu0
    %2031 = vmatpush.bf16.msra.mxu0 %v1245
    %2032 = vmatpush.bf16.msra.mxu0 %v1237
    %2033 = vmatpush.bf16.msra.mxu0 %v1229
    %2034 = vmatpush.bf16.msra.mxu0 %v1221
    %2035 = vmatpush.bf16.msra.mxu0 %v1213
    %2036 = vmatpush.bf16.msra.mxu0 %v1205
    %2037 = vmatpush.bf16.msra.mxu0 %v1197
    %2038 = vmatpush.bf16.msra.mxu0 %v1189
    %2039 = vmatmul.bf16.gmra.mxu0 %v407
    %v2040 = vpop.f32.mrf.mxu0
    %v2041 = vadd.f32 %v385, %v2040
    %v2042 = vpop.f32.mrf.mxu0
    %v2043 = vadd.f32 %v385, %v2042
    %2044 = vdwg.mxu0
    %2045 = vmatpush.bf16.msra.mxu0 %v1309
    %2046 = vmatpush.bf16.msra.mxu0 %v1301
    %2047 = vmatpush.bf16.msra.mxu0 %v1293
    %2048 = vmatpush.bf16.msra.mxu0 %v1285
    %2049 = vmatpush.bf16.msra.mxu0 %v1277
    %2050 = vmatpush.bf16.msra.mxu0 %v1269
    %2051 = vmatpush.bf16.msra.mxu0 %v1261
    %2052 = vmatpush.bf16.msra.mxu0 %v1253
    %2053 = vmatmul.bf16.gmra.mxu0 %v408
    %v2054 = vpop.f32.mrf.mxu0
    %v2055 = vadd.f32 %v2041, %v2054
    %v2056 = vpop.f32.mrf.mxu0
    %v2057 = vadd.f32 %v2043, %v2056
    %2058 = vdwg.mxu0
    %2059 = vmatpush.bf16.msra.mxu0 %v1373
    %2060 = vmatpush.bf16.msra.mxu0 %v1365
    %2061 = vmatpush.bf16.msra.mxu0 %v1357
    %2062 = vmatpush.bf16.msra.mxu0 %v1349
    %2063 = vmatpush.bf16.msra.mxu0 %v1341
    %2064 = vmatpush.bf16.msra.mxu0 %v1333
    %2065 = vmatpush.bf16.msra.mxu0 %v1325
    %2066 = vmatpush.bf16.msra.mxu0 %v1317
    %2067 = vmatmul.bf16.gmra.mxu0 %v409
    %v2068 = vpop.f32.mrf.mxu0
    %v2069 = vadd.f32 %v2055, %v2068
    %v2070 = vpop.f32.mrf.mxu0
    %v2071 = vadd.f32 %v2057, %v2070
    %2072 = vdwg.mxu0
    %2073 = vmatpush.bf16.msra.mxu0 %v1437
    %2074 = vmatpush.bf16.msra.mxu0 %v1429
    %2075 = vmatpush.bf16.msra.mxu0 %v1421
    %2076 = vmatpush.bf16.msra.mxu0 %v1413
    %2077 = vmatpush.bf16.msra.mxu0 %v1405
    %2078 = vmatpush.bf16.msra.mxu0 %v1397
    %2079 = vmatpush.bf16.msra.mxu0 %v1389
    %2080 = vmatpush.bf16.msra.mxu0 %v1381
    %2081 = vmatmul.bf16.gmra.mxu0 %v410
    %v2082 = vpop.f32.mrf.mxu0
    %v2083 = vadd.f32 %v2069, %v2082
    %v2084 = vpop.f32.mrf.mxu0
    %v2085 = vadd.f32 %v2071, %v2084
    %2086 = vdwg.mxu0
    %2087 = vmatpush.bf16.msra.mxu0 %v1246
    %2088 = vmatpush.bf16.msra.mxu0 %v1238
    %2089 = vmatpush.bf16.msra.mxu0 %v1230
    %2090 = vmatpush.bf16.msra.mxu0 %v1222
    %2091 = vmatpush.bf16.msra.mxu0 %v1214
    %2092 = vmatpush.bf16.msra.mxu0 %v1206
    %2093 = vmatpush.bf16.msra.mxu0 %v1198
    %2094 = vmatpush.bf16.msra.mxu0 %v1190
    %2095 = vmatmul.bf16.gmra.mxu0 %v407
    %v2096 = vpop.f32.mrf.mxu0
    %v2097 = vadd.f32 %v386, %v2096
    %v2098 = vpop.f32.mrf.mxu0
    %v2099 = vadd.f32 %v386, %v2098
    %2100 = vdwg.mxu0
    %2101 = vmatpush.bf16.msra.mxu0 %v1310
    %2102 = vmatpush.bf16.msra.mxu0 %v1302
    %2103 = vmatpush.bf16.msra.mxu0 %v1294
    %2104 = vmatpush.bf16.msra.mxu0 %v1286
    %2105 = vmatpush.bf16.msra.mxu0 %v1278
    %2106 = vmatpush.bf16.msra.mxu0 %v1270
    %2107 = vmatpush.bf16.msra.mxu0 %v1262
    %2108 = vmatpush.bf16.msra.mxu0 %v1254
    %2109 = vmatmul.bf16.gmra.mxu0 %v408
    %v2110 = vpop.f32.mrf.mxu0
    %v2111 = vadd.f32 %v2097, %v2110
    %v2112 = vpop.f32.mrf.mxu0
    %v2113 = vadd.f32 %v2099, %v2112
    %2114 = vdwg.mxu0
    %2115 = vmatpush.bf16.msra.mxu0 %v1374
    %2116 = vmatpush.bf16.msra.mxu0 %v1366
    %2117 = vmatpush.bf16.msra.mxu0 %v1358
    %2118 = vmatpush.bf16.msra.mxu0 %v1350
    %2119 = vmatpush.bf16.msra.mxu0 %v1342
    %2120 = vmatpush.bf16.msra.mxu0 %v1334
    %2121 = vmatpush.bf16.msra.mxu0 %v1326
    %2122 = vmatpush.bf16.msra.mxu0 %v1318
    %2123 = vmatmul.bf16.gmra.mxu0 %v409
    %v2124 = vpop.f32.mrf.mxu0
    %v2125 = vadd.f32 %v2111, %v2124
    %v2126 = vpop.f32.mrf.mxu0
    %v2127 = vadd.f32 %v2113, %v2126
    %2128 = vdwg.mxu0
    %2129 = vmatpush.bf16.msra.mxu0 %v1438
    %2130 = vmatpush.bf16.msra.mxu0 %v1430
    %2131 = vmatpush.bf16.msra.mxu0 %v1422
    %2132 = vmatpush.bf16.msra.mxu0 %v1414
    %2133 = vmatpush.bf16.msra.mxu0 %v1406
    %2134 = vmatpush.bf16.msra.mxu0 %v1398
    %2135 = vmatpush.bf16.msra.mxu0 %v1390
    %2136 = vmatpush.bf16.msra.mxu0 %v1382
    %2137 = vmatmul.bf16.gmra.mxu0 %v410
    %v2138 = vpop.f32.mrf.mxu0
    %v2139 = vadd.f32 %v2125, %v2138
    %v2140 = vpop.f32.mrf.mxu0
    %v2141 = vadd.f32 %v2127, %v2140
    %2142 = vdwg.mxu0
    %v2143 = vmax.f32 %v1747, 0.0
    %v2144 = vmax.f32 %v1803, 0.0
    %v2145 = vmax.f32 %v1859, 0.0
    %v2146 = vmax.f32 %v1915, 0.0
    %v2147 = vmax.f32 %v1971, 0.0
    %v2148 = vmax.f32 %v2027, 0.0
    %v2149 = vmax.f32 %v2083, 0.0
    %v2150 = vmax.f32 %v2139, 0.0
    %v2151 = vmax.f32 %v1749, 0.0
    %v2152 = vmax.f32 %v1805, 0.0
    %v2153 = vmax.f32 %v1861, 0.0
    %v2154 = vmax.f32 %v1917, 0.0
    %v2155 = vmax.f32 %v1973, 0.0
    %v2156 = vmax.f32 %v2029, 0.0
    %v2157 = vmax.f32 %v2085, 0.0
    %v2158 = vmax.f32 %v2141, 0.0
    %v2159 = vpack.c.bf16 %v2151, %v2143
    %v2160 = vpack.c.bf16 %v2152, %v2144
    %v2161 = vpack.c.bf16 %v2153, %v2145
    %v2162 = vpack.c.bf16 %v2154, %v2146
    %v2163 = vpack.c.bf16 %v2155, %v2147
    %v2164 = vpack.c.bf16 %v2156, %v2148
    %v2165 = vpack.c.bf16 %v2157, %v2149
    %v2166 = vpack.c.bf16 %v2158, %v2150
    %v2167 = vld [vmem:[#allocation8] sm:$0xff]
    %v2168 = vld [vmem:[#allocation8 + $0x8] sm:$0xff]
    %v2169 = vld [vmem:[#allocation8 + $0x10] sm:$0xff]
    %v2170 = vld [vmem:[#allocation8 + $0x18] sm:$0xff]
    %v2171 = vld [vmem:[#allocation8 + $0x20] sm:$0xff]
    %v2172 = vld [vmem:[#allocation8 + $0x28] sm:$0xff]
    %v2173 = vld [vmem:[#allocation8 + $0x30] sm:$0xff]
    %v2174 = vld [vmem:[#allocation8 + $0x38] sm:$0xff]
    %v2175 = vld [vmem:[#allocation8 + $0x40] sm:$0xff]
    %v2176 = vld [vmem:[#allocation8 + $0x48] sm:$0xff]
    %v2177 = vld [vmem:[#allocation8 + $0x50] sm:$0xff]
    %v2178 = vld [vmem:[#allocation8 + $0x58] sm:$0xff]
    %v2179 = vld [vmem:[#allocation8 + $0x60] sm:$0xff]
    %v2180 = vld [vmem:[#allocation8 + $0x68] sm:$0xff]
    %v2181 = vld [vmem:[#allocation8 + $0x70] sm:$0xff]
    %v2182 = vld [vmem:[#allocation8 + $0x78] sm:$0xff]
    %v2183 = vld [vmem:[#allocation8 + $0x80] sm:$0xff]
    %v2184 = vld [vmem:[#allocation8 + $0x88] sm:$0xff]
    %v2185 = vld [vmem:[#allocation8 + $0x90] sm:$0xff]
    %v2186 = vld [vmem:[#allocation8 + $0x98] sm:$0xff]
    %v2187 = vld [vmem:[#allocation8 + $0xa0] sm:$0xff]
    %v2188 = vld [vmem:[#allocation8 + $0xa8] sm:$0xff]
    %v2189 = vld [vmem:[#allocation8 + $0xb0] sm:$0xff]
    %v2190 = vld [vmem:[#allocation8 + $0xb8] sm:$0xff]
    %v2191 = vld [vmem:[#allocation8 + $0xc0] sm:$0xff]
    %v2192 = vld [vmem:[#allocation8 + $0xc8] sm:$0xff]
    %v2193 = vld [vmem:[#allocation8 + $0xd0] sm:$0xff]
    %v2194 = vld [vmem:[#allocation8 + $0xd8] sm:$0xff]
    %v2195 = vld [vmem:[#allocation8 + $0xe0] sm:$0xff]
    %v2196 = vld [vmem:[#allocation8 + $0xe8] sm:$0xff]
    %v2197 = vld [vmem:[#allocation8 + $0xf0] sm:$0xff]
    %v2198 = vld [vmem:[#allocation8 + $0xf8] sm:$0xff]
    %v2199 = vld [vmem:[#allocation8 + $0x100] sm:$0xff]
    %v2200 = vld [vmem:[#allocation8 + $0x108] sm:$0xff]
    %v2201 = vld [vmem:[#allocation8 + $0x110] sm:$0xff]
    %v2202 = vld [vmem:[#allocation8 + $0x118] sm:$0xff]
    %v2203 = vld [vmem:[#allocation8 + $0x120] sm:$0xff]
    %v2204 = vld [vmem:[#allocation8 + $0x128] sm:$0xff]
    %v2205 = vld [vmem:[#allocation8 + $0x130] sm:$0xff]
    %v2206 = vld [vmem:[#allocation8 + $0x138] sm:$0xff]
    %v2207 = vld [vmem:[#allocation8 + $0x140] sm:$0xff]
    %v2208 = vld [vmem:[#allocation8 + $0x148] sm:$0xff]
    %v2209 = vld [vmem:[#allocation8 + $0x150] sm:$0xff]
    %v2210 = vld [vmem:[#allocation8 + $0x158] sm:$0xff]
    %v2211 = vld [vmem:[#allocation8 + $0x160] sm:$0xff]
    %v2212 = vld [vmem:[#allocation8 + $0x168] sm:$0xff]
    %v2213 = vld [vmem:[#allocation8 + $0x170] sm:$0xff]
    %v2214 = vld [vmem:[#allocation8 + $0x178] sm:$0xff]
    %v2215 = vld [vmem:[#allocation8 + $0x180] sm:$0xff]
    %v2216 = vld [vmem:[#allocation8 + $0x188] sm:$0xff]
    %v2217 = vld [vmem:[#allocation8 + $0x190] sm:$0xff]
    %v2218 = vld [vmem:[#allocation8 + $0x198] sm:$0xff]
    %v2219 = vld [vmem:[#allocation8 + $0x1a0] sm:$0xff]
    %v2220 = vld [vmem:[#allocation8 + $0x1a8] sm:$0xff]
    %v2221 = vld [vmem:[#allocation8 + $0x1b0] sm:$0xff]
    %v2222 = vld [vmem:[#allocation8 + $0x1b8] sm:$0xff]
    %v2223 = vld [vmem:[#allocation8 + $0x1c0] sm:$0xff]
    %v2224 = vld [vmem:[#allocation8 + $0x1c8] sm:$0xff]
    %v2225 = vld [vmem:[#allocation8 + $0x1d0] sm:$0xff]
    %v2226 = vld [vmem:[#allocation8 + $0x1d8] sm:$0xff]
    %v2227 = vld [vmem:[#allocation8 + $0x1e0] sm:$0xff]
    %v2228 = vld [vmem:[#allocation8 + $0x1e8] sm:$0xff]
    %v2229 = vld [vmem:[#allocation8 + $0x1f0] sm:$0xff]
    %v2230 = vld [vmem:[#allocation8 + $0x1f8] sm:$0xff]
    %v2231 = vld [vmem:[#allocation8 + $0x200] sm:$0xff]
    %v2232 = vld [vmem:[#allocation8 + $0x208] sm:$0xff]
    %v2233 = vld [vmem:[#allocation8 + $0x210] sm:$0xff]
    %v2234 = vld [vmem:[#allocation8 + $0x218] sm:$0xff]
    %v2235 = vld [vmem:[#allocation8 + $0x220] sm:$0xff]
    %v2236 = vld [vmem:[#allocation8 + $0x228] sm:$0xff]
    %v2237 = vld [vmem:[#allocation8 + $0x230] sm:$0xff]
    %v2238 = vld [vmem:[#allocation8 + $0x238] sm:$0xff]
    %v2239 = vld [vmem:[#allocation8 + $0x240] sm:$0xff]
    %v2240 = vld [vmem:[#allocation8 + $0x248] sm:$0xff]
    %v2241 = vld [vmem:[#allocation8 + $0x250] sm:$0xff]
    %v2242 = vld [vmem:[#allocation8 + $0x258] sm:$0xff]
    %v2243 = vld [vmem:[#allocation8 + $0x260] sm:$0xff]
    %v2244 = vld [vmem:[#allocation8 + $0x268] sm:$0xff]
    %v2245 = vld [vmem:[#allocation8 + $0x270] sm:$0xff]
    %v2246 = vld [vmem:[#allocation8 + $0x278] sm:$0xff]
    %v2247 = vld [vmem:[#allocation8 + $0x280] sm:$0xff]
    %v2248 = vld [vmem:[#allocation8 + $0x288] sm:$0xff]
    %v2249 = vld [vmem:[#allocation8 + $0x290] sm:$0xff]
    %v2250 = vld [vmem:[#allocation8 + $0x298] sm:$0xff]
    %v2251 = vld [vmem:[#allocation8 + $0x2a0] sm:$0xff]
    %v2252 = vld [vmem:[#allocation8 + $0x2a8] sm:$0xff]
    %v2253 = vld [vmem:[#allocation8 + $0x2b0] sm:$0xff]
    %v2254 = vld [vmem:[#allocation8 + $0x2b8] sm:$0xff]
    %v2255 = vld [vmem:[#allocation8 + $0x2c0] sm:$0xff]
    %v2256 = vld [vmem:[#allocation8 + $0x2c8] sm:$0xff]
    %v2257 = vld [vmem:[#allocation8 + $0x2d0] sm:$0xff]
    %v2258 = vld [vmem:[#allocation8 + $0x2d8] sm:$0xff]
    %v2259 = vld [vmem:[#allocation8 + $0x2e0] sm:$0xff]
    %v2260 = vld [vmem:[#allocation8 + $0x2e8] sm:$0xff]
    %v2261 = vld [vmem:[#allocation8 + $0x2f0] sm:$0xff]
    %v2262 = vld [vmem:[#allocation8 + $0x2f8] sm:$0xff]
    %v2263 = vld [vmem:[#allocation8 + $0x300] sm:$0xff]
    %v2264 = vld [vmem:[#allocation8 + $0x308] sm:$0xff]
    %v2265 = vld [vmem:[#allocation8 + $0x310] sm:$0xff]
    %v2266 = vld [vmem:[#allocation8 + $0x318] sm:$0xff]
    %v2267 = vld [vmem:[#allocation8 + $0x320] sm:$0xff]
    %v2268 = vld [vmem:[#allocation8 + $0x328] sm:$0xff]
    %v2269 = vld [vmem:[#allocation8 + $0x330] sm:$0xff]
    %v2270 = vld [vmem:[#allocation8 + $0x338] sm:$0xff]
    %v2271 = vld [vmem:[#allocation8 + $0x340] sm:$0xff]
    %v2272 = vld [vmem:[#allocation8 + $0x348] sm:$0xff]
    %v2273 = vld [vmem:[#allocation8 + $0x350] sm:$0xff]
    %v2274 = vld [vmem:[#allocation8 + $0x358] sm:$0xff]
    %v2275 = vld [vmem:[#allocation8 + $0x360] sm:$0xff]
    %v2276 = vld [vmem:[#allocation8 + $0x368] sm:$0xff]
    %v2277 = vld [vmem:[#allocation8 + $0x370] sm:$0xff]
    %v2278 = vld [vmem:[#allocation8 + $0x378] sm:$0xff]
    %v2279 = vld [vmem:[#allocation8 + $0x380] sm:$0xff]
    %v2280 = vld [vmem:[#allocation8 + $0x388] sm:$0xff]
    %v2281 = vld [vmem:[#allocation8 + $0x390] sm:$0xff]
    %v2282 = vld [vmem:[#allocation8 + $0x398] sm:$0xff]
    %v2283 = vld [vmem:[#allocation8 + $0x3a0] sm:$0xff]
    %v2284 = vld [vmem:[#allocation8 + $0x3a8] sm:$0xff]
    %v2285 = vld [vmem:[#allocation8 + $0x3b0] sm:$0xff]
    %v2286 = vld [vmem:[#allocation8 + $0x3b8] sm:$0xff]
    %v2287 = vld [vmem:[#allocation8 + $0x3c0] sm:$0xff]
    %v2288 = vld [vmem:[#allocation8 + $0x3c8] sm:$0xff]
    %v2289 = vld [vmem:[#allocation8 + $0x3d0] sm:$0xff]
    %v2290 = vld [vmem:[#allocation8 + $0x3d8] sm:$0xff]
    %v2291 = vld [vmem:[#allocation8 + $0x3e0] sm:$0xff]
    %v2292 = vld [vmem:[#allocation8 + $0x3e8] sm:$0xff]
    %v2293 = vld [vmem:[#allocation8 + $0x3f0] sm:$0xff]
    %v2294 = vld [vmem:[#allocation8 + $0x3f8] sm:$0xff]
    %v2295 = vld [vmem:[#allocation8 + $0x400] sm:$0xff]
    %v2296 = vld [vmem:[#allocation8 + $0x408] sm:$0xff]
    %v2297 = vld [vmem:[#allocation8 + $0x410] sm:$0xff]
    %v2298 = vld [vmem:[#allocation8 + $0x418] sm:$0xff]
    %v2299 = vld [vmem:[#allocation8 + $0x420] sm:$0xff]
    %v2300 = vld [vmem:[#allocation8 + $0x428] sm:$0xff]
    %v2301 = vld [vmem:[#allocation8 + $0x430] sm:$0xff]
    %v2302 = vld [vmem:[#allocation8 + $0x438] sm:$0xff]
    %v2303 = vld [vmem:[#allocation8 + $0x440] sm:$0xff]
    %v2304 = vld [vmem:[#allocation8 + $0x448] sm:$0xff]
    %v2305 = vld [vmem:[#allocation8 + $0x450] sm:$0xff]
    %v2306 = vld [vmem:[#allocation8 + $0x458] sm:$0xff]
    %v2307 = vld [vmem:[#allocation8 + $0x460] sm:$0xff]
    %v2308 = vld [vmem:[#allocation8 + $0x468] sm:$0xff]
    %v2309 = vld [vmem:[#allocation8 + $0x470] sm:$0xff]
    %v2310 = vld [vmem:[#allocation8 + $0x478] sm:$0xff]
    %v2311 = vld [vmem:[#allocation8 + $0x480] sm:$0xff]
    %v2312 = vld [vmem:[#allocation8 + $0x488] sm:$0xff]
    %v2313 = vld [vmem:[#allocation8 + $0x490] sm:$0xff]
    %v2314 = vld [vmem:[#allocation8 + $0x498] sm:$0xff]
    %v2315 = vld [vmem:[#allocation8 + $0x4a0] sm:$0xff]
    %v2316 = vld [vmem:[#allocation8 + $0x4a8] sm:$0xff]
    %v2317 = vld [vmem:[#allocation8 + $0x4b0] sm:$0xff]
    %v2318 = vld [vmem:[#allocation8 + $0x4b8] sm:$0xff]
    %v2319 = vld [vmem:[#allocation8 + $0x4c0] sm:$0xff]
    %v2320 = vld [vmem:[#allocation8 + $0x4c8] sm:$0xff]
    %v2321 = vld [vmem:[#allocation8 + $0x4d0] sm:$0xff]
    %v2322 = vld [vmem:[#allocation8 + $0x4d8] sm:$0xff]
    %v2323 = vld [vmem:[#allocation8 + $0x4e0] sm:$0xff]
    %v2324 = vld [vmem:[#allocation8 + $0x4e8] sm:$0xff]
    %v2325 = vld [vmem:[#allocation8 + $0x4f0] sm:$0xff]
    %v2326 = vld [vmem:[#allocation8 + $0x4f8] sm:$0xff]
    %v2327 = vld [vmem:[#allocation8 + $0x500] sm:$0xff]
    %v2328 = vld [vmem:[#allocation8 + $0x508] sm:$0xff]
    %v2329 = vld [vmem:[#allocation8 + $0x510] sm:$0xff]
    %v2330 = vld [vmem:[#allocation8 + $0x518] sm:$0xff]
    %v2331 = vld [vmem:[#allocation8 + $0x520] sm:$0xff]
    %v2332 = vld [vmem:[#allocation8 + $0x528] sm:$0xff]
    %v2333 = vld [vmem:[#allocation8 + $0x530] sm:$0xff]
    %v2334 = vld [vmem:[#allocation8 + $0x538] sm:$0xff]
    %v2335 = vld [vmem:[#allocation8 + $0x540] sm:$0xff]
    %v2336 = vld [vmem:[#allocation8 + $0x548] sm:$0xff]
    %v2337 = vld [vmem:[#allocation8 + $0x550] sm:$0xff]
    %v2338 = vld [vmem:[#allocation8 + $0x558] sm:$0xff]
    %v2339 = vld [vmem:[#allocation8 + $0x560] sm:$0xff]
    %v2340 = vld [vmem:[#allocation8 + $0x568] sm:$0xff]
    %v2341 = vld [vmem:[#allocation8 + $0x570] sm:$0xff]
    %v2342 = vld [vmem:[#allocation8 + $0x578] sm:$0xff]
    %v2343 = vld [vmem:[#allocation8 + $0x580] sm:$0xff]
    %v2344 = vld [vmem:[#allocation8 + $0x588] sm:$0xff]
    %v2345 = vld [vmem:[#allocation8 + $0x590] sm:$0xff]
    %v2346 = vld [vmem:[#allocation8 + $0x598] sm:$0xff]
    %v2347 = vld [vmem:[#allocation8 + $0x5a0] sm:$0xff]
    %v2348 = vld [vmem:[#allocation8 + $0x5a8] sm:$0xff]
    %v2349 = vld [vmem:[#allocation8 + $0x5b0] sm:$0xff]
    %v2350 = vld [vmem:[#allocation8 + $0x5b8] sm:$0xff]
    %v2351 = vld [vmem:[#allocation8 + $0x5c0] sm:$0xff]
    %v2352 = vld [vmem:[#allocation8 + $0x5c8] sm:$0xff]
    %v2353 = vld [vmem:[#allocation8 + $0x5d0] sm:$0xff]
    %v2354 = vld [vmem:[#allocation8 + $0x5d8] sm:$0xff]
    %v2355 = vld [vmem:[#allocation8 + $0x5e0] sm:$0xff]
    %v2356 = vld [vmem:[#allocation8 + $0x5e8] sm:$0xff]
    %v2357 = vld [vmem:[#allocation8 + $0x5f0] sm:$0xff]
    %v2358 = vld [vmem:[#allocation8 + $0x5f8] sm:$0xff]
    %v2359 = vld [vmem:[#allocation8 + $0x600] sm:$0xff]
    %v2360 = vld [vmem:[#allocation8 + $0x608] sm:$0xff]
    %v2361 = vld [vmem:[#allocation8 + $0x610] sm:$0xff]
    %v2362 = vld [vmem:[#allocation8 + $0x618] sm:$0xff]
    %v2363 = vld [vmem:[#allocation8 + $0x620] sm:$0xff]
    %v2364 = vld [vmem:[#allocation8 + $0x628] sm:$0xff]
    %v2365 = vld [vmem:[#allocation8 + $0x630] sm:$0xff]
    %v2366 = vld [vmem:[#allocation8 + $0x638] sm:$0xff]
    %v2367 = vld [vmem:[#allocation8 + $0x640] sm:$0xff]
    %v2368 = vld [vmem:[#allocation8 + $0x648] sm:$0xff]
    %v2369 = vld [vmem:[#allocation8 + $0x650] sm:$0xff]
    %v2370 = vld [vmem:[#allocation8 + $0x658] sm:$0xff]
    %v2371 = vld [vmem:[#allocation8 + $0x660] sm:$0xff]
    %v2372 = vld [vmem:[#allocation8 + $0x668] sm:$0xff]
    %v2373 = vld [vmem:[#allocation8 + $0x670] sm:$0xff]
    %v2374 = vld [vmem:[#allocation8 + $0x678] sm:$0xff]
    %v2375 = vld [vmem:[#allocation8 + $0x680] sm:$0xff]
    %v2376 = vld [vmem:[#allocation8 + $0x688] sm:$0xff]
    %v2377 = vld [vmem:[#allocation8 + $0x690] sm:$0xff]
    %v2378 = vld [vmem:[#allocation8 + $0x698] sm:$0xff]
    %v2379 = vld [vmem:[#allocation8 + $0x6a0] sm:$0xff]
    %v2380 = vld [vmem:[#allocation8 + $0x6a8] sm:$0xff]
    %v2381 = vld [vmem:[#allocation8 + $0x6b0] sm:$0xff]
    %v2382 = vld [vmem:[#allocation8 + $0x6b8] sm:$0xff]
    %v2383 = vld [vmem:[#allocation8 + $0x6c0] sm:$0xff]
    %v2384 = vld [vmem:[#allocation8 + $0x6c8] sm:$0xff]
    %v2385 = vld [vmem:[#allocation8 + $0x6d0] sm:$0xff]
    %v2386 = vld [vmem:[#allocation8 + $0x6d8] sm:$0xff]
    %v2387 = vld [vmem:[#allocation8 + $0x6e0] sm:$0xff]
    %v2388 = vld [vmem:[#allocation8 + $0x6e8] sm:$0xff]
    %v2389 = vld [vmem:[#allocation8 + $0x6f0] sm:$0xff]
    %v2390 = vld [vmem:[#allocation8 + $0x6f8] sm:$0xff]
    %v2391 = vld [vmem:[#allocation8 + $0x700] sm:$0xff]
    %v2392 = vld [vmem:[#allocation8 + $0x708] sm:$0xff]
    %v2393 = vld [vmem:[#allocation8 + $0x710] sm:$0xff]
    %v2394 = vld [vmem:[#allocation8 + $0x718] sm:$0xff]
    %v2395 = vld [vmem:[#allocation8 + $0x720] sm:$0xff]
    %v2396 = vld [vmem:[#allocation8 + $0x728] sm:$0xff]
    %v2397 = vld [vmem:[#allocation8 + $0x730] sm:$0xff]
    %v2398 = vld [vmem:[#allocation8 + $0x738] sm:$0xff]
    %v2399 = vld [vmem:[#allocation8 + $0x740] sm:$0xff]
    %v2400 = vld [vmem:[#allocation8 + $0x748] sm:$0xff]
    %v2401 = vld [vmem:[#allocation8 + $0x750] sm:$0xff]
    %v2402 = vld [vmem:[#allocation8 + $0x758] sm:$0xff]
    %v2403 = vld [vmem:[#allocation8 + $0x760] sm:$0xff]
    %v2404 = vld [vmem:[#allocation8 + $0x768] sm:$0xff]
    %v2405 = vld [vmem:[#allocation8 + $0x770] sm:$0xff]
    %v2406 = vld [vmem:[#allocation8 + $0x778] sm:$0xff]
    %v2407 = vld [vmem:[#allocation8 + $0x780] sm:$0xff]
    %v2408 = vld [vmem:[#allocation8 + $0x788] sm:$0xff]
    %v2409 = vld [vmem:[#allocation8 + $0x790] sm:$0xff]
    %v2410 = vld [vmem:[#allocation8 + $0x798] sm:$0xff]
    %v2411 = vld [vmem:[#allocation8 + $0x7a0] sm:$0xff]
    %v2412 = vld [vmem:[#allocation8 + $0x7a8] sm:$0xff]
    %v2413 = vld [vmem:[#allocation8 + $0x7b0] sm:$0xff]
    %v2414 = vld [vmem:[#allocation8 + $0x7b8] sm:$0xff]
    %v2415 = vld [vmem:[#allocation8 + $0x7c0] sm:$0xff]
    %v2416 = vld [vmem:[#allocation8 + $0x7c8] sm:$0xff]
    %v2417 = vld [vmem:[#allocation8 + $0x7d0] sm:$0xff]
    %v2418 = vld [vmem:[#allocation8 + $0x7d8] sm:$0xff]
    %v2419 = vld [vmem:[#allocation8 + $0x7e0] sm:$0xff]
    %v2420 = vld [vmem:[#allocation8 + $0x7e8] sm:$0xff]
    %v2421 = vld [vmem:[#allocation8 + $0x7f0] sm:$0xff]
    %v2422 = vld [vmem:[#allocation8 + $0x7f8] sm:$0xff]
    %v2423 = vld [vmem:[#allocation10] sm:$0xf]
    %v2425 = vperm.slane %v2423, 0
    %v2426 = vperm.slane %v2423, 1
    %v2427 = vperm.slane %v2423, 2
    %v2428 = vperm.slane %v2423, 3
    %v2689 = vunpack.c.l.b16 %v2167
    %v2690 = vunpack.c.h.b16 %v2167
    %v2691 = vunpack.c.l.b16 %v2168
    %v2692 = vunpack.c.h.b16 %v2168
    %v2693 = vunpack.c.l.b16 %v2169
    %v2694 = vunpack.c.h.b16 %v2169
    %v2695 = vunpack.c.l.b16 %v2170
    %v2696 = vunpack.c.h.b16 %v2170
    %v2697 = vunpack.c.l.b16 %v2171
    %v2698 = vunpack.c.h.b16 %v2171
    %v2699 = vunpack.c.l.b16 %v2172
    %v2700 = vunpack.c.h.b16 %v2172
    %v2701 = vunpack.c.l.b16 %v2173
    %v2702 = vunpack.c.h.b16 %v2173
    %v2703 = vunpack.c.l.b16 %v2174
    %v2704 = vunpack.c.h.b16 %v2174
    %v2705 = vunpack.c.l.b16 %v2175
    %v2706 = vunpack.c.h.b16 %v2175
    %v2707 = vunpack.c.l.b16 %v2176
    %v2708 = vunpack.c.h.b16 %v2176
    %v2709 = vunpack.c.l.b16 %v2177
    %v2710 = vunpack.c.h.b16 %v2177
    %v2711 = vunpack.c.l.b16 %v2178
    %v2712 = vunpack.c.h.b16 %v2178
    %v2713 = vunpack.c.l.b16 %v2179
    %v2714 = vunpack.c.h.b16 %v2179
    %v2715 = vunpack.c.l.b16 %v2180
    %v2716 = vunpack.c.h.b16 %v2180
    %v2717 = vunpack.c.l.b16 %v2181
    %v2718 = vunpack.c.h.b16 %v2181
    %v2719 = vunpack.c.l.b16 %v2182
    %v2720 = vunpack.c.h.b16 %v2182
    %v2721 = vunpack.c.l.b16 %v2183
    %v2722 = vunpack.c.h.b16 %v2183
    %v2723 = vunpack.c.l.b16 %v2184
    %v2724 = vunpack.c.h.b16 %v2184
    %v2725 = vunpack.c.l.b16 %v2185
    %v2726 = vunpack.c.h.b16 %v2185
    %v2727 = vunpack.c.l.b16 %v2186
    %v2728 = vunpack.c.h.b16 %v2186
    %v2729 = vunpack.c.l.b16 %v2187
    %v2730 = vunpack.c.h.b16 %v2187
    %v2731 = vunpack.c.l.b16 %v2188
    %v2732 = vunpack.c.h.b16 %v2188
    %v2733 = vunpack.c.l.b16 %v2189
    %v2734 = vunpack.c.h.b16 %v2189
    %v2735 = vunpack.c.l.b16 %v2190
    %v2736 = vunpack.c.h.b16 %v2190
    %v2737 = vunpack.c.l.b16 %v2191
    %v2738 = vunpack.c.h.b16 %v2191
    %v2739 = vunpack.c.l.b16 %v2192
    %v2740 = vunpack.c.h.b16 %v2192
    %v2741 = vunpack.c.l.b16 %v2193
    %v2742 = vunpack.c.h.b16 %v2193
    %v2743 = vunpack.c.l.b16 %v2194
    %v2744 = vunpack.c.h.b16 %v2194
    %v2745 = vunpack.c.l.b16 %v2195
    %v2746 = vunpack.c.h.b16 %v2195
    %v2747 = vunpack.c.l.b16 %v2196
    %v2748 = vunpack.c.h.b16 %v2196
    %v2749 = vunpack.c.l.b16 %v2197
    %v2750 = vunpack.c.h.b16 %v2197
    %v2751 = vunpack.c.l.b16 %v2198
    %v2752 = vunpack.c.h.b16 %v2198
    %v2753 = vunpack.c.l.b16 %v2199
    %v2754 = vunpack.c.h.b16 %v2199
    %v2755 = vunpack.c.l.b16 %v2200
    %v2756 = vunpack.c.h.b16 %v2200
    %v2757 = vunpack.c.l.b16 %v2201
    %v2758 = vunpack.c.h.b16 %v2201
    %v2759 = vunpack.c.l.b16 %v2202
    %v2760 = vunpack.c.h.b16 %v2202
    %v2761 = vunpack.c.l.b16 %v2203
    %v2762 = vunpack.c.h.b16 %v2203
    %v2763 = vunpack.c.l.b16 %v2204
    %v2764 = vunpack.c.h.b16 %v2204
    %v2765 = vunpack.c.l.b16 %v2205
    %v2766 = vunpack.c.h.b16 %v2205
    %v2767 = vunpack.c.l.b16 %v2206
    %v2768 = vunpack.c.h.b16 %v2206
    %v2769 = vunpack.c.l.b16 %v2207
    %v2770 = vunpack.c.h.b16 %v2207
    %v2771 = vunpack.c.l.b16 %v2208
    %v2772 = vunpack.c.h.b16 %v2208
    %v2773 = vunpack.c.l.b16 %v2209
    %v2774 = vunpack.c.h.b16 %v2209
    %v2775 = vunpack.c.l.b16 %v2210
    %v2776 = vunpack.c.h.b16 %v2210
    %v2777 = vunpack.c.l.b16 %v2211
    %v2778 = vunpack.c.h.b16 %v2211
    %v2779 = vunpack.c.l.b16 %v2212
    %v2780 = vunpack.c.h.b16 %v2212
    %v2781 = vunpack.c.l.b16 %v2213
    %v2782 = vunpack.c.h.b16 %v2213
    %v2783 = vunpack.c.l.b16 %v2214
    %v2784 = vunpack.c.h.b16 %v2214
    %v2785 = vunpack.c.l.b16 %v2215
    %v2786 = vunpack.c.h.b16 %v2215
    %v2787 = vunpack.c.l.b16 %v2216
    %v2788 = vunpack.c.h.b16 %v2216
    %v2789 = vunpack.c.l.b16 %v2217
    %v2790 = vunpack.c.h.b16 %v2217
    %v2791 = vunpack.c.l.b16 %v2218
    %v2792 = vunpack.c.h.b16 %v2218
    %v2793 = vunpack.c.l.b16 %v2219
    %v2794 = vunpack.c.h.b16 %v2219
    %v2795 = vunpack.c.l.b16 %v2220
    %v2796 = vunpack.c.h.b16 %v2220
    %v2797 = vunpack.c.l.b16 %v2221
    %v2798 = vunpack.c.h.b16 %v2221
    %v2799 = vunpack.c.l.b16 %v2222
    %v2800 = vunpack.c.h.b16 %v2222
    %v2801 = vunpack.c.l.b16 %v2223
    %v2802 = vunpack.c.h.b16 %v2223
    %v2803 = vunpack.c.l.b16 %v2224
    %v2804 = vunpack.c.h.b16 %v2224
    %v2805 = vunpack.c.l.b16 %v2225
    %v2806 = vunpack.c.h.b16 %v2225
    %v2807 = vunpack.c.l.b16 %v2226
    %v2808 = vunpack.c.h.b16 %v2226
    %v2809 = vunpack.c.l.b16 %v2227
    %v2810 = vunpack.c.h.b16 %v2227
    %v2811 = vunpack.c.l.b16 %v2228
    %v2812 = vunpack.c.h.b16 %v2228
    %v2813 = vunpack.c.l.b16 %v2229
    %v2814 = vunpack.c.h.b16 %v2229
    %v2815 = vunpack.c.l.b16 %v2230
    %v2816 = vunpack.c.h.b16 %v2230
    %v2817 = vunpack.c.l.b16 %v2231
    %v2818 = vunpack.c.h.b16 %v2231
    %v2819 = vunpack.c.l.b16 %v2232
    %v2820 = vunpack.c.h.b16 %v2232
    %v2821 = vunpack.c.l.b16 %v2233
    %v2822 = vunpack.c.h.b16 %v2233
    %v2823 = vunpack.c.l.b16 %v2234
    %v2824 = vunpack.c.h.b16 %v2234
    %v2825 = vunpack.c.l.b16 %v2235
    %v2826 = vunpack.c.h.b16 %v2235
    %v2827 = vunpack.c.l.b16 %v2236
    %v2828 = vunpack.c.h.b16 %v2236
    %v2829 = vunpack.c.l.b16 %v2237
    %v2830 = vunpack.c.h.b16 %v2237
    %v2831 = vunpack.c.l.b16 %v2238
    %v2832 = vunpack.c.h.b16 %v2238
    %v2833 = vunpack.c.l.b16 %v2239
    %v2834 = vunpack.c.h.b16 %v2239
    %v2835 = vunpack.c.l.b16 %v2240
    %v2836 = vunpack.c.h.b16 %v2240
    %v2837 = vunpack.c.l.b16 %v2241
    %v2838 = vunpack.c.h.b16 %v2241
    %v2839 = vunpack.c.l.b16 %v2242
    %v2840 = vunpack.c.h.b16 %v2242
    %v2841 = vunpack.c.l.b16 %v2243
    %v2842 = vunpack.c.h.b16 %v2243
    %v2843 = vunpack.c.l.b16 %v2244
    %v2844 = vunpack.c.h.b16 %v2244
    %v2845 = vunpack.c.l.b16 %v2245
    %v2846 = vunpack.c.h.b16 %v2245
    %v2847 = vunpack.c.l.b16 %v2246
    %v2848 = vunpack.c.h.b16 %v2246
    %v2849 = vunpack.c.l.b16 %v2247
    %v2850 = vunpack.c.h.b16 %v2247
    %v2851 = vunpack.c.l.b16 %v2248
    %v2852 = vunpack.c.h.b16 %v2248
    %v2853 = vunpack.c.l.b16 %v2249
    %v2854 = vunpack.c.h.b16 %v2249
    %v2855 = vunpack.c.l.b16 %v2250
    %v2856 = vunpack.c.h.b16 %v2250
    %v2857 = vunpack.c.l.b16 %v2251
    %v2858 = vunpack.c.h.b16 %v2251
    %v2859 = vunpack.c.l.b16 %v2252
    %v2860 = vunpack.c.h.b16 %v2252
    %v2861 = vunpack.c.l.b16 %v2253
    %v2862 = vunpack.c.h.b16 %v2253
    %v2863 = vunpack.c.l.b16 %v2254
    %v2864 = vunpack.c.h.b16 %v2254
    %v2865 = vunpack.c.l.b16 %v2255
    %v2866 = vunpack.c.h.b16 %v2255
    %v2867 = vunpack.c.l.b16 %v2256
    %v2868 = vunpack.c.h.b16 %v2256
    %v2869 = vunpack.c.l.b16 %v2257
    %v2870 = vunpack.c.h.b16 %v2257
    %v2871 = vunpack.c.l.b16 %v2258
    %v2872 = vunpack.c.h.b16 %v2258
    %v2873 = vunpack.c.l.b16 %v2259
    %v2874 = vunpack.c.h.b16 %v2259
    %v2875 = vunpack.c.l.b16 %v2260
    %v2876 = vunpack.c.h.b16 %v2260
    %v2877 = vunpack.c.l.b16 %v2261
    %v2878 = vunpack.c.h.b16 %v2261
    %v2879 = vunpack.c.l.b16 %v2262
    %v2880 = vunpack.c.h.b16 %v2262
    %v2881 = vunpack.c.l.b16 %v2263
    %v2882 = vunpack.c.h.b16 %v2263
    %v2883 = vunpack.c.l.b16 %v2264
    %v2884 = vunpack.c.h.b16 %v2264
    %v2885 = vunpack.c.l.b16 %v2265
    %v2886 = vunpack.c.h.b16 %v2265
    %v2887 = vunpack.c.l.b16 %v2266
    %v2888 = vunpack.c.h.b16 %v2266
    %v2889 = vunpack.c.l.b16 %v2267
    %v2890 = vunpack.c.h.b16 %v2267
    %v2891 = vunpack.c.l.b16 %v2268
    %v2892 = vunpack.c.h.b16 %v2268
    %v2893 = vunpack.c.l.b16 %v2269
    %v2894 = vunpack.c.h.b16 %v2269
    %v2895 = vunpack.c.l.b16 %v2270
    %v2896 = vunpack.c.h.b16 %v2270
    %v2897 = vunpack.c.l.b16 %v2271
    %v2898 = vunpack.c.h.b16 %v2271
    %v2899 = vunpack.c.l.b16 %v2272
    %v2900 = vunpack.c.h.b16 %v2272
    %v2901 = vunpack.c.l.b16 %v2273
    %v2902 = vunpack.c.h.b16 %v2273
    %v2903 = vunpack.c.l.b16 %v2274
    %v2904 = vunpack.c.h.b16 %v2274
    %v2905 = vunpack.c.l.b16 %v2275
    %v2906 = vunpack.c.h.b16 %v2275
    %v2907 = vunpack.c.l.b16 %v2276
    %v2908 = vunpack.c.h.b16 %v2276
    %v2909 = vunpack.c.l.b16 %v2277
    %v2910 = vunpack.c.h.b16 %v2277
    %v2911 = vunpack.c.l.b16 %v2278
    %v2912 = vunpack.c.h.b16 %v2278
    %v2913 = vunpack.c.l.b16 %v2279
    %v2914 = vunpack.c.h.b16 %v2279
    %v2915 = vunpack.c.l.b16 %v2280
    %v2916 = vunpack.c.h.b16 %v2280
    %v2917 = vunpack.c.l.b16 %v2281
    %v2918 = vunpack.c.h.b16 %v2281
    %v2919 = vunpack.c.l.b16 %v2282
    %v2920 = vunpack.c.h.b16 %v2282
    %v2921 = vunpack.c.l.b16 %v2283
    %v2922 = vunpack.c.h.b16 %v2283
    %v2923 = vunpack.c.l.b16 %v2284
    %v2924 = vunpack.c.h.b16 %v2284
    %v2925 = vunpack.c.l.b16 %v2285
    %v2926 = vunpack.c.h.b16 %v2285
    %v2927 = vunpack.c.l.b16 %v2286
    %v2928 = vunpack.c.h.b16 %v2286
    %v2929 = vunpack.c.l.b16 %v2287
    %v2930 = vunpack.c.h.b16 %v2287
    %v2931 = vunpack.c.l.b16 %v2288
    %v2932 = vunpack.c.h.b16 %v2288
    %v2933 = vunpack.c.l.b16 %v2289
    %v2934 = vunpack.c.h.b16 %v2289
    %v2935 = vunpack.c.l.b16 %v2290
    %v2936 = vunpack.c.h.b16 %v2290
    %v2937 = vunpack.c.l.b16 %v2291
    %v2938 = vunpack.c.h.b16 %v2291
    %v2939 = vunpack.c.l.b16 %v2292
    %v2940 = vunpack.c.h.b16 %v2292
    %v2941 = vunpack.c.l.b16 %v2293
    %v2942 = vunpack.c.h.b16 %v2293
    %v2943 = vunpack.c.l.b16 %v2294
    %v2944 = vunpack.c.h.b16 %v2294
    %v2945 = vunpack.c.l.b16 %v2295
    %v2946 = vunpack.c.h.b16 %v2295
    %v2947 = vunpack.c.l.b16 %v2296
    %v2948 = vunpack.c.h.b16 %v2296
    %v2949 = vunpack.c.l.b16 %v2297
    %v2950 = vunpack.c.h.b16 %v2297
    %v2951 = vunpack.c.l.b16 %v2298
    %v2952 = vunpack.c.h.b16 %v2298
    %v2953 = vunpack.c.l.b16 %v2299
    %v2954 = vunpack.c.h.b16 %v2299
    %v2955 = vunpack.c.l.b16 %v2300
    %v2956 = vunpack.c.h.b16 %v2300
    %v2957 = vunpack.c.l.b16 %v2301
    %v2958 = vunpack.c.h.b16 %v2301
    %v2959 = vunpack.c.l.b16 %v2302
    %v2960 = vunpack.c.h.b16 %v2302
    %v2961 = vunpack.c.l.b16 %v2303
    %v2962 = vunpack.c.h.b16 %v2303
    %v2963 = vunpack.c.l.b16 %v2304
    %v2964 = vunpack.c.h.b16 %v2304
    %v2965 = vunpack.c.l.b16 %v2305
    %v2966 = vunpack.c.h.b16 %v2305
    %v2967 = vunpack.c.l.b16 %v2306
    %v2968 = vunpack.c.h.b16 %v2306
    %v2969 = vunpack.c.l.b16 %v2307
    %v2970 = vunpack.c.h.b16 %v2307
    %v2971 = vunpack.c.l.b16 %v2308
    %v2972 = vunpack.c.h.b16 %v2308
    %v2973 = vunpack.c.l.b16 %v2309
    %v2974 = vunpack.c.h.b16 %v2309
    %v2975 = vunpack.c.l.b16 %v2310
    %v2976 = vunpack.c.h.b16 %v2310
    %v2977 = vunpack.c.l.b16 %v2311
    %v2978 = vunpack.c.h.b16 %v2311
    %v2979 = vunpack.c.l.b16 %v2312
    %v2980 = vunpack.c.h.b16 %v2312
    %v2981 = vunpack.c.l.b16 %v2313
    %v2982 = vunpack.c.h.b16 %v2313
    %v2983 = vunpack.c.l.b16 %v2314
    %v2984 = vunpack.c.h.b16 %v2314
    %v2985 = vunpack.c.l.b16 %v2315
    %v2986 = vunpack.c.h.b16 %v2315
    %v2987 = vunpack.c.l.b16 %v2316
    %v2988 = vunpack.c.h.b16 %v2316
    %v2989 = vunpack.c.l.b16 %v2317
    %v2990 = vunpack.c.h.b16 %v2317
    %v2991 = vunpack.c.l.b16 %v2318
    %v2992 = vunpack.c.h.b16 %v2318
    %v2993 = vunpack.c.l.b16 %v2319
    %v2994 = vunpack.c.h.b16 %v2319
    %v2995 = vunpack.c.l.b16 %v2320
    %v2996 = vunpack.c.h.b16 %v2320
    %v2997 = vunpack.c.l.b16 %v2321
    %v2998 = vunpack.c.h.b16 %v2321
    %v2999 = vunpack.c.l.b16 %v2322
    %v3000 = vunpack.c.h.b16 %v2322
    %v3001 = vunpack.c.l.b16 %v2323
    %v3002 = vunpack.c.h.b16 %v2323
    %v3003 = vunpack.c.l.b16 %v2324
    %v3004 = vunpack.c.h.b16 %v2324
    %v3005 = vunpack.c.l.b16 %v2325
    %v3006 = vunpack.c.h.b16 %v2325
    %v3007 = vunpack.c.l.b16 %v2326
    %v3008 = vunpack.c.h.b16 %v2326
    %v3009 = vunpack.c.l.b16 %v2327
    %v3010 = vunpack.c.h.b16 %v2327
    %v3011 = vunpack.c.l.b16 %v2328
    %v3012 = vunpack.c.h.b16 %v2328
    %v3013 = vunpack.c.l.b16 %v2329
    %v3014 = vunpack.c.h.b16 %v2329
    %v3015 = vunpack.c.l.b16 %v2330
    %v3016 = vunpack.c.h.b16 %v2330
    %v3017 = vunpack.c.l.b16 %v2331
    %v3018 = vunpack.c.h.b16 %v2331
    %v3019 = vunpack.c.l.b16 %v2332
    %v3020 = vunpack.c.h.b16 %v2332
    %v3021 = vunpack.c.l.b16 %v2333
    %v3022 = vunpack.c.h.b16 %v2333
    %v3023 = vunpack.c.l.b16 %v2334
    %v3024 = vunpack.c.h.b16 %v2334
    %v3025 = vunpack.c.l.b16 %v2335
    %v3026 = vunpack.c.h.b16 %v2335
    %v3027 = vunpack.c.l.b16 %v2336
    %v3028 = vunpack.c.h.b16 %v2336
    %v3029 = vunpack.c.l.b16 %v2337
    %v3030 = vunpack.c.h.b16 %v2337
    %v3031 = vunpack.c.l.b16 %v2338
    %v3032 = vunpack.c.h.b16 %v2338
    %v3033 = vunpack.c.l.b16 %v2339
    %v3034 = vunpack.c.h.b16 %v2339
    %v3035 = vunpack.c.l.b16 %v2340
    %v3036 = vunpack.c.h.b16 %v2340
    %v3037 = vunpack.c.l.b16 %v2341
    %v3038 = vunpack.c.h.b16 %v2341
    %v3039 = vunpack.c.l.b16 %v2342
    %v3040 = vunpack.c.h.b16 %v2342
    %v3041 = vunpack.c.l.b16 %v2343
    %v3042 = vunpack.c.h.b16 %v2343
    %v3043 = vunpack.c.l.b16 %v2344
    %v3044 = vunpack.c.h.b16 %v2344
    %v3045 = vunpack.c.l.b16 %v2345
    %v3046 = vunpack.c.h.b16 %v2345
    %v3047 = vunpack.c.l.b16 %v2346
    %v3048 = vunpack.c.h.b16 %v2346
    %v3049 = vunpack.c.l.b16 %v2347
    %v3050 = vunpack.c.h.b16 %v2347
    %v3051 = vunpack.c.l.b16 %v2348
    %v3052 = vunpack.c.h.b16 %v2348
    %v3053 = vunpack.c.l.b16 %v2349
    %v3054 = vunpack.c.h.b16 %v2349
    %v3055 = vunpack.c.l.b16 %v2350
    %v3056 = vunpack.c.h.b16 %v2350
    %v3057 = vunpack.c.l.b16 %v2351
    %v3058 = vunpack.c.h.b16 %v2351
    %v3059 = vunpack.c.l.b16 %v2352
    %v3060 = vunpack.c.h.b16 %v2352
    %v3061 = vunpack.c.l.b16 %v2353
    %v3062 = vunpack.c.h.b16 %v2353
    %v3063 = vunpack.c.l.b16 %v2354
    %v3064 = vunpack.c.h.b16 %v2354
    %v3065 = vunpack.c.l.b16 %v2355
    %v3066 = vunpack.c.h.b16 %v2355
    %v3067 = vunpack.c.l.b16 %v2356
    %v3068 = vunpack.c.h.b16 %v2356
    %v3069 = vunpack.c.l.b16 %v2357
    %v3070 = vunpack.c.h.b16 %v2357
    %v3071 = vunpack.c.l.b16 %v2358
    %v3072 = vunpack.c.h.b16 %v2358
    %v3073 = vunpack.c.l.b16 %v2359
    %v3074 = vunpack.c.h.b16 %v2359
    %v3075 = vunpack.c.l.b16 %v2360
    %v3076 = vunpack.c.h.b16 %v2360
    %v3077 = vunpack.c.l.b16 %v2361
    %v3078 = vunpack.c.h.b16 %v2361
    %v3079 = vunpack.c.l.b16 %v2362
    %v3080 = vunpack.c.h.b16 %v2362
    %v3081 = vunpack.c.l.b16 %v2363
    %v3082 = vunpack.c.h.b16 %v2363
    %v3083 = vunpack.c.l.b16 %v2364
    %v3084 = vunpack.c.h.b16 %v2364
    %v3085 = vunpack.c.l.b16 %v2365
    %v3086 = vunpack.c.h.b16 %v2365
    %v3087 = vunpack.c.l.b16 %v2366
    %v3088 = vunpack.c.h.b16 %v2366
    %v3089 = vunpack.c.l.b16 %v2367
    %v3090 = vunpack.c.h.b16 %v2367
    %v3091 = vunpack.c.l.b16 %v2368
    %v3092 = vunpack.c.h.b16 %v2368
    %v3093 = vunpack.c.l.b16 %v2369
    %v3094 = vunpack.c.h.b16 %v2369
    %v3095 = vunpack.c.l.b16 %v2370
    %v3096 = vunpack.c.h.b16 %v2370
    %v3097 = vunpack.c.l.b16 %v2371
    %v3098 = vunpack.c.h.b16 %v2371
    %v3099 = vunpack.c.l.b16 %v2372
    %v3100 = vunpack.c.h.b16 %v2372
    %v3101 = vunpack.c.l.b16 %v2373
    %v3102 = vunpack.c.h.b16 %v2373
    %v3103 = vunpack.c.l.b16 %v2374
    %v3104 = vunpack.c.h.b16 %v2374
    %v3105 = vunpack.c.l.b16 %v2375
    %v3106 = vunpack.c.h.b16 %v2375
    %v3107 = vunpack.c.l.b16 %v2376
    %v3108 = vunpack.c.h.b16 %v2376
    %v3109 = vunpack.c.l.b16 %v2377
    %v3110 = vunpack.c.h.b16 %v2377
    %v3111 = vunpack.c.l.b16 %v2378
    %v3112 = vunpack.c.h.b16 %v2378
    %v3113 = vunpack.c.l.b16 %v2379
    %v3114 = vunpack.c.h.b16 %v2379
    %v3115 = vunpack.c.l.b16 %v2380
    %v3116 = vunpack.c.h.b16 %v2380
    %v3117 = vunpack.c.l.b16 %v2381
    %v3118 = vunpack.c.h.b16 %v2381
    %v3119 = vunpack.c.l.b16 %v2382
    %v3120 = vunpack.c.h.b16 %v2382
    %v3121 = vunpack.c.l.b16 %v2383
    %v3122 = vunpack.c.h.b16 %v2383
    %v3123 = vunpack.c.l.b16 %v2384
    %v3124 = vunpack.c.h.b16 %v2384
    %v3125 = vunpack.c.l.b16 %v2385
    %v3126 = vunpack.c.h.b16 %v2385
    %v3127 = vunpack.c.l.b16 %v2386
    %v3128 = vunpack.c.h.b16 %v2386
    %v3129 = vunpack.c.l.b16 %v2387
    %v3130 = vunpack.c.h.b16 %v2387
    %v3131 = vunpack.c.l.b16 %v2388
    %v3132 = vunpack.c.h.b16 %v2388
    %v3133 = vunpack.c.l.b16 %v2389
    %v3134 = vunpack.c.h.b16 %v2389
    %v3135 = vunpack.c.l.b16 %v2390
    %v3136 = vunpack.c.h.b16 %v2390
    %v3137 = vunpack.c.l.b16 %v2391
    %v3138 = vunpack.c.h.b16 %v2391
    %v3139 = vunpack.c.l.b16 %v2392
    %v3140 = vunpack.c.h.b16 %v2392
    %v3141 = vunpack.c.l.b16 %v2393
    %v3142 = vunpack.c.h.b16 %v2393
    %v3143 = vunpack.c.l.b16 %v2394
    %v3144 = vunpack.c.h.b16 %v2394
    %v3145 = vunpack.c.l.b16 %v2395
    %v3146 = vunpack.c.h.b16 %v2395
    %v3147 = vunpack.c.l.b16 %v2396
    %v3148 = vunpack.c.h.b16 %v2396
    %v3149 = vunpack.c.l.b16 %v2397
    %v3150 = vunpack.c.h.b16 %v2397
    %v3151 = vunpack.c.l.b16 %v2398
    %v3152 = vunpack.c.h.b16 %v2398
    %v3153 = vunpack.c.l.b16 %v2399
    %v3154 = vunpack.c.h.b16 %v2399
    %v3155 = vunpack.c.l.b16 %v2400
    %v3156 = vunpack.c.h.b16 %v2400
    %v3157 = vunpack.c.l.b16 %v2401
    %v3158 = vunpack.c.h.b16 %v2401
    %v3159 = vunpack.c.l.b16 %v2402
    %v3160 = vunpack.c.h.b16 %v2402
    %v3161 = vunpack.c.l.b16 %v2403
    %v3162 = vunpack.c.h.b16 %v2403
    %v3163 = vunpack.c.l.b16 %v2404
    %v3164 = vunpack.c.h.b16 %v2404
    %v3165 = vunpack.c.l.b16 %v2405
    %v3166 = vunpack.c.h.b16 %v2405
    %v3167 = vunpack.c.l.b16 %v2406
    %v3168 = vunpack.c.h.b16 %v2406
    %v3169 = vunpack.c.l.b16 %v2407
    %v3170 = vunpack.c.h.b16 %v2407
    %v3171 = vunpack.c.l.b16 %v2408
    %v3172 = vunpack.c.h.b16 %v2408
    %v3173 = vunpack.c.l.b16 %v2409
    %v3174 = vunpack.c.h.b16 %v2409
    %v3175 = vunpack.c.l.b16 %v2410
    %v3176 = vunpack.c.h.b16 %v2410
    %v3177 = vunpack.c.l.b16 %v2411
    %v3178 = vunpack.c.h.b16 %v2411
    %v3179 = vunpack.c.l.b16 %v2412
    %v3180 = vunpack.c.h.b16 %v2412
    %v3181 = vunpack.c.l.b16 %v2413
    %v3182 = vunpack.c.h.b16 %v2413
    %v3183 = vunpack.c.l.b16 %v2414
    %v3184 = vunpack.c.h.b16 %v2414
    %v3185 = vunpack.c.l.b16 %v2415
    %v3186 = vunpack.c.h.b16 %v2415
    %v3187 = vunpack.c.l.b16 %v2416
    %v3188 = vunpack.c.h.b16 %v2416
    %v3189 = vunpack.c.l.b16 %v2417
    %v3190 = vunpack.c.h.b16 %v2417
    %v3191 = vunpack.c.l.b16 %v2418
    %v3192 = vunpack.c.h.b16 %v2418
    %v3193 = vunpack.c.l.b16 %v2419
    %v3194 = vunpack.c.h.b16 %v2419
    %v3195 = vunpack.c.l.b16 %v2420
    %v3196 = vunpack.c.h.b16 %v2420
    %v3197 = vunpack.c.l.b16 %v2421
    %v3198 = vunpack.c.h.b16 %v2421
    %v3199 = vunpack.c.l.b16 %v2422
    %v3200 = vunpack.c.h.b16 %v2422
    %v3201 = vpack.c.b16 %v2693, %v2689
    %v3202 = vpack.c.b16 %v2694, %v2690
    %v3203 = vpack.c.b16 %v2695, %v2691
    %v3204 = vpack.c.b16 %v2696, %v2692
    %v3205 = vpack.c.b16 %v2701, %v2697
    %v3206 = vpack.c.b16 %v2702, %v2698
    %v3207 = vpack.c.b16 %v2703, %v2699
    %v3208 = vpack.c.b16 %v2704, %v2700
    %v3209 = vpack.c.b16 %v2709, %v2705
    %v3210 = vpack.c.b16 %v2710, %v2706
    %v3211 = vpack.c.b16 %v2711, %v2707
    %v3212 = vpack.c.b16 %v2712, %v2708
    %v3213 = vpack.c.b16 %v2717, %v2713
    %v3214 = vpack.c.b16 %v2718, %v2714
    %v3215 = vpack.c.b16 %v2719, %v2715
    %v3216 = vpack.c.b16 %v2720, %v2716
    %v3217 = vpack.c.b16 %v2725, %v2721
    %v3218 = vpack.c.b16 %v2726, %v2722
    %v3219 = vpack.c.b16 %v2727, %v2723
    %v3220 = vpack.c.b16 %v2728, %v2724
    %v3221 = vpack.c.b16 %v2733, %v2729
    %v3222 = vpack.c.b16 %v2734, %v2730
    %v3223 = vpack.c.b16 %v2735, %v2731
    %v3224 = vpack.c.b16 %v2736, %v2732
    %v3225 = vpack.c.b16 %v2741, %v2737
    %v3226 = vpack.c.b16 %v2742, %v2738
    %v3227 = vpack.c.b16 %v2743, %v2739
    %v3228 = vpack.c.b16 %v2744, %v2740
    %v3229 = vpack.c.b16 %v2749, %v2745
    %v3230 = vpack.c.b16 %v2750, %v2746
    %v3231 = vpack.c.b16 %v2751, %v2747
    %v3232 = vpack.c.b16 %v2752, %v2748
    %v3233 = vpack.c.b16 %v2757, %v2753
    %v3234 = vpack.c.b16 %v2758, %v2754
    %v3235 = vpack.c.b16 %v2759, %v2755
    %v3236 = vpack.c.b16 %v2760, %v2756
    %v3237 = vpack.c.b16 %v2765, %v2761
    %v3238 = vpack.c.b16 %v2766, %v2762
    %v3239 = vpack.c.b16 %v2767, %v2763
    %v3240 = vpack.c.b16 %v2768, %v2764
    %v3241 = vpack.c.b16 %v2773, %v2769
    %v3242 = vpack.c.b16 %v2774, %v2770
    %v3243 = vpack.c.b16 %v2775, %v2771
    %v3244 = vpack.c.b16 %v2776, %v2772
    %v3245 = vpack.c.b16 %v2781, %v2777
    %v3246 = vpack.c.b16 %v2782, %v2778
    %v3247 = vpack.c.b16 %v2783, %v2779
    %v3248 = vpack.c.b16 %v2784, %v2780
    %v3249 = vpack.c.b16 %v2789, %v2785
    %v3250 = vpack.c.b16 %v2790, %v2786
    %v3251 = vpack.c.b16 %v2791, %v2787
    %v3252 = vpack.c.b16 %v2792, %v2788
    %v3253 = vpack.c.b16 %v2797, %v2793
    %v3254 = vpack.c.b16 %v2798, %v2794
    %v3255 = vpack.c.b16 %v2799, %v2795
    %v3256 = vpack.c.b16 %v2800, %v2796
    %v3257 = vpack.c.b16 %v2805, %v2801
    %v3258 = vpack.c.b16 %v2806, %v2802
    %v3259 = vpack.c.b16 %v2807, %v2803
    %v3260 = vpack.c.b16 %v2808, %v2804
    %v3261 = vpack.c.b16 %v2813, %v2809
    %v3262 = vpack.c.b16 %v2814, %v2810
    %v3263 = vpack.c.b16 %v2815, %v2811
    %v3264 = vpack.c.b16 %v2816, %v2812
    %v3265 = vpack.c.b16 %v2821, %v2817
    %v3266 = vpack.c.b16 %v2822, %v2818
    %v3267 = vpack.c.b16 %v2823, %v2819
    %v3268 = vpack.c.b16 %v2824, %v2820
    %v3269 = vpack.c.b16 %v2829, %v2825
    %v3270 = vpack.c.b16 %v2830, %v2826
    %v3271 = vpack.c.b16 %v2831, %v2827
    %v3272 = vpack.c.b16 %v2832, %v2828
    %v3273 = vpack.c.b16 %v2837, %v2833
    %v3274 = vpack.c.b16 %v2838, %v2834
    %v3275 = vpack.c.b16 %v2839, %v2835
    %v3276 = vpack.c.b16 %v2840, %v2836
    %v3277 = vpack.c.b16 %v2845, %v2841
    %v3278 = vpack.c.b16 %v2846, %v2842
    %v3279 = vpack.c.b16 %v2847, %v2843
    %v3280 = vpack.c.b16 %v2848, %v2844
    %v3281 = vpack.c.b16 %v2853, %v2849
    %v3282 = vpack.c.b16 %v2854, %v2850
    %v3283 = vpack.c.b16 %v2855, %v2851
    %v3284 = vpack.c.b16 %v2856, %v2852
    %v3285 = vpack.c.b16 %v2861, %v2857
    %v3286 = vpack.c.b16 %v2862, %v2858
    %v3287 = vpack.c.b16 %v2863, %v2859
    %v3288 = vpack.c.b16 %v2864, %v2860
    %v3289 = vpack.c.b16 %v2869, %v2865
    %v3290 = vpack.c.b16 %v2870, %v2866
    %v3291 = vpack.c.b16 %v2871, %v2867
    %v3292 = vpack.c.b16 %v2872, %v2868
    %v3293 = vpack.c.b16 %v2877, %v2873
    %v3294 = vpack.c.b16 %v2878, %v2874
    %v3295 = vpack.c.b16 %v2879, %v2875
    %v3296 = vpack.c.b16 %v2880, %v2876
    %v3297 = vpack.c.b16 %v2885, %v2881
    %v3298 = vpack.c.b16 %v2886, %v2882
    %v3299 = vpack.c.b16 %v2887, %v2883
    %v3300 = vpack.c.b16 %v2888, %v2884
    %v3301 = vpack.c.b16 %v2893, %v2889
    %v3302 = vpack.c.b16 %v2894, %v2890
    %v3303 = vpack.c.b16 %v2895, %v2891
    %v3304 = vpack.c.b16 %v2896, %v2892
    %v3305 = vpack.c.b16 %v2901, %v2897
    %v3306 = vpack.c.b16 %v2902, %v2898
    %v3307 = vpack.c.b16 %v2903, %v2899
    %v3308 = vpack.c.b16 %v2904, %v2900
    %v3309 = vpack.c.b16 %v2909, %v2905
    %v3310 = vpack.c.b16 %v2910, %v2906
    %v3311 = vpack.c.b16 %v2911, %v2907
    %v3312 = vpack.c.b16 %v2912, %v2908
    %v3313 = vpack.c.b16 %v2917, %v2913
    %v3314 = vpack.c.b16 %v2918, %v2914
    %v3315 = vpack.c.b16 %v2919, %v2915
    %v3316 = vpack.c.b16 %v2920, %v2916
    %v3317 = vpack.c.b16 %v2925, %v2921
    %v3318 = vpack.c.b16 %v2926, %v2922
    %v3319 = vpack.c.b16 %v2927, %v2923
    %v3320 = vpack.c.b16 %v2928, %v2924
    %v3321 = vpack.c.b16 %v2933, %v2929
    %v3322 = vpack.c.b16 %v2934, %v2930
    %v3323 = vpack.c.b16 %v2935, %v2931
    %v3324 = vpack.c.b16 %v2936, %v2932
    %v3325 = vpack.c.b16 %v2941, %v2937
    %v3326 = vpack.c.b16 %v2942, %v2938
    %v3327 = vpack.c.b16 %v2943, %v2939
    %v3328 = vpack.c.b16 %v2944, %v2940
    %v3329 = vpack.c.b16 %v2949, %v2945
    %v3330 = vpack.c.b16 %v2950, %v2946
    %v3331 = vpack.c.b16 %v2951, %v2947
    %v3332 = vpack.c.b16 %v2952, %v2948
    %v3333 = vpack.c.b16 %v2957, %v2953
    %v3334 = vpack.c.b16 %v2958, %v2954
    %v3335 = vpack.c.b16 %v2959, %v2955
    %v3336 = vpack.c.b16 %v2960, %v2956
    %v3337 = vpack.c.b16 %v2965, %v2961
    %v3338 = vpack.c.b16 %v2966, %v2962
    %v3339 = vpack.c.b16 %v2967, %v2963
    %v3340 = vpack.c.b16 %v2968, %v2964
    %v3341 = vpack.c.b16 %v2973, %v2969
    %v3342 = vpack.c.b16 %v2974, %v2970
    %v3343 = vpack.c.b16 %v2975, %v2971
    %v3344 = vpack.c.b16 %v2976, %v2972
    %v3345 = vpack.c.b16 %v2981, %v2977
    %v3346 = vpack.c.b16 %v2982, %v2978
    %v3347 = vpack.c.b16 %v2983, %v2979
    %v3348 = vpack.c.b16 %v2984, %v2980
    %v3349 = vpack.c.b16 %v2989, %v2985
    %v3350 = vpack.c.b16 %v2990, %v2986
    %v3351 = vpack.c.b16 %v2991, %v2987
    %v3352 = vpack.c.b16 %v2992, %v2988
    %v3353 = vpack.c.b16 %v2997, %v2993
    %v3354 = vpack.c.b16 %v2998, %v2994
    %v3355 = vpack.c.b16 %v2999, %v2995
    %v3356 = vpack.c.b16 %v3000, %v2996
    %v3357 = vpack.c.b16 %v3005, %v3001
    %v3358 = vpack.c.b16 %v3006, %v3002
    %v3359 = vpack.c.b16 %v3007, %v3003
    %v3360 = vpack.c.b16 %v3008, %v3004
    %v3361 = vpack.c.b16 %v3013, %v3009
    %v3362 = vpack.c.b16 %v3014, %v3010
    %v3363 = vpack.c.b16 %v3015, %v3011
    %v3364 = vpack.c.b16 %v3016, %v3012
    %v3365 = vpack.c.b16 %v3021, %v3017
    %v3366 = vpack.c.b16 %v3022, %v3018
    %v3367 = vpack.c.b16 %v3023, %v3019
    %v3368 = vpack.c.b16 %v3024, %v3020
    %v3369 = vpack.c.b16 %v3029, %v3025
    %v3370 = vpack.c.b16 %v3030, %v3026
    %v3371 = vpack.c.b16 %v3031, %v3027
    %v3372 = vpack.c.b16 %v3032, %v3028
    %v3373 = vpack.c.b16 %v3037, %v3033
    %v3374 = vpack.c.b16 %v3038, %v3034
    %v3375 = vpack.c.b16 %v3039, %v3035
    %v3376 = vpack.c.b16 %v3040, %v3036
    %v3377 = vpack.c.b16 %v3045, %v3041
    %v3378 = vpack.c.b16 %v3046, %v3042
    %v3379 = vpack.c.b16 %v3047, %v3043
    %v3380 = vpack.c.b16 %v3048, %v3044
    %v3381 = vpack.c.b16 %v3053, %v3049
    %v3382 = vpack.c.b16 %v3054, %v3050
    %v3383 = vpack.c.b16 %v3055, %v3051
    %v3384 = vpack.c.b16 %v3056, %v3052
    %v3385 = vpack.c.b16 %v3061, %v3057
    %v3386 = vpack.c.b16 %v3062, %v3058
    %v3387 = vpack.c.b16 %v3063, %v3059
    %v3388 = vpack.c.b16 %v3064, %v3060
    %v3389 = vpack.c.b16 %v3069, %v3065
    %v3390 = vpack.c.b16 %v3070, %v3066
    %v3391 = vpack.c.b16 %v3071, %v3067
    %v3392 = vpack.c.b16 %v3072, %v3068
    %v3393 = vpack.c.b16 %v3077, %v3073
    %v3394 = vpack.c.b16 %v3078, %v3074
    %v3395 = vpack.c.b16 %v3079, %v3075
    %v3396 = vpack.c.b16 %v3080, %v3076
    %v3397 = vpack.c.b16 %v3085, %v3081
    %v3398 = vpack.c.b16 %v3086, %v3082
    %v3399 = vpack.c.b16 %v3087, %v3083
    %v3400 = vpack.c.b16 %v3088, %v3084
    %v3401 = vpack.c.b16 %v3093, %v3089
    %v3402 = vpack.c.b16 %v3094, %v3090
    %v3403 = vpack.c.b16 %v3095, %v3091
    %v3404 = vpack.c.b16 %v3096, %v3092
    %v3405 = vpack.c.b16 %v3101, %v3097
    %v3406 = vpack.c.b16 %v3102, %v3098
    %v3407 = vpack.c.b16 %v3103, %v3099
    %v3408 = vpack.c.b16 %v3104, %v3100
    %v3409 = vpack.c.b16 %v3109, %v3105
    %v3410 = vpack.c.b16 %v3110, %v3106
    %v3411 = vpack.c.b16 %v3111, %v3107
    %v3412 = vpack.c.b16 %v3112, %v3108
    %v3413 = vpack.c.b16 %v3117, %v3113
    %v3414 = vpack.c.b16 %v3118, %v3114
    %v3415 = vpack.c.b16 %v3119, %v3115
    %v3416 = vpack.c.b16 %v3120, %v3116
    %v3417 = vpack.c.b16 %v3125, %v3121
    %v3418 = vpack.c.b16 %v3126, %v3122
    %v3419 = vpack.c.b16 %v3127, %v3123
    %v3420 = vpack.c.b16 %v3128, %v3124
    %v3421 = vpack.c.b16 %v3133, %v3129
    %v3422 = vpack.c.b16 %v3134, %v3130
    %v3423 = vpack.c.b16 %v3135, %v3131
    %v3424 = vpack.c.b16 %v3136, %v3132
    %v3425 = vpack.c.b16 %v3141, %v3137
    %v3426 = vpack.c.b16 %v3142, %v3138
    %v3427 = vpack.c.b16 %v3143, %v3139
    %v3428 = vpack.c.b16 %v3144, %v3140
    %v3429 = vpack.c.b16 %v3149, %v3145
    %v3430 = vpack.c.b16 %v3150, %v3146
    %v3431 = vpack.c.b16 %v3151, %v3147
    %v3432 = vpack.c.b16 %v3152, %v3148
    %v3433 = vpack.c.b16 %v3157, %v3153
    %v3434 = vpack.c.b16 %v3158, %v3154
    %v3435 = vpack.c.b16 %v3159, %v3155
    %v3436 = vpack.c.b16 %v3160, %v3156
    %v3437 = vpack.c.b16 %v3165, %v3161
    %v3438 = vpack.c.b16 %v3166, %v3162
    %v3439 = vpack.c.b16 %v3167, %v3163
    %v3440 = vpack.c.b16 %v3168, %v3164
    %v3441 = vpack.c.b16 %v3173, %v3169
    %v3442 = vpack.c.b16 %v3174, %v3170
    %v3443 = vpack.c.b16 %v3175, %v3171
    %v3444 = vpack.c.b16 %v3176, %v3172
    %v3445 = vpack.c.b16 %v3181, %v3177
    %v3446 = vpack.c.b16 %v3182, %v3178
    %v3447 = vpack.c.b16 %v3183, %v3179
    %v3448 = vpack.c.b16 %v3184, %v3180
    %v3449 = vpack.c.b16 %v3189, %v3185
    %v3450 = vpack.c.b16 %v3190, %v3186
    %v3451 = vpack.c.b16 %v3191, %v3187
    %v3452 = vpack.c.b16 %v3192, %v3188
    %v3453 = vpack.c.b16 %v3197, %v3193
    %v3454 = vpack.c.b16 %v3198, %v3194
    %v3455 = vpack.c.b16 %v3199, %v3195
    %v3456 = vpack.c.b16 %v3200, %v3196
    %3713 = vmatpush.bf16.msra.mxu0 %v3229
    %3714 = vmatpush.bf16.msra.mxu0 %v3225
    %3715 = vmatpush.bf16.msra.mxu0 %v3221
    %3716 = vmatpush.bf16.msra.mxu0 %v3217
    %3717 = vmatpush.bf16.msra.mxu0 %v3213
    %3718 = vmatpush.bf16.msra.mxu0 %v3209
    %3719 = vmatpush.bf16.msra.mxu0 %v3205
    %3720 = vmatpush.bf16.msra.mxu0 %v3201
    %3721 = vmatmul.bf16.gmra.mxu0 %v2159
    %v3722 = vpop.f32.mrf.mxu0
    %v3723 = vadd.f32 %v2425, %v3722
    %v3724 = vpop.f32.mrf.mxu0
    %v3725 = vadd.f32 %v2425, %v3724
    %3726 = vdwg.mxu0
    %3727 = vmatpush.bf16.msra.mxu0 %v3261
    %3728 = vmatpush.bf16.msra.mxu0 %v3257
    %3729 = vmatpush.bf16.msra.mxu0 %v3253
    %3730 = vmatpush.bf16.msra.mxu0 %v3249
    %3731 = vmatpush.bf16.msra.mxu0 %v3245
    %3732 = vmatpush.bf16.msra.mxu0 %v3241
    %3733 = vmatpush.bf16.msra.mxu0 %v3237
    %3734 = vmatpush.bf16.msra.mxu0 %v3233
    %3735 = vmatmul.bf16.gmra.mxu0 %v2160
    %v3736 = vpop.f32.mrf.mxu0
    %v3737 = vadd.f32 %v3723, %v3736
    %v3738 = vpop.f32.mrf.mxu0
    %v3739 = vadd.f32 %v3725, %v3738
    %3740 = vdwg.mxu0
    %3741 = vmatpush.bf16.msra.mxu0 %v3293
    %3742 = vmatpush.bf16.msra.mxu0 %v3289
    %3743 = vmatpush.bf16.msra.mxu0 %v3285
    %3744 = vmatpush.bf16.msra.mxu0 %v3281
    %3745 = vmatpush.bf16.msra.mxu0 %v3277
    %3746 = vmatpush.bf16.msra.mxu0 %v3273
    %3747 = vmatpush.bf16.msra.mxu0 %v3269
    %3748 = vmatpush.bf16.msra.mxu0 %v3265
    %3749 = vmatmul.bf16.gmra.mxu0 %v2161
    %v3750 = vpop.f32.mrf.mxu0
    %v3751 = vadd.f32 %v3737, %v3750
    %v3752 = vpop.f32.mrf.mxu0
    %v3753 = vadd.f32 %v3739, %v3752
    %3754 = vdwg.mxu0
    %3755 = vmatpush.bf16.msra.mxu0 %v3325
    %3756 = vmatpush.bf16.msra.mxu0 %v3321
    %3757 = vmatpush.bf16.msra.mxu0 %v3317
    %3758 = vmatpush.bf16.msra.mxu0 %v3313
    %3759 = vmatpush.bf16.msra.mxu0 %v3309
    %3760 = vmatpush.bf16.msra.mxu0 %v3305
    %3761 = vmatpush.bf16.msra.mxu0 %v3301
    %3762 = vmatpush.bf16.msra.mxu0 %v3297
    %3763 = vmatmul.bf16.gmra.mxu0 %v2162
    %v3764 = vpop.f32.mrf.mxu0
    %v3765 = vadd.f32 %v3751, %v3764
    %v3766 = vpop.f32.mrf.mxu0
    %v3767 = vadd.f32 %v3753, %v3766
    %3768 = vdwg.mxu0
    %3769 = vmatpush.bf16.msra.mxu0 %v3357
    %3770 = vmatpush.bf16.msra.mxu0 %v3353
    %3771 = vmatpush.bf16.msra.mxu0 %v3349
    %3772 = vmatpush.bf16.msra.mxu0 %v3345
    %3773 = vmatpush.bf16.msra.mxu0 %v3341
    %3774 = vmatpush.bf16.msra.mxu0 %v3337
    %3775 = vmatpush.bf16.msra.mxu0 %v3333
    %3776 = vmatpush.bf16.msra.mxu0 %v3329
    %3777 = vmatmul.bf16.gmra.mxu0 %v2163
    %v3778 = vpop.f32.mrf.mxu0
    %v3779 = vadd.f32 %v3765, %v3778
    %v3780 = vpop.f32.mrf.mxu0
    %v3781 = vadd.f32 %v3767, %v3780
    %3782 = vdwg.mxu0
    %3783 = vmatpush.bf16.msra.mxu0 %v3389
    %3784 = vmatpush.bf16.msra.mxu0 %v3385
    %3785 = vmatpush.bf16.msra.mxu0 %v3381
    %3786 = vmatpush.bf16.msra.mxu0 %v3377
    %3787 = vmatpush.bf16.msra.mxu0 %v3373
    %3788 = vmatpush.bf16.msra.mxu0 %v3369
    %3789 = vmatpush.bf16.msra.mxu0 %v3365
    %3790 = vmatpush.bf16.msra.mxu0 %v3361
    %3791 = vmatmul.bf16.gmra.mxu0 %v2164
    %v3792 = vpop.f32.mrf.mxu0
    %v3793 = vadd.f32 %v3779, %v3792
    %v3794 = vpop.f32.mrf.mxu0
    %v3795 = vadd.f32 %v3781, %v3794
    %3796 = vdwg.mxu0
    %3797 = vmatpush.bf16.msra.mxu0 %v3421
    %3798 = vmatpush.bf16.msra.mxu0 %v3417
    %3799 = vmatpush.bf16.msra.mxu0 %v3413
    %3800 = vmatpush.bf16.msra.mxu0 %v3409
    %3801 = vmatpush.bf16.msra.mxu0 %v3405
    %3802 = vmatpush.bf16.msra.mxu0 %v3401
    %3803 = vmatpush.bf16.msra.mxu0 %v3397
    %3804 = vmatpush.bf16.msra.mxu0 %v3393
    %3805 = vmatmul.bf16.gmra.mxu0 %v2165
    %v3806 = vpop.f32.mrf.mxu0
    %v3807 = vadd.f32 %v3793, %v3806
    %v3808 = vpop.f32.mrf.mxu0
    %v3809 = vadd.f32 %v3795, %v3808
    %3810 = vdwg.mxu0
    %3811 = vmatpush.bf16.msra.mxu0 %v3453
    %3812 = vmatpush.bf16.msra.mxu0 %v3449
    %3813 = vmatpush.bf16.msra.mxu0 %v3445
    %3814 = vmatpush.bf16.msra.mxu0 %v3441
    %3815 = vmatpush.bf16.msra.mxu0 %v3437
    %3816 = vmatpush.bf16.msra.mxu0 %v3433
    %3817 = vmatpush.bf16.msra.mxu0 %v3429
    %3818 = vmatpush.bf16.msra.mxu0 %v3425
    %3819 = vmatmul.bf16.gmra.mxu0 %v2166
    %v3820 = vpop.f32.mrf.mxu0
    %v3821 = vadd.f32 %v3807, %v3820
    %v3822 = vpop.f32.mrf.mxu0
    %v3823 = vadd.f32 %v3809, %v3822
    %3824 = vdwg.mxu0
    %3825 = vmatpush.bf16.msra.mxu0 %v3230
    %3826 = vmatpush.bf16.msra.mxu0 %v3226
    %3827 = vmatpush.bf16.msra.mxu0 %v3222
    %3828 = vmatpush.bf16.msra.mxu0 %v3218
    %3829 = vmatpush.bf16.msra.mxu0 %v3214
    %3830 = vmatpush.bf16.msra.mxu0 %v3210
    %3831 = vmatpush.bf16.msra.mxu0 %v3206
    %3832 = vmatpush.bf16.msra.mxu0 %v3202
    %3833 = vmatmul.bf16.gmra.mxu0 %v2159
    %v3834 = vpop.f32.mrf.mxu0
    %v3835 = vadd.f32 %v2426, %v3834
    %v3836 = vpop.f32.mrf.mxu0
    %v3837 = vadd.f32 %v2426, %v3836
    %3838 = vdwg.mxu0
    %3839 = vmatpush.bf16.msra.mxu0 %v3262
    %3840 = vmatpush.bf16.msra.mxu0 %v3258
    %3841 = vmatpush.bf16.msra.mxu0 %v3254
    %3842 = vmatpush.bf16.msra.mxu0 %v3250
    %3843 = vmatpush.bf16.msra.mxu0 %v3246
    %3844 = vmatpush.bf16.msra.mxu0 %v3242
    %3845 = vmatpush.bf16.msra.mxu0 %v3238
    %3846 = vmatpush.bf16.msra.mxu0 %v3234
    %3847 = vmatmul.bf16.gmra.mxu0 %v2160
    %v3848 = vpop.f32.mrf.mxu0
    %v3849 = vadd.f32 %v3835, %v3848
    %v3850 = vpop.f32.mrf.mxu0
    %v3851 = vadd.f32 %v3837, %v3850
    %3852 = vdwg.mxu0
    %3853 = vmatpush.bf16.msra.mxu0 %v3294
    %3854 = vmatpush.bf16.msra.mxu0 %v3290
    %3855 = vmatpush.bf16.msra.mxu0 %v3286
    %3856 = vmatpush.bf16.msra.mxu0 %v3282
    %3857 = vmatpush.bf16.msra.mxu0 %v3278
    %3858 = vmatpush.bf16.msra.mxu0 %v3274
    %3859 = vmatpush.bf16.msra.mxu0 %v3270
    %3860 = vmatpush.bf16.msra.mxu0 %v3266
    %3861 = vmatmul.bf16.gmra.mxu0 %v2161
    %v3862 = vpop.f32.mrf.mxu0
    %v3863 = vadd.f32 %v3849, %v3862
    %v3864 = vpop.f32.mrf.mxu0
    %v3865 = vadd.f32 %v3851, %v3864
    %3866 = vdwg.mxu0
    %3867 = vmatpush.bf16.msra.mxu0 %v3326
    %3868 = vmatpush.bf16.msra.mxu0 %v3322
    %3869 = vmatpush.bf16.msra.mxu0 %v3318
    %3870 = vmatpush.bf16.msra.mxu0 %v3314
    %3871 = vmatpush.bf16.msra.mxu0 %v3310
    %3872 = vmatpush.bf16.msra.mxu0 %v3306
    %3873 = vmatpush.bf16.msra.mxu0 %v3302
    %3874 = vmatpush.bf16.msra.mxu0 %v3298
    %3875 = vmatmul.bf16.gmra.mxu0 %v2162
    %v3876 = vpop.f32.mrf.mxu0
    %v3877 = vadd.f32 %v3863, %v3876
    %v3878 = vpop.f32.mrf.mxu0
    %v3879 = vadd.f32 %v3865, %v3878
    %3880 = vdwg.mxu0
    %3881 = vmatpush.bf16.msra.mxu0 %v3358
    %3882 = vmatpush.bf16.msra.mxu0 %v3354
    %3883 = vmatpush.bf16.msra.mxu0 %v3350
    %3884 = vmatpush.bf16.msra.mxu0 %v3346
    %3885 = vmatpush.bf16.msra.mxu0 %v3342
    %3886 = vmatpush.bf16.msra.mxu0 %v3338
    %3887 = vmatpush.bf16.msra.mxu0 %v3334
    %3888 = vmatpush.bf16.msra.mxu0 %v3330
    %3889 = vmatmul.bf16.gmra.mxu0 %v2163
    %v3890 = vpop.f32.mrf.mxu0
    %v3891 = vadd.f32 %v3877, %v3890
    %v3892 = vpop.f32.mrf.mxu0
    %v3893 = vadd.f32 %v3879, %v3892
    %3894 = vdwg.mxu0
    %3895 = vmatpush.bf16.msra.mxu0 %v3390
    %3896 = vmatpush.bf16.msra.mxu0 %v3386
    %3897 = vmatpush.bf16.msra.mxu0 %v3382
    %3898 = vmatpush.bf16.msra.mxu0 %v3378
    %3899 = vmatpush.bf16.msra.mxu0 %v3374
    %3900 = vmatpush.bf16.msra.mxu0 %v3370
    %3901 = vmatpush.bf16.msra.mxu0 %v3366
    %3902 = vmatpush.bf16.msra.mxu0 %v3362
    %3903 = vmatmul.bf16.gmra.mxu0 %v2164
    %v3904 = vpop.f32.mrf.mxu0
    %v3905 = vadd.f32 %v3891, %v3904
    %v3906 = vpop.f32.mrf.mxu0
    %v3907 = vadd.f32 %v3893, %v3906
    %3908 = vdwg.mxu0
    %3909 = vmatpush.bf16.msra.mxu0 %v3422
    %3910 = vmatpush.bf16.msra.mxu0 %v3418
    %3911 = vmatpush.bf16.msra.mxu0 %v3414
    %3912 = vmatpush.bf16.msra.mxu0 %v3410
    %3913 = vmatpush.bf16.msra.mxu0 %v3406
    %3914 = vmatpush.bf16.msra.mxu0 %v3402
    %3915 = vmatpush.bf16.msra.mxu0 %v3398
    %3916 = vmatpush.bf16.msra.mxu0 %v3394
    %3917 = vmatmul.bf16.gmra.mxu0 %v2165
    %v3918 = vpop.f32.mrf.mxu0
    %v3919 = vadd.f32 %v3905, %v3918
    %v3920 = vpop.f32.mrf.mxu0
    %v3921 = vadd.f32 %v3907, %v3920
    %3922 = vdwg.mxu0
    %3923 = vmatpush.bf16.msra.mxu0 %v3454
    %3924 = vmatpush.bf16.msra.mxu0 %v3450
    %3925 = vmatpush.bf16.msra.mxu0 %v3446
    %3926 = vmatpush.bf16.msra.mxu0 %v3442
    %3927 = vmatpush.bf16.msra.mxu0 %v3438
    %3928 = vmatpush.bf16.msra.mxu0 %v3434
    %3929 = vmatpush.bf16.msra.mxu0 %v3430
    %3930 = vmatpush.bf16.msra.mxu0 %v3426
    %3931 = vmatmul.bf16.gmra.mxu0 %v2166
    %v3932 = vpop.f32.mrf.mxu0
    %v3933 = vadd.f32 %v3919, %v3932
    %v3934 = vpop.f32.mrf.mxu0
    %v3935 = vadd.f32 %v3921, %v3934
    %3936 = vdwg.mxu0
    %3937 = vmatpush.bf16.msra.mxu0 %v3231
    %3938 = vmatpush.bf16.msra.mxu0 %v3227
    %3939 = vmatpush.bf16.msra.mxu0 %v3223
    %3940 = vmatpush.bf16.msra.mxu0 %v3219
    %3941 = vmatpush.bf16.msra.mxu0 %v3215
    %3942 = vmatpush.bf16.msra.mxu0 %v3211
    %3943 = vmatpush.bf16.msra.mxu0 %v3207
    %3944 = vmatpush.bf16.msra.mxu0 %v3203
    %3945 = vmatmul.bf16.gmra.mxu0 %v2159
    %v3946 = vpop.f32.mrf.mxu0
    %v3947 = vadd.f32 %v2427, %v3946
    %v3948 = vpop.f32.mrf.mxu0
    %v3949 = vadd.f32 %v2427, %v3948
    %3950 = vdwg.mxu0
    %3951 = vmatpush.bf16.msra.mxu0 %v3263
    %3952 = vmatpush.bf16.msra.mxu0 %v3259
    %3953 = vmatpush.bf16.msra.mxu0 %v3255
    %3954 = vmatpush.bf16.msra.mxu0 %v3251
    %3955 = vmatpush.bf16.msra.mxu0 %v3247
    %3956 = vmatpush.bf16.msra.mxu0 %v3243
    %3957 = vmatpush.bf16.msra.mxu0 %v3239
    %3958 = vmatpush.bf16.msra.mxu0 %v3235
    %3959 = vmatmul.bf16.gmra.mxu0 %v2160
    %v3960 = vpop.f32.mrf.mxu0
    %v3961 = vadd.f32 %v3947, %v3960
    %v3962 = vpop.f32.mrf.mxu0
    %v3963 = vadd.f32 %v3949, %v3962
    %3964 = vdwg.mxu0
    %3965 = vmatpush.bf16.msra.mxu0 %v3295
    %3966 = vmatpush.bf16.msra.mxu0 %v3291
    %3967 = vmatpush.bf16.msra.mxu0 %v3287
    %3968 = vmatpush.bf16.msra.mxu0 %v3283
    %3969 = vmatpush.bf16.msra.mxu0 %v3279
    %3970 = vmatpush.bf16.msra.mxu0 %v3275
    %3971 = vmatpush.bf16.msra.mxu0 %v3271
    %3972 = vmatpush.bf16.msra.mxu0 %v3267
    %3973 = vmatmul.bf16.gmra.mxu0 %v2161
    %v3974 = vpop.f32.mrf.mxu0
    %v3975 = vadd.f32 %v3961, %v3974
    %v3976 = vpop.f32.mrf.mxu0
    %v3977 = vadd.f32 %v3963, %v3976
    %3978 = vdwg.mxu0
    %3979 = vmatpush.bf16.msra.mxu0 %v3327
    %3980 = vmatpush.bf16.msra.mxu0 %v3323
    %3981 = vmatpush.bf16.msra.mxu0 %v3319
    %3982 = vmatpush.bf16.msra.mxu0 %v3315
    %3983 = vmatpush.bf16.msra.mxu0 %v3311
    %3984 = vmatpush.bf16.msra.mxu0 %v3307
    %3985 = vmatpush.bf16.msra.mxu0 %v3303
    %3986 = vmatpush.bf16.msra.mxu0 %v3299
    %3987 = vmatmul.bf16.gmra.mxu0 %v2162
    %v3988 = vpop.f32.mrf.mxu0
    %v3989 = vadd.f32 %v3975, %v3988
    %v3990 = vpop.f32.mrf.mxu0
    %v3991 = vadd.f32 %v3977, %v3990
    %3992 = vdwg.mxu0
    %3993 = vmatpush.bf16.msra.mxu0 %v3359
    %3994 = vmatpush.bf16.msra.mxu0 %v3355
    %3995 = vmatpush.bf16.msra.mxu0 %v3351
    %3996 = vmatpush.bf16.msra.mxu0 %v3347
    %3997 = vmatpush.bf16.msra.mxu0 %v3343
    %3998 = vmatpush.bf16.msra.mxu0 %v3339
    %3999 = vmatpush.bf16.msra.mxu0 %v3335
    %4000 = vmatpush.bf16.msra.mxu0 %v3331
    %4001 = vmatmul.bf16.gmra.mxu0 %v2163
    %v4002 = vpop.f32.mrf.mxu0
    %v4003 = vadd.f32 %v3989, %v4002
    %v4004 = vpop.f32.mrf.mxu0
    %v4005 = vadd.f32 %v3991, %v4004
    %4006 = vdwg.mxu0
    %4007 = vmatpush.bf16.msra.mxu0 %v3391
    %4008 = vmatpush.bf16.msra.mxu0 %v3387
    %4009 = vmatpush.bf16.msra.mxu0 %v3383
    %4010 = vmatpush.bf16.msra.mxu0 %v3379
    %4011 = vmatpush.bf16.msra.mxu0 %v3375
    %4012 = vmatpush.bf16.msra.mxu0 %v3371
    %4013 = vmatpush.bf16.msra.mxu0 %v3367
    %4014 = vmatpush.bf16.msra.mxu0 %v3363
    %4015 = vmatmul.bf16.gmra.mxu0 %v2164
    %v4016 = vpop.f32.mrf.mxu0
    %v4017 = vadd.f32 %v4003, %v4016
    %v4018 = vpop.f32.mrf.mxu0
    %v4019 = vadd.f32 %v4005, %v4018
    %4020 = vdwg.mxu0
    %4021 = vmatpush.bf16.msra.mxu0 %v3423
    %4022 = vmatpush.bf16.msra.mxu0 %v3419
    %4023 = vmatpush.bf16.msra.mxu0 %v3415
    %4024 = vmatpush.bf16.msra.mxu0 %v3411
    %4025 = vmatpush.bf16.msra.mxu0 %v3407
    %4026 = vmatpush.bf16.msra.mxu0 %v3403
    %4027 = vmatpush.bf16.msra.mxu0 %v3399
    %4028 = vmatpush.bf16.msra.mxu0 %v3395
    %4029 = vmatmul.bf16.gmra.mxu0 %v2165
    %v4030 = vpop.f32.mrf.mxu0
    %v4031 = vadd.f32 %v4017, %v4030
    %v4032 = vpop.f32.mrf.mxu0
    %v4033 = vadd.f32 %v4019, %v4032
    %4034 = vdwg.mxu0
    %4035 = vmatpush.bf16.msra.mxu0 %v3455
    %4036 = vmatpush.bf16.msra.mxu0 %v3451
    %4037 = vmatpush.bf16.msra.mxu0 %v3447
    %4038 = vmatpush.bf16.msra.mxu0 %v3443
    %4039 = vmatpush.bf16.msra.mxu0 %v3439
    %4040 = vmatpush.bf16.msra.mxu0 %v3435
    %4041 = vmatpush.bf16.msra.mxu0 %v3431
    %4042 = vmatpush.bf16.msra.mxu0 %v3427
    %4043 = vmatmul.bf16.gmra.mxu0 %v2166
    %v4044 = vpop.f32.mrf.mxu0
    %v4045 = vadd.f32 %v4031, %v4044
    %v4046 = vpop.f32.mrf.mxu0
    %v4047 = vadd.f32 %v4033, %v4046
    %4048 = vdwg.mxu0
    %4049 = vmatpush.bf16.msra.mxu0 %v3232
    %4050 = vmatpush.bf16.msra.mxu0 %v3228
    %4051 = vmatpush.bf16.msra.mxu0 %v3224
    %4052 = vmatpush.bf16.msra.mxu0 %v3220
    %4053 = vmatpush.bf16.msra.mxu0 %v3216
    %4054 = vmatpush.bf16.msra.mxu0 %v3212
    %4055 = vmatpush.bf16.msra.mxu0 %v3208
    %4056 = vmatpush.bf16.msra.mxu0 %v3204
    %4057 = vmatmul.bf16.gmra.mxu0 %v2159
    %v4058 = vpop.f32.mrf.mxu0
    %v4059 = vadd.f32 %v2428, %v4058
    %v4060 = vpop.f32.mrf.mxu0
    %v4061 = vadd.f32 %v2428, %v4060
    %4062 = vdwg.mxu0
    %4063 = vmatpush.bf16.msra.mxu0 %v3264
    %4064 = vmatpush.bf16.msra.mxu0 %v3260
    %4065 = vmatpush.bf16.msra.mxu0 %v3256
    %4066 = vmatpush.bf16.msra.mxu0 %v3252
    %4067 = vmatpush.bf16.msra.mxu0 %v3248
    %4068 = vmatpush.bf16.msra.mxu0 %v3244
    %4069 = vmatpush.bf16.msra.mxu0 %v3240
    %4070 = vmatpush.bf16.msra.mxu0 %v3236
    %4071 = vmatmul.bf16.gmra.mxu0 %v2160
    %v4072 = vpop.f32.mrf.mxu0
    %v4073 = vadd.f32 %v4059, %v4072
    %v4074 = vpop.f32.mrf.mxu0
    %v4075 = vadd.f32 %v4061, %v4074
    %4076 = vdwg.mxu0
    %4077 = vmatpush.bf16.msra.mxu0 %v3296
    %4078 = vmatpush.bf16.msra.mxu0 %v3292
    %4079 = vmatpush.bf16.msra.mxu0 %v3288
    %4080 = vmatpush.bf16.msra.mxu0 %v3284
    %4081 = vmatpush.bf16.msra.mxu0 %v3280
    %4082 = vmatpush.bf16.msra.mxu0 %v3276
    %4083 = vmatpush.bf16.msra.mxu0 %v3272
    %4084 = vmatpush.bf16.msra.mxu0 %v3268
    %4085 = vmatmul.bf16.gmra.mxu0 %v2161
    %v4086 = vpop.f32.mrf.mxu0
    %v4087 = vadd.f32 %v4073, %v4086
    %v4088 = vpop.f32.mrf.mxu0
    %v4089 = vadd.f32 %v4075, %v4088
    %4090 = vdwg.mxu0
    %4091 = vmatpush.bf16.msra.mxu0 %v3328
    %4092 = vmatpush.bf16.msra.mxu0 %v3324
    %4093 = vmatpush.bf16.msra.mxu0 %v3320
    %4094 = vmatpush.bf16.msra.mxu0 %v3316
    %4095 = vmatpush.bf16.msra.mxu0 %v3312
    %4096 = vmatpush.bf16.msra.mxu0 %v3308
    %4097 = vmatpush.bf16.msra.mxu0 %v3304
    %4098 = vmatpush.bf16.msra.mxu0 %v3300
    %4099 = vmatmul.bf16.gmra.mxu0 %v2162
    %v4100 = vpop.f32.mrf.mxu0
    %v4101 = vadd.f32 %v4087, %v4100
    %v4102 = vpop.f32.mrf.mxu0
    %v4103 = vadd.f32 %v4089, %v4102
    %4104 = vdwg.mxu0
    %4105 = vmatpush.bf16.msra.mxu0 %v3360
    %4106 = vmatpush.bf16.msra.mxu0 %v3356
    %4107 = vmatpush.bf16.msra.mxu0 %v3352
    %4108 = vmatpush.bf16.msra.mxu0 %v3348
    %4109 = vmatpush.bf16.msra.mxu0 %v3344
    %4110 = vmatpush.bf16.msra.mxu0 %v3340
    %4111 = vmatpush.bf16.msra.mxu0 %v3336
    %4112 = vmatpush.bf16.msra.mxu0 %v3332
    %4113 = vmatmul.bf16.gmra.mxu0 %v2163
    %v4114 = vpop.f32.mrf.mxu0
    %v4115 = vadd.f32 %v4101, %v4114
    %v4116 = vpop.f32.mrf.mxu0
    %v4117 = vadd.f32 %v4103, %v4116
    %4118 = vdwg.mxu0
    %4119 = vmatpush.bf16.msra.mxu0 %v3392
    %4120 = vmatpush.bf16.msra.mxu0 %v3388
    %4121 = vmatpush.bf16.msra.mxu0 %v3384
    %4122 = vmatpush.bf16.msra.mxu0 %v3380
    %4123 = vmatpush.bf16.msra.mxu0 %v3376
    %4124 = vmatpush.bf16.msra.mxu0 %v3372
    %4125 = vmatpush.bf16.msra.mxu0 %v3368
    %4126 = vmatpush.bf16.msra.mxu0 %v3364
    %4127 = vmatmul.bf16.gmra.mxu0 %v2164
    %v4128 = vpop.f32.mrf.mxu0
    %v4129 = vadd.f32 %v4115, %v4128
    %v4130 = vpop.f32.mrf.mxu0
    %v4131 = vadd.f32 %v4117, %v4130
    %4132 = vdwg.mxu0
    %4133 = vmatpush.bf16.msra.mxu0 %v3424
    %4134 = vmatpush.bf16.msra.mxu0 %v3420
    %4135 = vmatpush.bf16.msra.mxu0 %v3416
    %4136 = vmatpush.bf16.msra.mxu0 %v3412
    %4137 = vmatpush.bf16.msra.mxu0 %v3408
    %4138 = vmatpush.bf16.msra.mxu0 %v3404
    %4139 = vmatpush.bf16.msra.mxu0 %v3400
    %4140 = vmatpush.bf16.msra.mxu0 %v3396
    %4141 = vmatmul.bf16.gmra.mxu0 %v2165
    %v4142 = vpop.f32.mrf.mxu0
    %v4143 = vadd.f32 %v4129, %v4142
    %v4144 = vpop.f32.mrf.mxu0
    %v4145 = vadd.f32 %v4131, %v4144
    %4146 = vdwg.mxu0
    %4147 = vmatpush.bf16.msra.mxu0 %v3456
    %4148 = vmatpush.bf16.msra.mxu0 %v3452
    %4149 = vmatpush.bf16.msra.mxu0 %v3448
    %4150 = vmatpush.bf16.msra.mxu0 %v3444
    %4151 = vmatpush.bf16.msra.mxu0 %v3440
    %4152 = vmatpush.bf16.msra.mxu0 %v3436
    %4153 = vmatpush.bf16.msra.mxu0 %v3432
    %4154 = vmatpush.bf16.msra.mxu0 %v3428
    %4155 = vmatmul.bf16.gmra.mxu0 %v2166
    %v4156 = vpop.f32.mrf.mxu0
    %v4157 = vadd.f32 %v4143, %v4156
    %v4158 = vpop.f32.mrf.mxu0
    %v4159 = vadd.f32 %v4145, %v4158
    %4160 = vdwg.mxu0
    %v4161 = vmax.f32 %v3821, 0.0
    %v4162 = vmax.f32 %v3933, 0.0
    %v4163 = vmax.f32 %v4045, 0.0
    %v4164 = vmax.f32 %v4157, 0.0
    %v4165 = vmax.f32 %v3823, 0.0
    %v4166 = vmax.f32 %v3935, 0.0
    %v4167 = vmax.f32 %v4047, 0.0
    %v4168 = vmax.f32 %v4159, 0.0
    %v4169 = vpack.c.bf16 %v4165, %v4161
    %v4170 = vpack.c.bf16 %v4166, %v4162
    %v4171 = vpack.c.bf16 %v4167, %v4163
    %v4172 = vpack.c.bf16 %v4168, %v4164
    %v4173 = vld [vmem:[#allocation11] sm:$0xf]
    %v4174 = vld [vmem:[#allocation11 + $0x4] sm:$0xf]
    %v4175 = vld [vmem:[#allocation11 + $0x8] sm:$0xf]
    %v4176 = vld [vmem:[#allocation11 + $0xc] sm:$0xf]
    %v4177 = vld [vmem:[#allocation11 + $0x10] sm:$0xf]
    %v4178 = vld [vmem:[#allocation11 + $0x14] sm:$0xf]
    %v4179 = vld [vmem:[#allocation11 + $0x18] sm:$0xf]
    %v4180 = vld [vmem:[#allocation11 + $0x1c] sm:$0xf]
    %v4181 = vld [vmem:[#allocation11 + $0x20] sm:$0xf]
    %v4182 = vld [vmem:[#allocation11 + $0x24] sm:$0xf]
    %v4183 = vld [vmem:[#allocation11 + $0x28] sm:$0xf]
    %v4184 = vld [vmem:[#allocation11 + $0x2c] sm:$0xf]
    %v4185 = vld [vmem:[#allocation11 + $0x30] sm:$0xf]
    %v4186 = vld [vmem:[#allocation11 + $0x34] sm:$0xf]
    %v4187 = vld [vmem:[#allocation11 + $0x38] sm:$0xf]
    %v4188 = vld [vmem:[#allocation11 + $0x3c] sm:$0xf]
    %v4189 = vld [vmem:[#allocation11 + $0x40] sm:$0xf]
    %v4190 = vld [vmem:[#allocation11 + $0x44] sm:$0xf]
    %v4191 = vld [vmem:[#allocation11 + $0x48] sm:$0xf]
    %v4192 = vld [vmem:[#allocation11 + $0x4c] sm:$0xf]
    %v4193 = vld [vmem:[#allocation11 + $0x50] sm:$0xf]
    %v4194 = vld [vmem:[#allocation11 + $0x54] sm:$0xf]
    %v4195 = vld [vmem:[#allocation11 + $0x58] sm:$0xf]
    %v4196 = vld [vmem:[#allocation11 + $0x5c] sm:$0xf]
    %v4197 = vld [vmem:[#allocation11 + $0x60] sm:$0xf]
    %v4198 = vld [vmem:[#allocation11 + $0x64] sm:$0xf]
    %v4199 = vld [vmem:[#allocation11 + $0x68] sm:$0xf]
    %v4200 = vld [vmem:[#allocation11 + $0x6c] sm:$0xf]
    %v4201 = vld [vmem:[#allocation11 + $0x70] sm:$0xf]
    %v4202 = vld [vmem:[#allocation11 + $0x74] sm:$0xf]
    %v4203 = vld [vmem:[#allocation11 + $0x78] sm:$0xf]
    %v4204 = vld [vmem:[#allocation11 + $0x7c] sm:$0xf]
    %v4205 = vld [vmem:[#allocation11 + $0x80] sm:$0xf]
    %v4206 = vld [vmem:[#allocation11 + $0x84] sm:$0xf]
    %v4207 = vld [vmem:[#allocation11 + $0x88] sm:$0xf]
    %v4208 = vld [vmem:[#allocation11 + $0x8c] sm:$0xf]
    %v4209 = vld [vmem:[#allocation11 + $0x90] sm:$0xf]
    %v4210 = vld [vmem:[#allocation11 + $0x94] sm:$0xf]
    %v4211 = vld [vmem:[#allocation11 + $0x98] sm:$0xf]
    %v4212 = vld [vmem:[#allocation11 + $0x9c] sm:$0xf]
    %v4213 = vld [vmem:[#allocation11 + $0xa0] sm:$0xf]
    %v4214 = vld [vmem:[#allocation11 + $0xa4] sm:$0xf]
    %v4215 = vld [vmem:[#allocation11 + $0xa8] sm:$0xf]
    %v4216 = vld [vmem:[#allocation11 + $0xac] sm:$0xf]
    %v4217 = vld [vmem:[#allocation11 + $0xb0] sm:$0xf]
    %v4218 = vld [vmem:[#allocation11 + $0xb4] sm:$0xf]
    %v4219 = vld [vmem:[#allocation11 + $0xb8] sm:$0xf]
    %v4220 = vld [vmem:[#allocation11 + $0xbc] sm:$0xf]
    %v4221 = vld [vmem:[#allocation11 + $0xc0] sm:$0xf]
    %v4222 = vld [vmem:[#allocation11 + $0xc4] sm:$0xf]
    %v4223 = vld [vmem:[#allocation11 + $0xc8] sm:$0xf]
    %v4224 = vld [vmem:[#allocation11 + $0xcc] sm:$0xf]
    %v4225 = vld [vmem:[#allocation11 + $0xd0] sm:$0xf]
    %v4226 = vld [vmem:[#allocation11 + $0xd4] sm:$0xf]
    %v4227 = vld [vmem:[#allocation11 + $0xd8] sm:$0xf]
    %v4228 = vld [vmem:[#allocation11 + $0xdc] sm:$0xf]
    %v4229 = vld [vmem:[#allocation11 + $0xe0] sm:$0xf]
    %v4230 = vld [vmem:[#allocation11 + $0xe4] sm:$0xf]
    %v4231 = vld [vmem:[#allocation11 + $0xe8] sm:$0xf]
    %v4232 = vld [vmem:[#allocation11 + $0xec] sm:$0xf]
    %v4233 = vld [vmem:[#allocation11 + $0xf0] sm:$0xf]
    %v4234 = vld [vmem:[#allocation11 + $0xf4] sm:$0xf]
    %v4235 = vld [vmem:[#allocation11 + $0xf8] sm:$0xf]
    %v4236 = vld [vmem:[#allocation11 + $0xfc] sm:$0xf]
    %v4237 = vld [vmem:[%s6] sm:$0x1]
    %v4239 = vperm.slane %v4237, 0
    %v4305 = vunpack.c.l.b16 %v4173
    %v4306 = vunpack.c.l.b16 %v4174
    %v4307 = vunpack.c.l.b16 %v4175
    %v4308 = vunpack.c.l.b16 %v4176
    %v4309 = vunpack.c.l.b16 %v4177
    %v4310 = vunpack.c.l.b16 %v4178
    %v4311 = vunpack.c.l.b16 %v4179
    %v4312 = vunpack.c.l.b16 %v4180
    %v4313 = vunpack.c.l.b16 %v4181
    %v4314 = vunpack.c.l.b16 %v4182
    %v4315 = vunpack.c.l.b16 %v4183
    %v4316 = vunpack.c.l.b16 %v4184
    %v4317 = vunpack.c.l.b16 %v4185
    %v4318 = vunpack.c.l.b16 %v4186
    %v4319 = vunpack.c.l.b16 %v4187
    %v4320 = vunpack.c.l.b16 %v4188
    %v4321 = vunpack.c.l.b16 %v4189
    %v4322 = vunpack.c.l.b16 %v4190
    %v4323 = vunpack.c.l.b16 %v4191
    %v4324 = vunpack.c.l.b16 %v4192
    %v4325 = vunpack.c.l.b16 %v4193
    %v4326 = vunpack.c.l.b16 %v4194
    %v4327 = vunpack.c.l.b16 %v4195
    %v4328 = vunpack.c.l.b16 %v4196
    %v4329 = vunpack.c.l.b16 %v4197
    %v4330 = vunpack.c.l.b16 %v4198
    %v4331 = vunpack.c.l.b16 %v4199
    %v4332 = vunpack.c.l.b16 %v4200
    %v4333 = vunpack.c.l.b16 %v4201
    %v4334 = vunpack.c.l.b16 %v4202
    %v4335 = vunpack.c.l.b16 %v4203
    %v4336 = vunpack.c.l.b16 %v4204
    %v4337 = vunpack.c.l.b16 %v4205
    %v4338 = vunpack.c.l.b16 %v4206
    %v4339 = vunpack.c.l.b16 %v4207
    %v4340 = vunpack.c.l.b16 %v4208
    %v4341 = vunpack.c.l.b16 %v4209
    %v4342 = vunpack.c.l.b16 %v4210
    %v4343 = vunpack.c.l.b16 %v4211
    %v4344 = vunpack.c.l.b16 %v4212
    %v4345 = vunpack.c.l.b16 %v4213
    %v4346 = vunpack.c.l.b16 %v4214
    %v4347 = vunpack.c.l.b16 %v4215
    %v4348 = vunpack.c.l.b16 %v4216
    %v4349 = vunpack.c.l.b16 %v4217
    %v4350 = vunpack.c.l.b16 %v4218
    %v4351 = vunpack.c.l.b16 %v4219
    %v4352 = vunpack.c.l.b16 %v4220
    %v4353 = vunpack.c.l.b16 %v4221
    %v4354 = vunpack.c.l.b16 %v4222
    %v4355 = vunpack.c.l.b16 %v4223
    %v4356 = vunpack.c.l.b16 %v4224
    %v4357 = vunpack.c.l.b16 %v4225
    %v4358 = vunpack.c.l.b16 %v4226
    %v4359 = vunpack.c.l.b16 %v4227
    %v4360 = vunpack.c.l.b16 %v4228
    %v4361 = vunpack.c.l.b16 %v4229
    %v4362 = vunpack.c.l.b16 %v4230
    %v4363 = vunpack.c.l.b16 %v4231
    %v4364 = vunpack.c.l.b16 %v4232
    %v4365 = vunpack.c.l.b16 %v4233
    %v4366 = vunpack.c.l.b16 %v4234
    %v4367 = vunpack.c.l.b16 %v4235
    %v4368 = vunpack.c.l.b16 %v4236
    %v4369 = vpack.c.b16 %v4306, %v4305
    %v4370 = vpack.c.b16 %v4308, %v4307
    %v4371 = vpack.c.b16 %v4310, %v4309
    %v4372 = vpack.c.b16 %v4312, %v4311
    %v4373 = vpack.c.b16 %v4314, %v4313
    %v4374 = vpack.c.b16 %v4316, %v4315
    %v4375 = vpack.c.b16 %v4318, %v4317
    %v4376 = vpack.c.b16 %v4320, %v4319
    %v4377 = vpack.c.b16 %v4322, %v4321
    %v4378 = vpack.c.b16 %v4324, %v4323
    %v4379 = vpack.c.b16 %v4326, %v4325
    %v4380 = vpack.c.b16 %v4328, %v4327
    %v4381 = vpack.c.b16 %v4330, %v4329
    %v4382 = vpack.c.b16 %v4332, %v4331
    %v4383 = vpack.c.b16 %v4334, %v4333
    %v4384 = vpack.c.b16 %v4336, %v4335
    %v4385 = vpack.c.b16 %v4338, %v4337
    %v4386 = vpack.c.b16 %v4340, %v4339
    %v4387 = vpack.c.b16 %v4342, %v4341
    %v4388 = vpack.c.b16 %v4344, %v4343
    %v4389 = vpack.c.b16 %v4346, %v4345
    %v4390 = vpack.c.b16 %v4348, %v4347
    %v4391 = vpack.c.b16 %v4350, %v4349
    %v4392 = vpack.c.b16 %v4352, %v4351
    %v4393 = vpack.c.b16 %v4354, %v4353
    %v4394 = vpack.c.b16 %v4356, %v4355
    %v4395 = vpack.c.b16 %v4358, %v4357
    %v4396 = vpack.c.b16 %v4360, %v4359
    %v4397 = vpack.c.b16 %v4362, %v4361
    %v4398 = vpack.c.b16 %v4364, %v4363
    %v4399 = vpack.c.b16 %v4366, %v4365
    %v4400 = vpack.c.b16 %v4368, %v4367
    %4433 = vmatpush.bf16.msra.mxu0 %v4376
    %4434 = vmatpush.bf16.msra.mxu0 %v4375
    %4435 = vmatpush.bf16.msra.mxu0 %v4374
    %4436 = vmatpush.bf16.msra.mxu0 %v4373
    %4437 = vmatpush.bf16.msra.mxu0 %v4372
    %4438 = vmatpush.bf16.msra.mxu0 %v4371
    %4439 = vmatpush.bf16.msra.mxu0 %v4370
    %4440 = vmatpush.bf16.msra.mxu0 %v4369
    %4441 = vmatmul.bf16.gmra.mxu0 %v4169
    %v4442 = vpop.f32.mrf.mxu0
    %v4443 = vadd.f32 %v4239, %v4442
    %v4444 = vpop.f32.mrf.mxu0
    %v4445 = vadd.f32 %v4239, %v4444
    %4446 = vdwg.mxu0
    %4447 = vmatpush.bf16.msra.mxu0 %v4384
    %4448 = vmatpush.bf16.msra.mxu0 %v4383
    %4449 = vmatpush.bf16.msra.mxu0 %v4382
    %4450 = vmatpush.bf16.msra.mxu0 %v4381
    %4451 = vmatpush.bf16.msra.mxu0 %v4380
    %4452 = vmatpush.bf16.msra.mxu0 %v4379
    %4453 = vmatpush.bf16.msra.mxu0 %v4378
    %4454 = vmatpush.bf16.msra.mxu0 %v4377
    %4455 = vmatmul.bf16.gmra.mxu0 %v4170
    %v4456 = vpop.f32.mrf.mxu0
    %v4457 = vadd.f32 %v4443, %v4456
    %v4458 = vpop.f32.mrf.mxu0
    %v4459 = vadd.f32 %v4445, %v4458
    %4460 = vdwg.mxu0
    %4461 = vmatpush.bf16.msra.mxu0 %v4392
    %4462 = vmatpush.bf16.msra.mxu0 %v4391
    %4463 = vmatpush.bf16.msra.mxu0 %v4390
    %4464 = vmatpush.bf16.msra.mxu0 %v4389
    %4465 = vmatpush.bf16.msra.mxu0 %v4388
    %4466 = vmatpush.bf16.msra.mxu0 %v4387
    %4467 = vmatpush.bf16.msra.mxu0 %v4386
    %4468 = vmatpush.bf16.msra.mxu0 %v4385
    %4469 = vmatmul.bf16.gmra.mxu0 %v4171
    %v4470 = vpop.f32.mrf.mxu0
    %v4471 = vadd.f32 %v4457, %v4470
    %v4472 = vpop.f32.mrf.mxu0
    %v4473 = vadd.f32 %v4459, %v4472
    %4474 = vdwg.mxu0
    %4475 = vmatpush.bf16.msra.mxu0 %v4400
    %4476 = vmatpush.bf16.msra.mxu0 %v4399
    %4477 = vmatpush.bf16.msra.mxu0 %v4398
    %4478 = vmatpush.bf16.msra.mxu0 %v4397
    %4479 = vmatpush.bf16.msra.mxu0 %v4396
    %4480 = vmatpush.bf16.msra.mxu0 %v4395
    %4481 = vmatpush.bf16.msra.mxu0 %v4394
    %4482 = vmatpush.bf16.msra.mxu0 %v4393
    %4483 = vmatmul.bf16.gmra.mxu0 %v4172
    %v4484 = vpop.f32.mrf.mxu0
    %v4485 = vadd.f32 %v4471, %v4484
    %v4486 = vpop.f32.mrf.mxu0
    %v4487 = vadd.f32 %v4473, %v4486
    %4488 = vdwg.mxu0
    %4489 = vst [vmem:[#allocation13] sm:$0xff] %v4485
    %4490 = vst [vmem:[#allocation13 + $0x8] sm:$0xff] %v4487
    // Predicated region
    $region54: #{tpu_custom_call.1} parent=1 // pred_check
      _
    $region55: #{tpu_custom_call.1} parent=1 // pred_check_branch
      %4492 = sbr.rel (0) target = $region57
    $region56: #{tpu_custom_call.1} parent=1 // pred_region
      %4494 = vsyncadd [#allocation4], 0
      %s4495 = sshll.u32 [#allocation13], 4
      %s4496 = int_to_ptr.vmem [resolvable:$true] %s4495
      %s4497 = sshll.u32 %s7, 4
      %s4498 = int_to_ptr.hbm [resolvable:$true] %s4497
      %4503 = dma.vmem_to_hbm [thread:$0]  %s4496, 256, %s4498, [#allocation4], 128, 128, 8
    $region57: #{tpu_custom_call.1} parent=1 // pred_fallthru
      _
    // Predicated region
    $region58: #{tpu_custom_call.1} parent=1 // pred_check
      _
    $region59: #{tpu_custom_call.1} parent=1 // pred_check_branch
      %4505 = sbr.rel (0) target = $region61
    $region60: #{tpu_custom_call.1} parent=1 // pred_region
      %4507 = dma.done [#allocation4], 256
    $region61: #{tpu_custom_call.1} parent=1 // pred_fallthru
      _
    %4508 = vsyncpa [#allocation3], 1
    %4509 = vsyncpa [#allocation6], 1
    %4510 = vsyncpa [#allocation9], 1
    %4511 = vsyncpa [#allocation12], 1
    %4512 = vsyncpa [#allocation4], 1

</llo_original>
